<compile_context>
chip_gen: v6e
topology: v6e:2x2x1
jax: 0.10.0
libtpu: 0.0.40
codegen_flags: <defaults>
</compile_context>

<pallas_src>
import functools

import jax
import jax.numpy as jnp
import numpy as np
from jax.experimental import pallas as pl
from jax.experimental.pallas import tpu as pltpu


def _round_up(x, m):
    return (x + m - 1) // m * m


def _largest_divisor_leq(n, cap):
    for d in range(min(cap, n), 0, -1):
        if n % d == 0:
            return d
    return 1


# ----------------------------------------------------------------------------
# BiLSTM kernel: grid = (direction, time-chunk).  h/c carried in VMEM scratch.
# ----------------------------------------------------------------------------
def _bilstm_kernel(x_ref, wih_ref, whh_ref, b_ref, out_ref, h_sc, c_sc, gx_sc):
    d = pl.program_id(0)          # 0 = forward, 1 = backward
    c = pl.program_id(1)          # chunk step
    CH, Bp, Ep = x_ref.shape
    Hdp = h_sc.shape[-1]

    @pl.when(c == 0)
    def _():
        h_sc[...] = jnp.zeros_like(h_sc)
        c_sc[...] = jnp.zeros_like(c_sc)

    # Hoisted input projection: one MXU-friendly matmul for the whole chunk.
    x_blk = x_ref[...].reshape(CH * Bp, Ep)                              # bf16
    gx = jnp.dot(x_blk, wih_ref[0], preferred_element_type=jnp.float32)
    gx = gx + b_ref[0]                                                   # f32
    gx_sc[...] = gx.reshape(CH, Bp, 4 * Hdp)

    whh = whh_ref[0]                                                     # (Hdp,4Hdp) bf16

    def step(j, carry):
        h, cc = carry
        # forward: local index j ; backward: local index CH-1-j
        t_local = j + d * (CH - 1 - 2 * j)
        g = gx_sc[t_local] + jnp.dot(h.astype(whh.dtype), whh,
                                     preferred_element_type=jnp.float32)
        # lane-aligned gate slices (Hdp is a multiple of 128)
        i_g = jax.nn.sigmoid(g[:, 0 * Hdp:1 * Hdp])
        f_g = jax.nn.sigmoid(g[:, 1 * Hdp:2 * Hdp])
        g_g = jnp.tanh(g[:, 2 * Hdp:3 * Hdp])
        o_g = jax.nn.sigmoid(g[:, 3 * Hdp:4 * Hdp])
        cc = f_g * cc + i_g * g_g
        h = o_g * jnp.tanh(cc)
        out_ref[t_local] = h.astype(out_ref.dtype)
        return (h, cc)

    h_fin, c_fin = jax.lax.fori_loop(0, CH, step, (h_sc[...], c_sc[...]),
                                     unroll=True)
    h_sc[...] = h_fin
    c_sc[...] = c_fin


def _bilstm_pallas(x_tbe, wih_st, whh_st, bias_st, *, Hdp, chunk):
    """x_tbe: (T, Bp, Ep) bf16; stacked weights (2, ...) -> (T, Bp, 2*Hdp) bf16."""
    T, Bp, Ep = x_tbe.shape
    NC = T // chunk

    def tb(d, c):                 # time-block index: fwd = c, bwd = NC-1-c
        return c + d * (NC - 1 - 2 * c)

    return pl.pallas_call(
        _bilstm_kernel,
        out_shape=jax.ShapeDtypeStruct((T, Bp, 2 * Hdp), jnp.bfloat16),
        grid_spec=pltpu.PrefetchScalarGridSpec(
            num_scalar_prefetch=0,
            grid=(2, NC),
            in_specs=[
                pl.BlockSpec((chunk, Bp, Ep), lambda d, c: (tb(d, c), 0, 0)),
                # weight block index never changes within a direction, so it is
                # DMA'd only once per direction.  TODO(synk): pl.Buffered(1)
                # would also drop the second (unused) weight buffer.
                pl.BlockSpec((1, Ep, 4 * Hdp), lambda d, c: (d, 0, 0)),
                pl.BlockSpec((1, Hdp, 4 * Hdp), lambda d, c: (d, 0, 0)),
                pl.BlockSpec((1, 1, 4 * Hdp), lambda d, c: (d, 0, 0)),
            ],
            # each direction writes its own half of the hidden axis (fused concat)
            out_specs=pl.BlockSpec((chunk, Bp, Hdp),
                                   lambda d, c: (tb(d, c), 0, d)),
            scratch_shapes=[
                pltpu.VMEM((Bp, Hdp), jnp.float32),            # h state
                pltpu.VMEM((Bp, Hdp), jnp.float32),            # c state
                pltpu.VMEM((chunk, Bp, 4 * Hdp), jnp.float32),  # chunk gates_x
            ],
        ),
        compiler_params=pltpu.CompilerParams(
            dimension_semantics=("parallel", "arbitrary")),
    )(x_tbe, wih_st, whh_st, bias_st)


# ----------------------------------------------------------------------------
# Conv1d(k=3,pad=1) + ReLU + hidden2tag, fused, tiled over T with halo tiles.
# ----------------------------------------------------------------------------
def _conv_tag_kernel(xm_ref, xc_ref, xn_ref, wc_ref, bc_ref, wt_ref, bt_ref,
                     out_ref):
    i = pl.program_id(0)
    nt = pl.num_programs(0)
    TT, Bp, Hp = xc_ref.shape

    xc = xc_ref[...]                                   # (TT, Bp, Hp) bf16
    # halo rows from the clamped neighbor tiles; zeroed at the sequence ends
    prev_row = xm_ref[TT - 1] * (i > 0).astype(xc.dtype)
    next_row = xn_ref[0] * (i < nt - 1).astype(xc.dtype)

    x_m1 = jnp.concatenate([prev_row[None], xc[:-1]], axis=0)   # x[t-1]
    x_p1 = jnp.concatenate([xc[1:], next_row[None]], axis=0)    # x[t+1]

    # fuse the 3 taps into a single K=3H matmul
    xs = jnp.concatenate([x_m1, xc, x_p1], axis=-1).reshape(TT * Bp, 3 * Hp)
    conv = jnp.dot(xs, wc_ref[...], preferred_element_type=jnp.float32)
    conv = conv + bc_ref[...]
    act = jnp.maximum(conv, 0.0).astype(wt_ref.dtype)           # ReLU -> bf16

    tags = jnp.dot(act, wt_ref[...], preferred_element_type=jnp.float32)
    tags = tags + bt_ref[...]
    out_ref[...] = tags.reshape(TT, Bp, -1).astype(out_ref.dtype)


def _conv_tag_pallas(lstm_out, wc, bc, wt, bt, *, tile):
    """lstm_out: (T, Bp, Hp) bf16; wc: (3Hp, Hp); wt: (Hp, TAGP)."""
    T, Bp, Hp = lstm_out.shape
    NT = T // tile
    TAGP = wt.shape[1]
    full = lambda shape: pl.BlockSpec(shape, lambda i: (0,) * len(shape))

    # TODO(synk): at realistic sizes, pick `tile` against the per-generation
    # VMEM budget and set pltpu.CompilerParams(vmem_limit_bytes=...); the two
    # halo rows could also be fetched by a tiny manual DMA instead of re-reading
    # whole neighbor tiles.
    return pl.pallas_call(
        _conv_tag_kernel,
        out_shape=jax.ShapeDtypeStruct((T, Bp, TAGP), jnp.float32),
        grid_spec=pltpu.PrefetchScalarGridSpec(
            num_scalar_prefetch=0,
            grid=(NT,),
            in_specs=[
                pl.BlockSpec((tile, Bp, Hp), lambda i: (jnp.maximum(i - 1, 0), 0, 0)),
                pl.BlockSpec((tile, Bp, Hp), lambda i: (i, 0, 0)),
                pl.BlockSpec((tile, Bp, Hp), lambda i: (jnp.minimum(i + 1, NT - 1), 0, 0)),
                full((3 * Hp, Hp)),
                full((1, Hp)),
                full((Hp, TAGP)),
                full((1, TAGP)),
            ],
            out_specs=pl.BlockSpec((tile, Bp, TAGP), lambda i: (i, 0, 0)),
        ),
        compiler_params=pltpu.CompilerParams(
            dimension_semantics=("parallel",)),
    )(lstm_out, lstm_out, lstm_out, wc, bc, wt, bt)


# ----------------------------------------------------------------------------
# Parameter construction + full forward (padding / packing glue in plain JAX).
# ----------------------------------------------------------------------------
def init_params(key, vocab, embed_dim, hidden_dim, tag_size):
    assert hidden_dim % 2 == 0
    Hd = hidden_dim // 2
    ks = jax.random.split(key, 13)
    u = lambda k, shape, bound: jax.random.uniform(
        k, shape, jnp.float32, -bound, bound)

    p = {}
    p["embedding"] = jax.random.normal(ks[0], (vocab, embed_dim), jnp.float32)

    s = 1.0 / np.sqrt(Hd)
    for d, off in (("fwd", 1), ("bwd", 5)):
        p[f"w_ih_{d}"] = u(ks[off + 0], (4 * Hd, embed_dim), s)
        p[f"w_hh_{d}"] = u(ks[off + 1], (4 * Hd, Hd), s)
        p[f"b_ih_{d}"] = u(ks[off + 2], (4 * Hd,), s)
        p[f"b_hh_{d}"] = u(ks[off + 3], (4 * Hd,), s)

    sc = 1.0 / np.sqrt(hidden_dim * 3)
    p["w_conv"] = u(ks[9], (hidden_dim, hidden_dim, 3), sc)   # (out, in, k)
    p["b_conv"] = u(ks[10], (hidden_dim,), sc)

    st = 1.0 / np.sqrt(hidden_dim)
    p["w_tag"] = u(ks[11], (tag_size, hidden_dim), st)        # (tag, H)
    p["b_tag"] = u(ks[12], (tag_size,), st)
    return p


@functools.partial(jax.jit, static_argnames=("lstm_chunk", "conv_tile"))
def bilstm_cnn_forward(params, x_tokens, lstm_chunk=8, conv_tile=8):
    """x_tokens: (B, T) int32 -> (B, T, tag_size) float32."""
    B, T = x_tokens.shape
    E = params["embedding"].shape[1]
    Hd = params["w_hh_fwd"].shape[1]
    H = 2 * Hd
    tag = params["w_tag"].shape[0]

    Bp = _round_up(B, 8)
    Ep = _round_up(E, 128)
    Hdp = _round_up(Hd, 128)
    Hp = 2 * Hdp
    TAGP = _round_up(tag, 128)

    chunk = _largest_divisor_leq(T, lstm_chunk)
    tile = _largest_divisor_leq(T, conv_tile)

    # ---- pack / pad LSTM params (zeros in padded slots keep the math exact) --
    def pack_dir(d):
        w_ih, w_hh = params[f"w_ih_{d}"], params[f"w_hh_{d}"]
        b = params[f"b_ih_{d}"] + params[f"b_hh_{d}"]
        wih = jnp.pad(w_ih.reshape(4, Hd, E), ((0, 0), (0, Hdp - Hd), (0, Ep - E)))
        wih = wih.reshape(4 * Hdp, Ep).T.astype(jnp.bfloat16)          # (Ep, 4Hdp)
        whh = jnp.pad(w_hh.reshape(4, Hd, Hd), ((0, 0), (0, Hdp - Hd), (0, Hdp - Hd)))
        whh = whh.reshape(4 * Hdp, Hdp).T.astype(jnp.bfloat16)         # (Hdp, 4Hdp)
        bb = jnp.pad(b.reshape(4, Hd), ((0, 0), (0, Hdp - Hd))).reshape(1, 4 * Hdp)
        return wih, whh, bb.astype(jnp.float32)

    wih_f, whh_f, b_f = pack_dir("fwd")
    wih_b, whh_b, b_b = pack_dir("bwd")
    wih_st = jnp.stack([wih_f, wih_b])            # (2, Ep, 4Hdp)
    whh_st = jnp.stack([whh_f, whh_b])            # (2, Hdp, 4Hdp)
    bias_st = jnp.stack([b_f, b_b])               # (2, 1, 4Hdp)

    # ---- pack conv + tag weights (input channels padded per direction half) --
    wc_parts = []
    for k in range(3):
        wk = params["w_conv"][:, :, k].T                                # (H_in, H_out)
        wk = jnp.pad(wk.reshape(2, Hd, H), ((0, 0), (0, Hdp - Hd), (0, 0)))
        wk = jnp.pad(wk.reshape(Hp, H), ((0, 0), (0, Hp - H)))          # (Hp, Hp)
        wc_parts.append(wk)
    wc = jnp.concatenate(wc_parts, axis=0).astype(jnp.bfloat16)         # (3Hp, Hp)
    bc = jnp.pad(params["b_conv"], (0, Hp - H)).reshape(1, Hp).astype(jnp.float32)

    wt = jnp.pad(params["w_tag"].T, ((0, Hp - H), (0, TAGP - tag))).astype(jnp.bfloat16)
    bt = jnp.pad(params["b_tag"], (0, TAGP - tag)).reshape(1, TAGP).astype(jnp.float32)

    # ---- embedding lookup (plain JAX gather) + one-time padding ----
    emb = jnp.pad(params["embedding"], ((0, 0), (0, Ep - E)))
    embeds = jnp.take(emb, x_tokens, axis=0)                            # (B, T, Ep)
    embeds = jnp.pad(embeds, ((0, Bp - B), (0, 0), (0, 0)))
    x_tbe = jnp.transpose(embeds, (1, 0, 2)).astype(jnp.bfloat16)       # (T, Bp, Ep)

    lstm_out = _bilstm_pallas(x_tbe, wih_st, whh_st, bias_st, Hdp=Hdp, chunk=chunk)
    tags_pad = _conv_tag_pallas(lstm_out, wc, bc, wt, bt, tile=tile)    # (T, Bp, TAGP)

    return jnp.transpose(tags_pad[:, :B, :tag], (1, 0, 2))              # (B, T, tag)


# ----------------------------------------------------------------------------
# Pure-JAX f32 reference (PyTorch semantics) for correctness check.
# ----------------------------------------------------------------------------
def reference_forward(params, x_tokens):
    embeds = jnp.take(params["embedding"], x_tokens, axis=0)   # (B, T, E)
    B, T, E = embeds.shape
    Hd = params["w_hh_fwd"].shape[1]

    def run_dir(d, seq):
        w_ih, w_hh = params[f"w_ih_{d}"], params[f"w_hh_{d}"]
        b = params[f"b_ih_{d}"] + params[f"b_hh_{d}"]

        def step(carry, x_t):
            h, c = carry
            g = x_t @ w_ih.T + h @ w_hh.T + b
            i = jax.nn.sigmoid(g[:, 0 * Hd:1 * Hd])
            f = jax.nn.sigmoid(g[:, 1 * Hd:2 * Hd])
            gg = jnp.tanh(g[:, 2 * Hd:3 * Hd])
            o = jax.nn.sigmoid(g[:, 3 * Hd:4 * Hd])
            c = f * c + i * gg
            h = o * jnp.tanh(c)
            return (h, c), h

        init = (jnp.zeros((B, Hd)), jnp.zeros((B, Hd)))
        _, hs = jax.lax.scan(step, init, seq)
        return hs

    x_tbe = jnp.transpose(embeds, (1, 0, 2))
    h_f = run_dir("fwd", x_tbe)
    h_b = run_dir("bwd", x_tbe[::-1])[::-1]
    lstm_out = jnp.concatenate([h_f, h_b], axis=-1)            # (T, B, H)

    x_pad = jnp.pad(lstm_out, ((1, 1), (0, 0), (0, 0)))
    conv = params["b_conv"][None, None, :]
    for k in range(3):
        conv = conv + jnp.einsum("tbi,oi->tbo", x_pad[k:k + lstm_out.shape[0]],
                                 params["w_conv"][:, :, k])
    act = jnp.maximum(conv, 0.0)
    tags = jnp.einsum("tbh,oh->tbo", act, params["w_tag"]) + params["b_tag"]
    return jnp.transpose(tags, (1, 0, 2))


if __name__ == "__main__":
    vocab, embed_dim, hidden_dim, tag_size = 50, 16, 32, 5
    B, T = 2, 8

    key = jax.random.PRNGKey(0)
    k_param, k_tok = jax.random.split(key)
    params = init_params(k_param, vocab, embed_dim, hidden_dim, tag_size)
    x_tokens = jax.random.randint(k_tok, (B, T), 0, vocab, dtype=jnp.int32)

    # chunk/tile of 4 -> 2 chunks per LSTM direction and 2 conv tiles,
    # exercising the carried-state and halo logic.
    out = bilstm_cnn_forward(params, x_tokens, lstm_chunk=4, conv_tile=4)
    out = jax.block_until_ready(out)
    assert out.shape == (B, T, tag_size), out.shape

    ref = jax.block_until_ready(reference_forward(params, x_tokens))
    # bf16 matmul operands (f32 accumulation) -> slightly looser tolerance than
    # the pure-f32 reference.
    err = float(np.max(np.abs(np.asarray(out) - np.asarray(ref))))
    assert np.allclose(np.asarray(out), np.asarray(ref), atol=3e-2, rtol=3e-2), err

    print("KERNEL_OK")
</pallas_src>

<mosaic_0001>
module attributes {stable_mosaic.version = 11 : i64} {
  func.func @_bilstm_kernel(%arg0: i32, %arg1: i32, %arg2: memref<4x8x128xbf16, #tpu.memory_space<vmem>>, %arg3: memref<1x128x512xbf16, #tpu.memory_space<vmem>>, %arg4: memref<1x128x512xbf16, #tpu.memory_space<vmem>>, %arg5: memref<1x1x512xf32, #tpu.memory_space<vmem>>, %arg6: memref<4x8x128xbf16, #tpu.memory_space<vmem>>, %arg7: memref<8x128xf32, #tpu.memory_space<vmem>>, %arg8: memref<8x128xf32, #tpu.memory_space<vmem>>, %arg9: memref<4x8x512xf32, #tpu.memory_space<vmem>>) attributes {dimension_semantics = [#tpu.dimension_semantics<parallel>, #tpu.dimension_semantics<arbitrary>], iteration_bounds = array<i64: 2, 2>, scalar_prefetch = 0 : i64, scratch_operands = 3 : i64, tpu.core_type = #tpu.core_type<tc>, window_params = [{transform_indices = @transform_0, window_bounds = array<i64: 4, 8, 128>}, {transform_indices = @transform_1, window_bounds = array<i64: 1, 128, 512>}, {transform_indices = @transform_2, window_bounds = array<i64: 1, 128, 512>}, {transform_indices = @transform_3, window_bounds = array<i64: 1, 1, 512>}, {transform_indices = @transform_4, window_bounds = array<i64: 4, 8, 128>}]} {
    %c0_i32 = arith.constant 0 : i32
    %0 = arith.cmpi eq, %arg1, %c0_i32 : i32
    %1 = arith.extui %0 : i1 to i32
    %c0_i32_0 = arith.constant 0 : i32
    %2 = arith.cmpi ne, %1, %c0_i32_0 : i32
    scf.if %2 {
      %cst_64 = arith.constant 0.000000e+00 : f32
      %180 = vector.broadcast %cst_64 : f32 to vector<8x128xf32>
      %c0_65 = arith.constant 0 : index
      %c0_66 = arith.constant 0 : index
      %181 = vector.load %arg7[%c0_65, %c0_66] : memref<8x128xf32, #tpu.memory_space<vmem>>, vector<8x128xf32>
      tpu.vector_store %arg7[%c0_65, %c0_66], %180 {strides = array<i32>} : memref<8x128xf32, #tpu.memory_space<vmem>>, vector<8x128xf32>,
      %cst_67 = arith.constant 0.000000e+00 : f32
      %182 = vector.broadcast %cst_67 : f32 to vector<8x128xf32>
      %c0_68 = arith.constant 0 : index
      %c0_69 = arith.constant 0 : index
      %183 = vector.load %arg8[%c0_68, %c0_69] : memref<8x128xf32, #tpu.memory_space<vmem>>, vector<8x128xf32>
      tpu.vector_store %arg8[%c0_68, %c0_69], %182 {strides = array<i32>} : memref<8x128xf32, #tpu.memory_space<vmem>>, vector<8x128xf32>,
    } else {
    }
    %c0 = arith.constant 0 : index
    %c0_1 = arith.constant 0 : index
    %c0_2 = arith.constant 0 : index
    %3 = vector.load %arg2[%c0, %c0_1, %c0_2] : memref<4x8x128xbf16, #tpu.memory_space<vmem>>, vector<4x8x128xbf16>
    %4 = vector.shape_cast %3 : vector<4x8x128xbf16> to vector<32x128xbf16>
    %c0_3 = arith.constant 0 : index
    %c0_4 = arith.constant 0 : index
    %c0_5 = arith.constant 0 : index
    %5 = vector.load %arg3[%c0_3, %c0_4, %c0_5] : memref<1x128x512xbf16, #tpu.memory_space<vmem>>, vector<1x128x512xbf16>
    %6 = vector.shape_cast %5 : vector<1x128x512xbf16> to vector<128x512xbf16>
    %cst = arith.constant dense<0.000000e+00> : vector<32x512xf32>
    %7 = tpu.matmul %4, %6, %cst {dimension_numbers = #tpu.dot_dimension_numbers<[1], [0], [0], [1], [0, 0, 1, 1], [], []>} : vector<32x128xbf16>, vector<128x512xbf16>, vector<32x512xf32> -> vector<32x512xf32>
    %c0_6 = arith.constant 0 : index
    %c0_7 = arith.constant 0 : index
    %c0_8 = arith.constant 0 : index
    %8 = vector.load %arg5[%c0_6, %c0_7, %c0_8] : memref<1x1x512xf32, #tpu.memory_space<vmem>>, vector<1x1x512xf32>
    %9 = vector.shape_cast %8 : vector<1x1x512xf32> to vector<1x512xf32>
    %10 = vector.broadcast %9 : vector<1x512xf32> to vector<32x512xf32>
    %11 = arith.addf %7, %10 : vector<32x512xf32>
    %12 = vector.shape_cast %11 : vector<32x512xf32> to vector<4x8x512xf32>
    %c0_9 = arith.constant 0 : index
    %c0_10 = arith.constant 0 : index
    %c0_11 = arith.constant 0 : index
    %13 = vector.load %arg9[%c0_9, %c0_10, %c0_11] : memref<4x8x512xf32, #tpu.memory_space<vmem>>, vector<4x8x512xf32>
    tpu.vector_store %arg9[%c0_9, %c0_10, %c0_11], %12 {strides = array<i32>} : memref<4x8x512xf32, #tpu.memory_space<vmem>>, vector<4x8x512xf32>,
    %c0_12 = arith.constant 0 : index
    %c0_13 = arith.constant 0 : index
    %c0_14 = arith.constant 0 : index
    %14 = vector.load %arg4[%c0_12, %c0_13, %c0_14] : memref<1x128x512xbf16, #tpu.memory_space<vmem>>, vector<1x128x512xbf16>
    %15 = vector.shape_cast %14 : vector<1x128x512xbf16> to vector<128x512xbf16>
    %c0_15 = arith.constant 0 : index
    %c0_16 = arith.constant 0 : index
    %16 = vector.load %arg7[%c0_15, %c0_16] : memref<8x128xf32, #tpu.memory_space<vmem>>, vector<8x128xf32>
    %c0_17 = arith.constant 0 : index
    %c0_18 = arith.constant 0 : index
    %17 = vector.load %arg8[%c0_17, %c0_18] : memref<8x128xf32, #tpu.memory_space<vmem>>, vector<8x128xf32>
    %c0_i32_19 = arith.constant 0 : i32
    %c2_i32 = arith.constant 2 : i32
    %18 = arith.muli %c2_i32, %c0_i32_19 : i32
    %c3_i32 = arith.constant 3 : i32
    %19 = arith.subi %c3_i32, %18 : i32
    %20 = arith.muli %arg0, %19 : i32
    %21 = arith.addi %c0_i32_19, %20 : i32
    %22 = arith.index_cast %21 : i32 to index
    %c0_20 = arith.constant 0 : index
    %c0_21 = arith.constant 0 : index
    %23 = vector.load %arg9[%22, %c0_20, %c0_21] : memref<4x8x512xf32, #tpu.memory_space<vmem>>, vector<1x8x512xf32>
    %24 = vector.shape_cast %23 : vector<1x8x512xf32> to vector<8x512xf32>
    %25 = arith.truncf %16 : vector<8x128xf32> to vector<8x128xbf16>
    %cst_22 = arith.constant dense<0.000000e+00> : vector<8x512xf32>
    %26 = tpu.matmul %25, %15, %cst_22 {dimension_numbers = #tpu.dot_dimension_numbers<[1], [0], [0], [1], [0, 0, 1, 1], [], []>} : vector<8x128xbf16>, vector<128x512xbf16>, vector<8x512xf32> -> vector<8x512xf32>
    %27 = arith.addf %24, %26 : vector<8x512xf32>
    %28 = vector.extract_strided_slice %27 {offsets = [0, 0], sizes = [8, 128], strides = [1, 1]} : vector<8x512xf32> to vector<8x128xf32>
    %29 = arith.negf %28 : vector<8x128xf32>
    %30 = math.exp %29 : vector<8x128xf32>
    %cst_23 = arith.constant 1.000000e+00 : f32
    %31 = vector.broadcast %cst_23 : f32 to vector<8x128xf32>
    %32 = arith.addf %31, %30 : vector<8x128xf32>
    %33 = arith.divf %31, %32 : vector<8x128xf32>
    %34 = vector.extract_strided_slice %27 {offsets = [0, 128], sizes = [8, 128], strides = [1, 1]} : vector<8x512xf32> to vector<8x128xf32>
    %35 = arith.negf %34 : vector<8x128xf32>
    %36 = math.exp %35 : vector<8x128xf32>
    %cst_24 = arith.constant 1.000000e+00 : f32
    %37 = vector.broadcast %cst_24 : f32 to vector<8x128xf32>
    %38 = arith.addf %37, %36 : vector<8x128xf32>
    %39 = arith.divf %37, %38 : vector<8x128xf32>
    %40 = vector.extract_strided_slice %27 {offsets = [0, 256], sizes = [8, 128], strides = [1, 1]} : vector<8x512xf32> to vector<8x128xf32>
    %41 = math.tanh %40 : vector<8x128xf32>
    %42 = vector.extract_strided_slice %27 {offsets = [0, 384], sizes = [8, 128], strides = [1, 1]} : vector<8x512xf32> to vector<8x128xf32>
    %43 = arith.negf %42 : vector<8x128xf32>
    %44 = math.exp %43 : vector<8x128xf32>
    %cst_25 = arith.constant 1.000000e+00 : f32
    %45 = vector.broadcast %cst_25 : f32 to vector<8x128xf32>
    %46 = arith.addf %45, %44 : vector<8x128xf32>
    %47 = arith.divf %45, %46 : vector<8x128xf32>
    %48 = arith.mulf %39, %17 : vector<8x128xf32>
    %49 = arith.mulf %33, %41 : vector<8x128xf32>
    %50 = arith.addf %48, %49 : vector<8x128xf32>
    %51 = math.tanh %50 : vector<8x128xf32>
    %52 = arith.mulf %47, %51 : vector<8x128xf32>
    %53 = arith.truncf %52 : vector<8x128xf32> to vector<8x128xbf16>
    %54 = arith.index_cast %21 : i32 to index
    %c0_26 = arith.constant 0 : index
    %c0_27 = arith.constant 0 : index
    %55 = vector.load %arg6[%54, %c0_26, %c0_27] : memref<4x8x128xbf16, #tpu.memory_space<vmem>>, vector<1x8x128xbf16>
    %56 = vector.shape_cast %55 : vector<1x8x128xbf16> to vector<8x128xbf16>
    %57 = vector.shape_cast %53 : vector<8x128xbf16> to vector<1x8x128xbf16>
    tpu.vector_store %arg6[%54, %c0_26, %c0_27], %57 {strides = array<i32>} : memref<4x8x128xbf16, #tpu.memory_space<vmem>>, vector<1x8x128xbf16>,
    %c1_i32 = arith.constant 1 : i32
    %c2_i32_28 = arith.constant 2 : i32
    %58 = arith.muli %c2_i32_28, %c1_i32 : i32
    %c3_i32_29 = arith.constant 3 : i32
    %59 = arith.subi %c3_i32_29, %58 : i32
    %60 = arith.muli %arg0, %59 : i32
    %61 = arith.addi %c1_i32, %60 : i32
    %62 = arith.index_cast %61 : i32 to index
    %c0_30 = arith.constant 0 : index
    %c0_31 = arith.constant 0 : index
    %63 = vector.load %arg9[%62, %c0_30, %c0_31] : memref<4x8x512xf32, #tpu.memory_space<vmem>>, vector<1x8x512xf32>
    %64 = vector.shape_cast %63 : vector<1x8x512xf32> to vector<8x512xf32>
    %65 = arith.truncf %52 : vector<8x128xf32> to vector<8x128xbf16>
    %cst_32 = arith.constant dense<0.000000e+00> : vector<8x512xf32>
    %66 = tpu.matmul %65, %15, %cst_32 {dimension_numbers = #tpu.dot_dimension_numbers<[1], [0], [0], [1], [0, 0, 1, 1], [], []>} : vector<8x128xbf16>, vector<128x512xbf16>, vector<8x512xf32> -> vector<8x512xf32>
    %67 = arith.addf %64, %66 : vector<8x512xf32>
    %68 = vector.extract_strided_slice %67 {offsets = [0, 0], sizes = [8, 128], strides = [1, 1]} : vector<8x512xf32> to vector<8x128xf32>
    %69 = arith.negf %68 : vector<8x128xf32>
    %70 = math.exp %69 : vector<8x128xf32>
    %cst_33 = arith.constant 1.000000e+00 : f32
    %71 = vector.broadcast %cst_33 : f32 to vector<8x128xf32>
    %72 = arith.addf %71, %70 : vector<8x128xf32>
    %73 = arith.divf %71, %72 : vector<8x128xf32>
    %74 = vector.extract_strided_slice %67 {offsets = [0, 128], sizes = [8, 128], strides = [1, 1]} : vector<8x512xf32> to vector<8x128xf32>
    %75 = arith.negf %74 : vector<8x128xf32>
    %76 = math.exp %75 : vector<8x128xf32>
    %cst_34 = arith.constant 1.000000e+00 : f32
    %77 = vector.broadcast %cst_34 : f32 to vector<8x128xf32>
    %78 = arith.addf %77, %76 : vector<8x128xf32>
    %79 = arith.divf %77, %78 : vector<8x128xf32>
    %80 = vector.extract_strided_slice %67 {offsets = [0, 256], sizes = [8, 128], strides = [1, 1]} : vector<8x512xf32> to vector<8x128xf32>
    %81 = math.tanh %80 : vector<8x128xf32>
    %82 = vector.extract_strided_slice %67 {offsets = [0, 384], sizes = [8, 128], strides = [1, 1]} : vector<8x512xf32> to vector<8x128xf32>
    %83 = arith.negf %82 : vector<8x128xf32>
    %84 = math.exp %83 : vector<8x128xf32>
    %cst_35 = arith.constant 1.000000e+00 : f32
    %85 = vector.broadcast %cst_35 : f32 to vector<8x128xf32>
    %86 = arith.addf %85, %84 : vector<8x128xf32>
    %87 = arith.divf %85, %86 : vector<8x128xf32>
    %88 = arith.mulf %79, %50 : vector<8x128xf32>
    %89 = arith.mulf %73, %81 : vector<8x128xf32>
    %90 = arith.addf %88, %89 : vector<8x128xf32>
    %91 = math.tanh %90 : vector<8x128xf32>
    %92 = arith.mulf %87, %91 : vector<8x128xf32>
    %93 = arith.truncf %92 : vector<8x128xf32> to vector<8x128xbf16>
    %94 = arith.index_cast %61 : i32 to index
    %c0_36 = arith.constant 0 : index
    %c0_37 = arith.constant 0 : index
    %95 = vector.load %arg6[%94, %c0_36, %c0_37] : memref<4x8x128xbf16, #tpu.memory_space<vmem>>, vector<1x8x128xbf16>
    %96 = vector.shape_cast %95 : vector<1x8x128xbf16> to vector<8x128xbf16>
    %97 = vector.shape_cast %93 : vector<8x128xbf16> to vector<1x8x128xbf16>
    tpu.vector_store %arg6[%94, %c0_36, %c0_37], %97 {strides = array<i32>} : memref<4x8x128xbf16, #tpu.memory_space<vmem>>, vector<1x8x128xbf16>,
    %c2_i32_38 = arith.constant 2 : i32
    %c2_i32_39 = arith.constant 2 : i32
    %98 = arith.muli %c2_i32_39, %c2_i32_38 : i32
    %c3_i32_40 = arith.constant 3 : i32
    %99 = arith.subi %c3_i32_40, %98 : i32
    %100 = arith.muli %arg0, %99 : i32
    %101 = arith.addi %c2_i32_38, %100 : i32
    %102 = arith.index_cast %101 : i32 to index
    %c0_41 = arith.constant 0 : index
    %c0_42 = arith.constant 0 : index
    %103 = vector.load %arg9[%102, %c0_41, %c0_42] : memref<4x8x512xf32, #tpu.memory_space<vmem>>, vector<1x8x512xf32>
    %104 = vector.shape_cast %103 : vector<1x8x512xf32> to vector<8x512xf32>
    %105 = arith.truncf %92 : vector<8x128xf32> to vector<8x128xbf16>
    %cst_43 = arith.constant dense<0.000000e+00> : vector<8x512xf32>
    %106 = tpu.matmul %105, %15, %cst_43 {dimension_numbers = #tpu.dot_dimension_numbers<[1], [0], [0], [1], [0, 0, 1, 1], [], []>} : vector<8x128xbf16>, vector<128x512xbf16>, vector<8x512xf32> -> vector<8x512xf32>
    %107 = arith.addf %104, %106 : vector<8x512xf32>
    %108 = vector.extract_strided_slice %107 {offsets = [0, 0], sizes = [8, 128], strides = [1, 1]} : vector<8x512xf32> to vector<8x128xf32>
    %109 = arith.negf %108 : vector<8x128xf32>
    %110 = math.exp %109 : vector<8x128xf32>
    %cst_44 = arith.constant 1.000000e+00 : f32
    %111 = vector.broadcast %cst_44 : f32 to vector<8x128xf32>
    %112 = arith.addf %111, %110 : vector<8x128xf32>
    %113 = arith.divf %111, %112 : vector<8x128xf32>
    %114 = vector.extract_strided_slice %107 {offsets = [0, 128], sizes = [8, 128], strides = [1, 1]} : vector<8x512xf32> to vector<8x128xf32>
    %115 = arith.negf %114 : vector<8x128xf32>
    %116 = math.exp %115 : vector<8x128xf32>
    %cst_45 = arith.constant 1.000000e+00 : f32
    %117 = vector.broadcast %cst_45 : f32 to vector<8x128xf32>
    %118 = arith.addf %117, %116 : vector<8x128xf32>
    %119 = arith.divf %117, %118 : vector<8x128xf32>
    %120 = vector.extract_strided_slice %107 {offsets = [0, 256], sizes = [8, 128], strides = [1, 1]} : vector<8x512xf32> to vector<8x128xf32>
    %121 = math.tanh %120 : vector<8x128xf32>
    %122 = vector.extract_strided_slice %107 {offsets = [0, 384], sizes = [8, 128], strides = [1, 1]} : vector<8x512xf32> to vector<8x128xf32>
    %123 = arith.negf %122 : vector<8x128xf32>
    %124 = math.exp %123 : vector<8x128xf32>
    %cst_46 = arith.constant 1.000000e+00 : f32
    %125 = vector.broadcast %cst_46 : f32 to vector<8x128xf32>
    %126 = arith.addf %125, %124 : vector<8x128xf32>
    %127 = arith.divf %125, %126 : vector<8x128xf32>
    %128 = arith.mulf %119, %90 : vector<8x128xf32>
    %129 = arith.mulf %113, %121 : vector<8x128xf32>
    %130 = arith.addf %128, %129 : vector<8x128xf32>
    %131 = math.tanh %130 : vector<8x128xf32>
    %132 = arith.mulf %127, %131 : vector<8x128xf32>
    %133 = arith.truncf %132 : vector<8x128xf32> to vector<8x128xbf16>
    %134 = arith.index_cast %101 : i32 to index
    %c0_47 = arith.constant 0 : index
    %c0_48 = arith.constant 0 : index
    %135 = vector.load %arg6[%134, %c0_47, %c0_48] : memref<4x8x128xbf16, #tpu.memory_space<vmem>>, vector<1x8x128xbf16>
    %136 = vector.shape_cast %135 : vector<1x8x128xbf16> to vector<8x128xbf16>
    %137 = vector.shape_cast %133 : vector<8x128xbf16> to vector<1x8x128xbf16>
    tpu.vector_store %arg6[%134, %c0_47, %c0_48], %137 {strides = array<i32>} : memref<4x8x128xbf16, #tpu.memory_space<vmem>>, vector<1x8x128xbf16>,
    %c3_i32_49 = arith.constant 3 : i32
    %c2_i32_50 = arith.constant 2 : i32
    %138 = arith.muli %c2_i32_50, %c3_i32_49 : i32
    %c3_i32_51 = arith.constant 3 : i32
    %139 = arith.subi %c3_i32_51, %138 : i32
    %140 = arith.muli %arg0, %139 : i32
    %141 = arith.addi %c3_i32_49, %140 : i32
    %142 = arith.index_cast %141 : i32 to index
    %c0_52 = arith.constant 0 : index
    %c0_53 = arith.constant 0 : index
    %143 = vector.load %arg9[%142, %c0_52, %c0_53] : memref<4x8x512xf32, #tpu.memory_space<vmem>>, vector<1x8x512xf32>
    %144 = vector.shape_cast %143 : vector<1x8x512xf32> to vector<8x512xf32>
    %145 = arith.truncf %132 : vector<8x128xf32> to vector<8x128xbf16>
    %cst_54 = arith.constant dense<0.000000e+00> : vector<8x512xf32>
    %146 = tpu.matmul %145, %15, %cst_54 {dimension_numbers = #tpu.dot_dimension_numbers<[1], [0], [0], [1], [0, 0, 1, 1], [], []>} : vector<8x128xbf16>, vector<128x512xbf16>, vector<8x512xf32> -> vector<8x512xf32>
    %147 = arith.addf %144, %146 : vector<8x512xf32>
    %148 = vector.extract_strided_slice %147 {offsets = [0, 0], sizes = [8, 128], strides = [1, 1]} : vector<8x512xf32> to vector<8x128xf32>
    %149 = arith.negf %148 : vector<8x128xf32>
    %150 = math.exp %149 : vector<8x128xf32>
    %cst_55 = arith.constant 1.000000e+00 : f32
    %151 = vector.broadcast %cst_55 : f32 to vector<8x128xf32>
    %152 = arith.addf %151, %150 : vector<8x128xf32>
    %153 = arith.divf %151, %152 : vector<8x128xf32>
    %154 = vector.extract_strided_slice %147 {offsets = [0, 128], sizes = [8, 128], strides = [1, 1]} : vector<8x512xf32> to vector<8x128xf32>
    %155 = arith.negf %154 : vector<8x128xf32>
    %156 = math.exp %155 : vector<8x128xf32>
    %cst_56 = arith.constant 1.000000e+00 : f32
    %157 = vector.broadcast %cst_56 : f32 to vector<8x128xf32>
    %158 = arith.addf %157, %156 : vector<8x128xf32>
    %159 = arith.divf %157, %158 : vector<8x128xf32>
    %160 = vector.extract_strided_slice %147 {offsets = [0, 256], sizes = [8, 128], strides = [1, 1]} : vector<8x512xf32> to vector<8x128xf32>
    %161 = math.tanh %160 : vector<8x128xf32>
    %162 = vector.extract_strided_slice %147 {offsets = [0, 384], sizes = [8, 128], strides = [1, 1]} : vector<8x512xf32> to vector<8x128xf32>
    %163 = arith.negf %162 : vector<8x128xf32>
    %164 = math.exp %163 : vector<8x128xf32>
    %cst_57 = arith.constant 1.000000e+00 : f32
    %165 = vector.broadcast %cst_57 : f32 to vector<8x128xf32>
    %166 = arith.addf %165, %164 : vector<8x128xf32>
    %167 = arith.divf %165, %166 : vector<8x128xf32>
    %168 = arith.mulf %159, %130 : vector<8x128xf32>
    %169 = arith.mulf %153, %161 : vector<8x128xf32>
    %170 = arith.addf %168, %169 : vector<8x128xf32>
    %171 = math.tanh %170 : vector<8x128xf32>
    %172 = arith.mulf %167, %171 : vector<8x128xf32>
    %173 = arith.truncf %172 : vector<8x128xf32> to vector<8x128xbf16>
    %174 = arith.index_cast %141 : i32 to index
    %c0_58 = arith.constant 0 : index
    %c0_59 = arith.constant 0 : index
    %175 = vector.load %arg6[%174, %c0_58, %c0_59] : memref<4x8x128xbf16, #tpu.memory_space<vmem>>, vector<1x8x128xbf16>
    %176 = vector.shape_cast %175 : vector<1x8x128xbf16> to vector<8x128xbf16>
    %177 = vector.shape_cast %173 : vector<8x128xbf16> to vector<1x8x128xbf16>
    tpu.vector_store %arg6[%174, %c0_58, %c0_59], %177 {strides = array<i32>} : memref<4x8x128xbf16, #tpu.memory_space<vmem>>, vector<1x8x128xbf16>,
    %c4_i32 = arith.constant 4 : i32
    %c0_60 = arith.constant 0 : index
    %c0_61 = arith.constant 0 : index
    %178 = vector.load %arg7[%c0_60, %c0_61] : memref<8x128xf32, #tpu.memory_space<vmem>>, vector<8x128xf32>
    tpu.vector_store %arg7[%c0_60, %c0_61], %172 {strides = array<i32>} : memref<8x128xf32, #tpu.memory_space<vmem>>, vector<8x128xf32>,
    %c0_62 = arith.constant 0 : index
    %c0_63 = arith.constant 0 : index
    %179 = vector.load %arg8[%c0_62, %c0_63] : memref<8x128xf32, #tpu.memory_space<vmem>>, vector<8x128xf32>
    tpu.vector_store %arg8[%c0_62, %c0_63], %170 {strides = array<i32>} : memref<8x128xf32, #tpu.memory_space<vmem>>, vector<8x128xf32>,
    return
  }
  func.func @transform_0(%arg0: i32, %arg1: i32) -> (i32, i32, i32) {
    %c2_i32 = arith.constant 2 : i32
    %0 = arith.muli %c2_i32, %arg1 : i32
    %c1_i32 = arith.constant 1 : i32
    %1 = arith.subi %c1_i32, %0 : i32
    %2 = arith.muli %arg0, %1 : i32
    %3 = arith.addi %arg1, %2 : i32
    %c0_i32 = arith.constant 0 : i32
    %c0_i32_0 = arith.constant 0 : i32
    %c0_i32_1 = arith.constant 0 : i32
    return %3, %c0_i32, %c0_i32_0 : i32, i32, i32
  }
  func.func @transform_1(%arg0: i32, %arg1: i32) -> (i32, i32, i32) {
    %c0_i32 = arith.constant 0 : i32
    %c0_i32_0 = arith.constant 0 : i32
    %c0_i32_1 = arith.constant 0 : i32
    return %arg0, %c0_i32, %c0_i32_0 : i32, i32, i32
  }
  func.func @transform_2(%arg0: i32, %arg1: i32) -> (i32, i32, i32) {
    %c0_i32 = arith.constant 0 : i32
    %c0_i32_0 = arith.constant 0 : i32
    %c0_i32_1 = arith.constant 0 : i32
    return %arg0, %c0_i32, %c0_i32_0 : i32, i32, i32
  }
  func.func @transform_3(%arg0: i32, %arg1: i32) -> (i32, i32, i32) {
    %c0_i32 = arith.constant 0 : i32
    %c0_i32_0 = arith.constant 0 : i32
    %c0_i32_1 = arith.constant 0 : i32
    return %arg0, %c0_i32, %c0_i32_0 : i32, i32, i32
  }
  func.func @transform_4(%arg0: i32, %arg1: i32) -> (i32, i32, i32) {
    %c2_i32 = arith.constant 2 : i32
    %0 = arith.muli %c2_i32, %arg1 : i32
    %c1_i32 = arith.constant 1 : i32
    %1 = arith.subi %c1_i32, %0 : i32
    %2 = arith.muli %arg0, %1 : i32
    %3 = arith.addi %arg1, %2 : i32
    %c0_i32 = arith.constant 0 : i32
    %c0_i32_0 = arith.constant 0 : i32
    return %3, %c0_i32, %arg0 : i32, i32, i32
  }
}

module attributes {stable_mosaic.version = 11 : i64} {
  func.func @_conv_tag_kernel(%arg0: i32, %arg1: memref<4x8x256xbf16, #tpu.memory_space<vmem>>, %arg2: memref<4x8x256xbf16, #tpu.memory_space<vmem>>, %arg3: memref<4x8x256xbf16, #tpu.memory_space<vmem>>, %arg4: memref<768x256xbf16, #tpu.memory_space<vmem>>, %arg5: memref<1x256xf32, #tpu.memory_space<vmem>>, %arg6: memref<256x128xbf16, #tpu.memory_space<vmem>>, %arg7: memref<1x128xf32, #tpu.memory_space<vmem>>, %arg8: memref<4x8x128xf32, #tpu.memory_space<vmem>>) attributes {dimension_semantics = [#tpu.dimension_semantics<parallel>], iteration_bounds = array<i64: 2>, scalar_prefetch = 0 : i64, scratch_operands = 0 : i64, tpu.core_type = #tpu.core_type<tc>, window_params = [{transform_indices = @transform_0, window_bounds = array<i64: 4, 8, 256>}, {transform_indices = @transform_1, window_bounds = array<i64: 4, 8, 256>}, {transform_indices = @transform_2, window_bounds = array<i64: 4, 8, 256>}, {pipeline_mode = #tpu.pipeline_mode<synchronous>, transform_indices = @transform_3, window_bounds = array<i64: 768, 256>}, {pipeline_mode = #tpu.pipeline_mode<synchronous>, transform_indices = @transform_4, window_bounds = array<i64: 1, 256>}, {pipeline_mode = #tpu.pipeline_mode<synchronous>, transform_indices = @transform_5, window_bounds = array<i64: 256, 128>}, {pipeline_mode = #tpu.pipeline_mode<synchronous>, transform_indices = @transform_6, window_bounds = array<i64: 1, 128>}, {transform_indices = @transform_7, window_bounds = array<i64: 4, 8, 128>}]} {
    %c0 = arith.constant 0 : index
    %c0_0 = arith.constant 0 : index
    %c0_1 = arith.constant 0 : index
    %0 = vector.load %arg2[%c0, %c0_0, %c0_1] : memref<4x8x256xbf16, #tpu.memory_space<vmem>>, vector<4x8x256xbf16>
    %c3 = arith.constant 3 : index
    %c0_2 = arith.constant 0 : index
    %c0_3 = arith.constant 0 : index
    %1 = vector.load %arg1[%c3, %c0_2, %c0_3] : memref<4x8x256xbf16, #tpu.memory_space<vmem>>, vector<1x8x256xbf16>
    %2 = vector.shape_cast %1 : vector<1x8x256xbf16> to vector<8x256xbf16>
    %c0_i32 = arith.constant 0 : i32
    %3 = arith.cmpi sgt, %arg0, %c0_i32 : i32
    %4 = arith.extui %3 : i1 to i32
    %5 = arith.sitofp %4 : i32 to f32
    %6 = arith.truncf %5 : f32 to bf16
    %7 = vector.broadcast %6 : bf16 to vector<8x256xbf16>
    %8 = arith.mulf %2, %7 : vector<8x256xbf16>
    %c0_4 = arith.constant 0 : index
    %c0_5 = arith.constant 0 : index
    %c0_6 = arith.constant 0 : index
    %9 = vector.load %arg3[%c0_4, %c0_5, %c0_6] : memref<4x8x256xbf16, #tpu.memory_space<vmem>>, vector<1x8x256xbf16>
    %10 = vector.shape_cast %9 : vector<1x8x256xbf16> to vector<8x256xbf16>
    %c1_i32 = arith.constant 1 : i32
    %11 = arith.cmpi slt, %arg0, %c1_i32 : i32
    %12 = arith.extui %11 : i1 to i32
    %13 = arith.sitofp %12 : i32 to f32
    %14 = arith.truncf %13 : f32 to bf16
    %15 = vector.broadcast %14 : bf16 to vector<8x256xbf16>
    %16 = arith.mulf %10, %15 : vector<8x256xbf16>
    %17 = vector.shape_cast %8 : vector<8x256xbf16> to vector<1x8x256xbf16>
    %18 = vector.extract_strided_slice %0 {offsets = [0, 0, 0], sizes = [3, 8, 256], strides = [1, 1, 1]} : vector<4x8x256xbf16> to vector<3x8x256xbf16>
    %19 = tpu.concatenate %17, %18 in 0 : vector<1x8x256xbf16>, vector<3x8x256xbf16> -> vector<4x8x256xbf16>
    %20 = vector.extract_strided_slice %0 {offsets = [1, 0, 0], sizes = [3, 8, 256], strides = [1, 1, 1]} : vector<4x8x256xbf16> to vector<3x8x256xbf16>
    %21 = vector.shape_cast %16 : vector<8x256xbf16> to vector<1x8x256xbf16>
    %22 = tpu.concatenate %20, %21 in 0 : vector<3x8x256xbf16>, vector<1x8x256xbf16> -> vector<4x8x256xbf16>
    %23 = tpu.concatenate %19, %0, %22 in 2 : vector<4x8x256xbf16>, vector<4x8x256xbf16>, vector<4x8x256xbf16> -> vector<4x8x768xbf16>
    %24 = vector.shape_cast %23 : vector<4x8x768xbf16> to vector<32x768xbf16>
    %c0_7 = arith.constant 0 : index
    %c0_8 = arith.constant 0 : index
    %25 = vector.load %arg4[%c0_7, %c0_8] : memref<768x256xbf16, #tpu.memory_space<vmem>>, vector<768x256xbf16>
    %cst = arith.constant dense<0.000000e+00> : vector<32x256xf32>
    %26 = tpu.matmul %24, %25, %cst {dimension_numbers = #tpu.dot_dimension_numbers<[1], [0], [0], [1], [0, 0, 1, 1], [], []>} : vector<32x768xbf16>, vector<768x256xbf16>, vector<32x256xf32> -> vector<32x256xf32>
    %c0_9 = arith.constant 0 : index
    %c0_10 = arith.constant 0 : index
    %27 = vector.load %arg5[%c0_9, %c0_10] : memref<1x256xf32, #tpu.memory_space<vmem>>, vector<1x256xf32>
    %28 = vector.broadcast %27 : vector<1x256xf32> to vector<32x256xf32>
    %29 = arith.addf %26, %28 : vector<32x256xf32>
    %cst_11 = arith.constant 0.000000e+00 : f32
    %30 = vector.broadcast %cst_11 : f32 to vector<32x256xf32>
    %31 = arith.maximumf %29, %30 : vector<32x256xf32>
    %32 = arith.truncf %31 : vector<32x256xf32> to vector<32x256xbf16>
    %c0_12 = arith.constant 0 : index
    %c0_13 = arith.constant 0 : index
    %33 = vector.load %arg6[%c0_12, %c0_13] : memref<256x128xbf16, #tpu.memory_space<vmem>>, vector<256x128xbf16>
    %cst_14 = arith.constant dense<0.000000e+00> : vector<32x128xf32>
    %34 = tpu.matmul %32, %33, %cst_14 {dimension_numbers = #tpu.dot_dimension_numbers<[1], [0], [0], [1], [0, 0, 1, 1], [], []>} : vector<32x256xbf16>, vector<256x128xbf16>, vector<32x128xf32> -> vector<32x128xf32>
    %c0_15 = arith.constant 0 : index
    %c0_16 = arith.constant 0 : index
    %35 = vector.load %arg7[%c0_15, %c0_16] : memref<1x128xf32, #tpu.memory_space<vmem>>, vector<1x128xf32>
    %36 = vector.broadcast %35 : vector<1x128xf32> to vector<32x128xf32>
    %37 = arith.addf %34, %36 : vector<32x128xf32>
    %38 = vector.shape_cast %37 : vector<32x128xf32> to vector<4x8x128xf32>
    %c0_17 = arith.constant 0 : index
    %c0_18 = arith.constant 0 : index
    %c0_19 = arith.constant 0 : index
    %39 = vector.load %arg8[%c0_17, %c0_18, %c0_19] : memref<4x8x128xf32, #tpu.memory_space<vmem>>, vector<4x8x128xf32>
    tpu.vector_store %arg8[%c0_17, %c0_18, %c0_19], %38 {strides = array<i32>} : memref<4x8x128xf32, #tpu.memory_space<vmem>>, vector<4x8x128xf32>,
    return
  }
  func.func @transform_0(%arg0: i32) -> (i32, i32, i32) {
    %c1_i32 = arith.constant 1 : i32
    %0 = arith.subi %arg0, %c1_i32 : i32
    %c0_i32 = arith.constant 0 : i32
    %1 = arith.maxsi %0, %c0_i32 : i32
    %c0_i32_0 = arith.constant 0 : i32
    %c0_i32_1 = arith.constant 0 : i32
    %c0_i32_2 = arith.constant 0 : i32
    return %1, %c0_i32_0, %c0_i32_1 : i32, i32, i32
  }
  func.func @transform_1(%arg0: i32) -> (i32, i32, i32) {
    %c0_i32 = arith.constant 0 : i32
    %c0_i32_0 = arith.constant 0 : i32
    %c0_i32_1 = arith.constant 0 : i32
    return %arg0, %c0_i32, %c0_i32_0 : i32, i32, i32
  }
  func.func @transform_2(%arg0: i32) -> (i32, i32, i32) {
    %c1_i32 = arith.constant 1 : i32
    %0 = arith.addi %arg0, %c1_i32 : i32
    %c1_i32_0 = arith.constant 1 : i32
    %1 = arith.minsi %0, %c1_i32_0 : i32
    %c0_i32 = arith.constant 0 : i32
    %c0_i32_1 = arith.constant 0 : i32
    %c0_i32_2 = arith.constant 0 : i32
    return %1, %c0_i32, %c0_i32_1 : i32, i32, i32
  }
  func.func @transform_3(%arg0: i32) -> (i32, i32) {
    %c0_i32 = arith.constant 0 : i32
    %c0_i32_0 = arith.constant 0 : i32
    %c0_i32_1 = arith.constant 0 : i32
    return %c0_i32, %c0_i32_0 : i32, i32
  }
  func.func @transform_4(%arg0: i32) -> (i32, i32) {
    %c0_i32 = arith.constant 0 : i32
    %c0_i32_0 = arith.constant 0 : i32
    %c0_i32_1 = arith.constant 0 : i32
    return %c0_i32, %c0_i32_0 : i32, i32
  }
  func.func @transform_5(%arg0: i32) -> (i32, i32) {
    %c0_i32 = arith.constant 0 : i32
    %c0_i32_0 = arith.constant 0 : i32
    %c0_i32_1 = arith.constant 0 : i32
    return %c0_i32, %c0_i32_0 : i32, i32
  }
  func.func @transform_6(%arg0: i32) -> (i32, i32) {
    %c0_i32 = arith.constant 0 : i32
    %c0_i32_0 = arith.constant 0 : i32
    %c0_i32_1 = arith.constant 0 : i32
    return %c0_i32, %c0_i32_0 : i32, i32
  }
  func.func @transform_7(%arg0: i32) -> (i32, i32, i32) {
    %c0_i32 = arith.constant 0 : i32
    %c0_i32_0 = arith.constant 0 : i32
    %c0_i32_1 = arith.constant 0 : i32
    return %arg0, %c0_i32, %c0_i32_0 : i32, i32, i32
  }
}

</mosaic_0001>

<llo_original>
// kernel: bilstm_cnn_forward.2
$region0: #{bilstm_cnn_forward.2}
  #allocation0 [shape = 'u32[]', space=smem, size = 0x4, offset = 0x4, fixed_abs, tag = 'smem constant byte address 0x4 - core index']
  #allocation1 [shape = 'u32[144,128]{1,0:T(1,128)}', space=vmem, size = 0x12000, scoped, tag = 'internal scratch']
  #allocation2 [shape = 'f32[8,128]{1,0:T(8,128)}', space=vmem, size = 0x1000, scoped, tag = 'scratch operand']
  #allocation3 [shape = 'f32[8,128]{1,0:T(8,128)}', space=vmem, size = 0x1000, scoped, tag = 'scratch operand']
  #allocation4 [shape = 'f32[4,8,512]{2,1,0:T(8,128)}', space=vmem, size = 0x10000, scoped, tag = 'scratch operand']
  %s0 = inlined_call_operand.vmem [shape: bf16[8,8,128], index: 0, kind: input, shape index: {}]
  %s1 = inlined_call_operand.vmem [shape: bf16[2,128,512], index: 1, kind: input, shape index: {}]
  %s2 = inlined_call_operand.vmem [shape: bf16[2,128,512], index: 2, kind: input, shape index: {}]
  %s3 = inlined_call_operand.vmem [shape: f32[2,1,512], index: 3, kind: input, shape index: {}]
  %s4 = inlined_call_operand.vmem [shape: bf16[8,8,256], index: 4, kind: output, shape index: {}]
  %s5 = sld [smem:[#allocation0]]
  $region90: #{bilstm_cnn_forward.2} parent=0
    _
  %s7 = ssub.s32 1, %s5
  %s8 = scalar_select 0, %s7, %s5
  $region1: #{bilstm_cnn_forward.2} parent=0
    #allocation5 [shape = 'u8[16384]{0}', space=vmem, size = 0x4000, scoped, tag = 'output window, operand 0']
    loop: start=0, step=1, limit=6
    $region2: #{bilstm_cnn_forward.2} parent=1 // loop_pre_header
      _
    $region3: #{bilstm_cnn_forward.2} parent=1 // loop_header
      %s10 = sphi 0, %s14
      %p11 = scmp.ge.s32.totalorder %s10, 6
      %s17 = sphi 0, %s29
      %s18 = sphi 0, %s25
      %s19 = sphi 0, %s17
      %s20 = sphi 0, %s18
      %s21 = sphi 0, %s19
      %s22 = sphi 0, %s20
      %s40 = sphi 0, %s42
      %s43 = sphi 0, %s40
      %s44 = sphi 0, %s43
      %s60 = sphi 0, %s44
      %s66 = sphi 0, %s68
      %s69 = sphi 0, %s66
      %s70 = sphi 0, %s69
      %s86 = sphi 0, %s70
      %s92 = sphi 0, %s94
      %s95 = sphi 0, %s92
      %s96 = sphi 0, %s95
      %s112 = sphi 0, %s96
      %s118 = sphi 0, %s120
      %s121 = sphi 0, %s118
      %s122 = sphi 0, %s121
      %s138 = sphi 0, %s122
      %s154 = sphi 0, %s156
      %s157 = sphi 0, %s154
      %s158 = sphi 0, %s157
      %s174 = sphi 0, %s158
    $region4: #{bilstm_cnn_forward.2} parent=1 // loop_header_branch
      %13 = sbr.rel (%p11) target = $region8
    $region5: #{bilstm_cnn_forward.2} parent=1 // loop_body
      %s15 = ssub.s32 %s10, 1
      %s16 = ssub.s32 %s10, 2
      %s23 = sadd.s32 1, %s18
      %p24 = scmp.ge.s32.totalorder %s23, 2
      %s25 = scalar_select %p24, 0, %s23
      %s26 = sadd.s32 1, %s17
      %s27 = scalar_select %p24, %s26, %s17
      %p28 = scmp.ge.s32.totalorder %s27, 2
      %s29 = scalar_select %p28, 0, %s27
      %s30 = smul.u32 %s18, 2
      %s31 = ssub.s32 1, %s30
      %s32 = smul.u32 %s17, %s31
      %s33 = sadd.s32 %s18, %s32
      %s34 = smul.u32 %s25, 2
      %s35 = ssub.s32 1, %s34
      %s36 = smul.u32 %s29, %s35
      %s37 = sadd.s32 %s25, %s36
      %s38 = ssub.s32 %s33, %s37
      %p39 = scmp.eq.s32.totalorder %s38, 0
      %s41 = sadd.s32 %s40, 1
      %s42 = scalar_select %p39, %s40, %s41
      %p45 = pneg %p39
      %p46 = scmp.eq.s32.totalorder %s10, 3
      %p47 = por %p45, %p46
      %p48 = scmp.ne.s32.totalorder %s40, %s43
      %p49 = scmp.eq.s32.totalorder %s10, 0
      %p50 = por %p48, %p49
      %p51 = scmp.ne.s32.totalorder %s40, %s43
      %p52 = scmp.eq.s32.totalorder %s15, 3
      %p53 = por %p51, %p52
      %p54 = scmp.ne.s32.totalorder %s43, %s44
      %p55 = scmp.eq.s32.totalorder %s15, 0
      %p56 = por %p54, %p55
      %p57 = scmp.ne.s32.totalorder %s43, %s44
      %p58 = scmp.eq.s32.totalorder %s16, 3
      %p59 = por %p57, %p58
      %p61 = scmp.ne.s32.totalorder %s44, %s60
      %p62 = scmp.eq.s32.totalorder %s16, 0
      %p63 = por %p61, %p62
      %s64 = ssub.s32 %s17, %s29
      %p65 = scmp.eq.s32.totalorder %s64, 0
      %s67 = sadd.s32 %s66, 1
      %s68 = scalar_select %p65, %s66, %s67
      %p71 = pneg %p65
      %p72 = scmp.eq.s32.totalorder %s10, 3
      %p73 = por %p71, %p72
      %p74 = scmp.ne.s32.totalorder %s66, %s69
      %p75 = scmp.eq.s32.totalorder %s10, 0
      %p76 = por %p74, %p75
      %p77 = scmp.ne.s32.totalorder %s66, %s69
      %p78 = scmp.eq.s32.totalorder %s15, 3
      %p79 = por %p77, %p78
      %p80 = scmp.ne.s32.totalorder %s69, %s70
      %p81 = scmp.eq.s32.totalorder %s15, 0
      %p82 = por %p80, %p81
      %p83 = scmp.ne.s32.totalorder %s69, %s70
      %p84 = scmp.eq.s32.totalorder %s16, 3
      %p85 = por %p83, %p84
      %p87 = scmp.ne.s32.totalorder %s70, %s86
      %p88 = scmp.eq.s32.totalorder %s16, 0
      %p89 = por %p87, %p88
      %s90 = ssub.s32 %s17, %s29
      %p91 = scmp.eq.s32.totalorder %s90, 0
      %s93 = sadd.s32 %s92, 1
      %s94 = scalar_select %p91, %s92, %s93
      %p97 = pneg %p91
      %p98 = scmp.eq.s32.totalorder %s10, 3
      %p99 = por %p97, %p98
      %p100 = scmp.ne.s32.totalorder %s92, %s95
      %p101 = scmp.eq.s32.totalorder %s10, 0
      %p102 = por %p100, %p101
      %p103 = scmp.ne.s32.totalorder %s92, %s95
      %p104 = scmp.eq.s32.totalorder %s15, 3
      %p105 = por %p103, %p104
      %p106 = scmp.ne.s32.totalorder %s95, %s96
      %p107 = scmp.eq.s32.totalorder %s15, 0
      %p108 = por %p106, %p107
      %p109 = scmp.ne.s32.totalorder %s95, %s96
      %p110 = scmp.eq.s32.totalorder %s16, 3
      %p111 = por %p109, %p110
      %p113 = scmp.ne.s32.totalorder %s96, %s112
      %p114 = scmp.eq.s32.totalorder %s16, 0
      %p115 = por %p113, %p114
      %s116 = ssub.s32 %s17, %s29
      %p117 = scmp.eq.s32.totalorder %s116, 0
      %s119 = sadd.s32 %s118, 1
      %s120 = scalar_select %p117, %s118, %s119
      %p123 = pneg %p117
      %p124 = scmp.eq.s32.totalorder %s10, 3
      %p125 = por %p123, %p124
      %p126 = scmp.ne.s32.totalorder %s118, %s121
      %p127 = scmp.eq.s32.totalorder %s10, 0
      %p128 = por %p126, %p127
      %p129 = scmp.ne.s32.totalorder %s118, %s121
      %p130 = scmp.eq.s32.totalorder %s15, 3
      %p131 = por %p129, %p130
      %p132 = scmp.ne.s32.totalorder %s121, %s122
      %p133 = scmp.eq.s32.totalorder %s15, 0
      %p134 = por %p132, %p133
      %p135 = scmp.ne.s32.totalorder %s121, %s122
      %p136 = scmp.eq.s32.totalorder %s16, 3
      %p137 = por %p135, %p136
      %p139 = scmp.ne.s32.totalorder %s122, %s138
      %p140 = scmp.eq.s32.totalorder %s16, 0
      %p141 = por %p139, %p140
      %s142 = smul.u32 %s18, 2
      %s143 = ssub.s32 1, %s142
      %s144 = smul.u32 %s17, %s143
      %s145 = sadd.s32 %s18, %s144
      %s146 = smul.u32 %s25, 2
      %s147 = ssub.s32 1, %s146
      %s148 = smul.u32 %s29, %s147
      %s149 = sadd.s32 %s25, %s148
      %s150 = ssub.s32 %s145, %s149
      %s151 = ssub.s32 %s17, %s29
      %s152 = sor.u32 %s150, %s151
      %p153 = scmp.eq.s32.totalorder %s152, 0
      %s155 = sadd.s32 %s154, 1
      %s156 = scalar_select %p153, %s154, %s155
      %p159 = pneg %p153
      %p160 = scmp.eq.s32.totalorder %s10, 3
      %p161 = por %p159, %p160
      %p162 = scmp.ne.s32.totalorder %s154, %s157
      %p163 = scmp.eq.s32.totalorder %s10, 0
      %p164 = por %p162, %p163
      %p165 = scmp.ne.s32.totalorder %s154, %s157
      %p166 = scmp.eq.s32.totalorder %s15, 3
      %p167 = por %p165, %p166
      %p168 = scmp.ne.s32.totalorder %s157, %s158
      %p169 = scmp.eq.s32.totalorder %s15, 0
      %p170 = por %p168, %p169
      %p171 = scmp.ne.s32.totalorder %s157, %s158
      %p172 = scmp.eq.s32.totalorder %s16, 3
      %p173 = por %p171, %p172
      %p175 = scmp.ne.s32.totalorder %s158, %s174
      %p176 = scmp.eq.s32.totalorder %s16, 0
      %p177 = por %p175, %p176
      %p178 = scmp.le.s32.totalorder 1, %s10
      %p179 = scmp.lt.s32.totalorder %s10, 5
      %p180 = pnand %p178, %p179
      %p181 = pneg %p180
      // Predicated region
      $region9: #{bilstm_cnn_forward.2} parent=5 // pred_check
        _
      $region10: #{bilstm_cnn_forward.2} parent=5 // pred_check_branch
        %183 = sbr.rel (%p180) target = $region12
      $region11: #{bilstm_cnn_forward.2} parent=5 // pred_region
        %s184 = ssub.s32 %s10, 1
      $region12: #{bilstm_cnn_forward.2} parent=5 // pred_fallthru
        _
      %p185 = scmp.lt.s32.totalorder %s10, 4
      // Predicated region
      $region13: #{bilstm_cnn_forward.2} parent=5 // pred_check
        %p186 = pneg %p185
      $region14: #{bilstm_cnn_forward.2} parent=5 // pred_check_branch
        %188 = sbr.rel (%p186) target = $region16
      $region15: #{bilstm_cnn_forward.2} parent=5 // pred_region
        // Predicated region
        $region17: #{bilstm_cnn_forward.2} parent=15 // pred_check
          %p189 = pneg %p50
        $region18: #{bilstm_cnn_forward.2} parent=15 // pred_check_branch
          %191 = sbr.rel (%p189) target = $region20
        $region19: #{bilstm_cnn_forward.2} parent=15 // pred_region
          %s192 = smul.u32 %s18, 2
          %s193 = ssub.s32 1, %s192
          %s194 = smul.u32 %s17, %s193
          %s195 = sadd.s32 %s18, %s194
          %s196 = smul.u32 4, %s195
          %p197 = scmp.lt.s32.totalorder %s196, 7
          %s198 = scalar_select %p197, %s196, 7
          %s199 = smul.addr %s198, 4
          %s200 = scalar_lea.vmem %s0, %s199
          %s201 = smul.u32 %s18, 2
          %s202 = ssub.s32 1, %s201
          %s203 = smul.u32 %s17, %s202
          %s204 = sadd.s32 %s18, %s203
          %s205 = smul.u32 4, %s204
        $region20: #{bilstm_cnn_forward.2} parent=15 // pred_fallthru
          _
        // Predicated region
        $region21: #{bilstm_cnn_forward.2} parent=15 // pred_check
          %p206 = pneg %p76
        $region22: #{bilstm_cnn_forward.2} parent=15 // pred_check_branch
          %208 = sbr.rel (%p206) target = $region24
        $region23: #{bilstm_cnn_forward.2} parent=15 // pred_region
          %p209 = scmp.lt.s32.totalorder %s17, 1
          %s210 = scalar_select %p209, %s17, 1
          %s211 = smul.addr %s210, 64
          %s212 = smul.addr %s211, 4
          %s213 = scalar_lea.vmem %s1, %s212
        $region24: #{bilstm_cnn_forward.2} parent=15 // pred_fallthru
          _
        // Predicated region
        $region25: #{bilstm_cnn_forward.2} parent=15 // pred_check
          %p214 = pneg %p102
        $region26: #{bilstm_cnn_forward.2} parent=15 // pred_check_branch
          %216 = sbr.rel (%p214) target = $region28
        $region27: #{bilstm_cnn_forward.2} parent=15 // pred_region
          %p217 = scmp.lt.s32.totalorder %s17, 1
          %s218 = scalar_select %p217, %s17, 1
          %s219 = smul.addr %s218, 64
          %s220 = smul.addr %s219, 4
          %s221 = scalar_lea.vmem %s2, %s220
        $region28: #{bilstm_cnn_forward.2} parent=15 // pred_fallthru
          _
        // Predicated region
        $region29: #{bilstm_cnn_forward.2} parent=15 // pred_check
          %p222 = pneg %p128
        $region30: #{bilstm_cnn_forward.2} parent=15 // pred_check_branch
          %224 = sbr.rel (%p222) target = $region32
        $region31: #{bilstm_cnn_forward.2} parent=15 // pred_region
          %p225 = scmp.lt.s32.totalorder %s17, 1
          %s226 = scalar_select %p225, %s17, 1
          %s227 = smul.addr %s226, 4
          %s228 = scalar_lea.vmem %s3, %s227
        $region32: #{bilstm_cnn_forward.2} parent=15 // pred_fallthru
          _
      $region16: #{bilstm_cnn_forward.2} parent=5 // pred_fallthru
        _
      %p229 = scmp.le.s32.totalorder 1, %s10
      %p230 = scmp.lt.s32.totalorder %s10, 5
      %p231 = pnand %p229, %p230
      %p232 = pneg %p231
      // Predicated region
      $region33: #{bilstm_cnn_forward.2} parent=5 // pred_check
        _
      $region34: #{bilstm_cnn_forward.2} parent=5 // pred_check_branch
        %234 = sbr.rel (%p231) target = $region36
      $region35: #{bilstm_cnn_forward.2} parent=5 // pred_region
        %s235 = ssub.s32 %s10, 1
        %s236 = smul.u32 %s20, 2
        %s237 = ssub.s32 1, %s236
        %s238 = smul.u32 %s19, %s237
        %s239 = sadd.s32 %s20, %s238
        %s240 = smul.u32 4, %s239
        %p241 = scmp.lt.s32.totalorder %s240, 7
        %s242 = scalar_select %p241, %s240, 7
        %s243 = smul.addr %s242, 4
        %s244 = scalar_lea.vmem %s0, %s243
        %p245 = pneg %p56
        %p246 = pneg %p53
        %p247 = scmp.lt.s32.totalorder %s19, 1
        %s248 = scalar_select %p247, %s19, 1
        %s249 = smul.addr %s248, 64
        %s250 = smul.addr %s249, 4
        %s251 = scalar_lea.vmem %s1, %s250
        %p252 = pneg %p82
        %p253 = pneg %p79
        %p254 = scmp.lt.s32.totalorder %s19, 1
        %s255 = scalar_select %p254, %s19, 1
        %s256 = smul.addr %s255, 64
        %s257 = smul.addr %s256, 4
        %s258 = scalar_lea.vmem %s2, %s257
        %p259 = pneg %p108
        %p260 = pneg %p105
        %p261 = scmp.lt.s32.totalorder %s19, 1
        %s262 = scalar_select %p261, %s19, 1
        %s263 = smul.addr %s262, 4
        %s264 = scalar_lea.vmem %s3, %s263
        %p265 = pneg %p134
        %p266 = pneg %p131
        %p267 = pneg %p170
        %p268 = pneg %p167
        %s269 = sand.u32 %s157, 1
        %s270 = sand.u32 %s157, 1
        %s271 = smul.addr %s270, 16
        %s272 = scalar_lea.vmem [#allocation5], %s271
        %s273 = smul.u32 %s20, 2
        %s274 = ssub.s32 1, %s273
        %s275 = smul.u32 %s19, %s274
        %s276 = sadd.s32 %s20, %s275
        %s277 = smul.u32 4, %s276
        %p278 = scmp.lt.s32.totalorder %s277, 7
        %s279 = scalar_select %p278, %s277, 7
        %s280 = smul.addr %s279, 4
        %s281 = scalar_lea.vmem %s0, %s280
        %s282 = smul.u32 %s20, 2
        %s283 = ssub.s32 1, %s282
        %s284 = smul.u32 %s19, %s283
        %s285 = sadd.s32 %s20, %s284
        %s286 = smul.u32 4, %s285
        %p287 = scmp.lt.s32.totalorder %s19, 1
        %s288 = scalar_select %p287, %s19, 1
        %s289 = smul.addr %s288, 64
        %s290 = smul.addr %s289, 4
        %s291 = scalar_lea.vmem %s1, %s290
        %p292 = scmp.lt.s32.totalorder %s19, 1
        %s293 = scalar_select %p292, %s19, 1
        %s294 = smul.addr %s293, 64
        %s295 = smul.addr %s294, 4
        %s296 = scalar_lea.vmem %s2, %s295
        %p297 = scmp.lt.s32.totalorder %s19, 1
        %s298 = scalar_select %p297, %s19, 1
        %s299 = smul.addr %s298, 4
        %s300 = scalar_lea.vmem %s3, %s299
        %s301 = smul.u32 %s20, 2
        %s302 = ssub.s32 1, %s301
        %s303 = smul.u32 %s19, %s302
        %s304 = sadd.s32 %s20, %s303
        %s305 = smul.u32 4, %s304
        %p307 = scmp.eq.s32.totalorder %s20, 0
        // Predicated region
        $region37: #{bilstm_cnn_forward.2} parent=35 // pred_check
          %p308 = pneg %p307
        $region38: #{bilstm_cnn_forward.2} parent=35 // pred_check_branch
          %310 = sbr.rel (%p308) target = $region40
        $region39: #{bilstm_cnn_forward.2} parent=35 // pred_region
          %311 = vst [vmem:[#allocation2] sm:$0xff] 0.0
          %312 = vst [vmem:[#allocation3] sm:$0xff] 0.0
        $region40: #{bilstm_cnn_forward.2} parent=35 // pred_fallthru
          _
        %v313 = vld [vmem:[%s281] sm:$0xf]
        %v314 = vld [vmem:[%s281 + $0x4] sm:$0xf]
        %v315 = vld [vmem:[%s281 + $0x8] sm:$0xf]
        %v316 = vld [vmem:[%s281 + $0xc] sm:$0xf]
        %v317 = vld [vmem:[%s291] sm:$0xff]
        %v318 = vld [vmem:[%s291 + $0x8] sm:$0xff]
        %v319 = vld [vmem:[%s291 + $0x10] sm:$0xff]
        %v320 = vld [vmem:[%s291 + $0x18] sm:$0xff]
        %v321 = vld [vmem:[%s291 + $0x20] sm:$0xff]
        %v322 = vld [vmem:[%s291 + $0x28] sm:$0xff]
        %v323 = vld [vmem:[%s291 + $0x30] sm:$0xff]
        %v324 = vld [vmem:[%s291 + $0x38] sm:$0xff]
        %v325 = vld [vmem:[%s291 + $0x40] sm:$0xff]
        %v326 = vld [vmem:[%s291 + $0x48] sm:$0xff]
        %v327 = vld [vmem:[%s291 + $0x50] sm:$0xff]
        %v328 = vld [vmem:[%s291 + $0x58] sm:$0xff]
        %v329 = vld [vmem:[%s291 + $0x60] sm:$0xff]
        %v330 = vld [vmem:[%s291 + $0x68] sm:$0xff]
        %v331 = vld [vmem:[%s291 + $0x70] sm:$0xff]
        %v332 = vld [vmem:[%s291 + $0x78] sm:$0xff]
        %v333 = vld [vmem:[%s291 + $0x80] sm:$0xff]
        %v334 = vld [vmem:[%s291 + $0x88] sm:$0xff]
        %v335 = vld [vmem:[%s291 + $0x90] sm:$0xff]
        %v336 = vld [vmem:[%s291 + $0x98] sm:$0xff]
        %v337 = vld [vmem:[%s291 + $0xa0] sm:$0xff]
        %v338 = vld [vmem:[%s291 + $0xa8] sm:$0xff]
        %v339 = vld [vmem:[%s291 + $0xb0] sm:$0xff]
        %v340 = vld [vmem:[%s291 + $0xb8] sm:$0xff]
        %v341 = vld [vmem:[%s291 + $0xc0] sm:$0xff]
        %v342 = vld [vmem:[%s291 + $0xc8] sm:$0xff]
        %v343 = vld [vmem:[%s291 + $0xd0] sm:$0xff]
        %v344 = vld [vmem:[%s291 + $0xd8] sm:$0xff]
        %v345 = vld [vmem:[%s291 + $0xe0] sm:$0xff]
        %v346 = vld [vmem:[%s291 + $0xe8] sm:$0xff]
        %v347 = vld [vmem:[%s291 + $0xf0] sm:$0xff]
        %v348 = vld [vmem:[%s291 + $0xf8] sm:$0xff]
        %v349 = vld [vmem:[%s300] sm:$0xf]
        %v351 = vlaneseq
        %v352 = vshrl.u32 %v351, 7
        %v353 = vsub.s32 0, %v352
        %v354 = vrot.slane %v349, %v353
        %v355 = vlaneseq
        %v356 = vshrl.u32 %v355, 7
        %v357 = vsub.s32 1, %v356
        %v358 = vrot.slane %v349, %v357
        %v359 = vlaneseq
        %v360 = vshrl.u32 %v359, 7
        %v361 = vsub.s32 2, %v360
        %v362 = vrot.slane %v349, %v361
        %v363 = vlaneseq
        %v364 = vshrl.u32 %v363, 7
        %v365 = vsub.s32 3, %v364
        %v366 = vrot.slane %v349, %v365
        %v375 = vunpack.c.l.b16 %v313
        %v376 = vunpack.c.l.b16 %v314
        %v377 = vunpack.c.l.b16 %v315
        %v378 = vunpack.c.l.b16 %v316
        %v379 = vpack.c.b16 %v376, %v375
        %v380 = vpack.c.b16 %v378, %v377
        %v415 = vunpack.c.l.b16 %v317
        %v416 = vunpack.c.h.b16 %v317
        %v417 = vunpack.c.l.b16 %v318
        %v418 = vunpack.c.h.b16 %v318
        %v419 = vunpack.c.l.b16 %v319
        %v420 = vunpack.c.h.b16 %v319
        %v421 = vunpack.c.l.b16 %v320
        %v422 = vunpack.c.h.b16 %v320
        %v423 = vunpack.c.l.b16 %v321
        %v424 = vunpack.c.h.b16 %v321
        %v425 = vunpack.c.l.b16 %v322
        %v426 = vunpack.c.h.b16 %v322
        %v427 = vunpack.c.l.b16 %v323
        %v428 = vunpack.c.h.b16 %v323
        %v429 = vunpack.c.l.b16 %v324
        %v430 = vunpack.c.h.b16 %v324
        %v431 = vunpack.c.l.b16 %v325
        %v432 = vunpack.c.h.b16 %v325
        %v433 = vunpack.c.l.b16 %v326
        %v434 = vunpack.c.h.b16 %v326
        %v435 = vunpack.c.l.b16 %v327
        %v436 = vunpack.c.h.b16 %v327
        %v437 = vunpack.c.l.b16 %v328
        %v438 = vunpack.c.h.b16 %v328
        %v439 = vunpack.c.l.b16 %v329
        %v440 = vunpack.c.h.b16 %v329
        %v441 = vunpack.c.l.b16 %v330
        %v442 = vunpack.c.h.b16 %v330
        %v443 = vunpack.c.l.b16 %v331
        %v444 = vunpack.c.h.b16 %v331
        %v445 = vunpack.c.l.b16 %v332
        %v446 = vunpack.c.h.b16 %v332
        %v447 = vunpack.c.l.b16 %v333
        %v448 = vunpack.c.h.b16 %v333
        %v449 = vunpack.c.l.b16 %v334
        %v450 = vunpack.c.h.b16 %v334
        %v451 = vunpack.c.l.b16 %v335
        %v452 = vunpack.c.h.b16 %v335
        %v453 = vunpack.c.l.b16 %v336
        %v454 = vunpack.c.h.b16 %v336
        %v455 = vunpack.c.l.b16 %v337
        %v456 = vunpack.c.h.b16 %v337
        %v457 = vunpack.c.l.b16 %v338
        %v458 = vunpack.c.h.b16 %v338
        %v459 = vunpack.c.l.b16 %v339
        %v460 = vunpack.c.h.b16 %v339
        %v461 = vunpack.c.l.b16 %v340
        %v462 = vunpack.c.h.b16 %v340
        %v463 = vunpack.c.l.b16 %v341
        %v464 = vunpack.c.h.b16 %v341
        %v465 = vunpack.c.l.b16 %v342
        %v466 = vunpack.c.h.b16 %v342
        %v467 = vunpack.c.l.b16 %v343
        %v468 = vunpack.c.h.b16 %v343
        %v469 = vunpack.c.l.b16 %v344
        %v470 = vunpack.c.h.b16 %v344
        %v471 = vunpack.c.l.b16 %v345
        %v472 = vunpack.c.h.b16 %v345
        %v473 = vunpack.c.l.b16 %v346
        %v474 = vunpack.c.h.b16 %v346
        %v475 = vunpack.c.l.b16 %v347
        %v476 = vunpack.c.h.b16 %v347
        %v477 = vunpack.c.l.b16 %v348
        %v478 = vunpack.c.h.b16 %v348
        %v479 = vpack.c.b16 %v419, %v415
        %v480 = vpack.c.b16 %v420, %v416
        %v481 = vpack.c.b16 %v421, %v417
        %v482 = vpack.c.b16 %v422, %v418
        %v483 = vpack.c.b16 %v427, %v423
        %v484 = vpack.c.b16 %v428, %v424
        %v485 = vpack.c.b16 %v429, %v425
        %v486 = vpack.c.b16 %v430, %v426
        %v487 = vpack.c.b16 %v435, %v431
        %v488 = vpack.c.b16 %v436, %v432
        %v489 = vpack.c.b16 %v437, %v433
        %v490 = vpack.c.b16 %v438, %v434
        %v491 = vpack.c.b16 %v443, %v439
        %v492 = vpack.c.b16 %v444, %v440
        %v493 = vpack.c.b16 %v445, %v441
        %v494 = vpack.c.b16 %v446, %v442
        %v495 = vpack.c.b16 %v451, %v447
        %v496 = vpack.c.b16 %v452, %v448
        %v497 = vpack.c.b16 %v453, %v449
        %v498 = vpack.c.b16 %v454, %v450
        %v499 = vpack.c.b16 %v459, %v455
        %v500 = vpack.c.b16 %v460, %v456
        %v501 = vpack.c.b16 %v461, %v457
        %v502 = vpack.c.b16 %v462, %v458
        %v503 = vpack.c.b16 %v467, %v463
        %v504 = vpack.c.b16 %v468, %v464
        %v505 = vpack.c.b16 %v469, %v465
        %v506 = vpack.c.b16 %v470, %v466
        %v507 = vpack.c.b16 %v475, %v471
        %v508 = vpack.c.b16 %v476, %v472
        %v509 = vpack.c.b16 %v477, %v473
        %v510 = vpack.c.b16 %v478, %v474
        %543 = vmatprep.subr.bf16.mxu0 %v508
        %544 = vmatpush1.bf16.msra.mxu0 %v507
        %545 = vmatprep.subr.bf16.mxu0 %v504
        %546 = vmatpush1.bf16.msra.mxu0 %v503
        %547 = vmatprep.subr.bf16.mxu0 %v500
        %548 = vmatpush1.bf16.msra.mxu0 %v499
        %549 = vmatprep.subr.bf16.mxu0 %v496
        %550 = vmatpush1.bf16.msra.mxu0 %v495
        %551 = vmatprep.subr.bf16.mxu0 %v492
        %552 = vmatpush1.bf16.msra.mxu0 %v491
        %553 = vmatprep.subr.bf16.mxu0 %v488
        %554 = vmatpush1.bf16.msra.mxu0 %v487
        %555 = vmatprep.subr.bf16.mxu0 %v484
        %556 = vmatpush1.bf16.msra.mxu0 %v483
        %557 = vmatprep.subr.bf16.mxu0 %v480
        %558 = vmatpush1.bf16.msra.mxu0 %v479
        %559 = vmatprep.subr.bf16.mxu0 0
        %560 = vmatpush2.bf16.msra.mxu0 0
        %561 = vmatprep.subr.bf16.mxu0 0
        %562 = vmatpush2.bf16.msra.mxu0 0
        %563 = vmatprep.subr.bf16.mxu0 0
        %564 = vmatpush2.bf16.msra.mxu0 0
        %565 = vmatprep.subr.bf16.mxu0 0
        %566 = vmatpush2.bf16.msra.mxu0 0
        %567 = vmatprep.subr.bf16.mxu0 0
        %568 = vmatpush2.bf16.msra.mxu0 0
        %569 = vmatprep.subr.bf16.mxu0 0
        %570 = vmatpush2.bf16.msra.mxu0 0
        %571 = vmatprep.subr.bf16.mxu0 0
        %572 = vmatpush2.bf16.msra.mxu0 0
        %573 = vmatprep.subr.bf16.mxu0 0
        %574 = vmatpush2.bf16.msra.mxu0 0
        %575 = vmatprep.mubr.bf16.mxu0 0
        %576 = vmatmul.mubr.bf16.gmra.mxu0 %v379
        %v577 = vpop.f32.mrf.mxu0
        %v578 = vadd.f32 %v354, %v577
        %v579 = vpop.f32.mrf.mxu0
        %v580 = vadd.f32 %v358, %v579
        %v581 = vpop.f32.mrf.mxu0
        %v582 = vadd.f32 %v354, %v581
        %v583 = vpop.f32.mrf.mxu0
        %v584 = vadd.f32 %v358, %v583
        %585 = vmatprep.mubr.bf16.mxu0 0
        %586 = vmatmul.mubr.bf16.gmra.mxu0 %v380
        %v587 = vpop.f32.mrf.mxu0
        %v588 = vadd.f32 %v354, %v587
        %v589 = vpop.f32.mrf.mxu0
        %v590 = vadd.f32 %v358, %v589
        %v591 = vpop.f32.mrf.mxu0
        %v592 = vadd.f32 %v354, %v591
        %v593 = vpop.f32.mrf.mxu0
        %v594 = vadd.f32 %v358, %v593
        %595 = vdwg.mxu0
        %596 = vmatprep.subr.bf16.mxu0 %v510
        %597 = vmatpush1.bf16.msra.mxu0 %v509
        %598 = vmatprep.subr.bf16.mxu0 %v506
        %599 = vmatpush1.bf16.msra.mxu0 %v505
        %600 = vmatprep.subr.bf16.mxu0 %v502
        %601 = vmatpush1.bf16.msra.mxu0 %v501
        %602 = vmatprep.subr.bf16.mxu0 %v498
        %603 = vmatpush1.bf16.msra.mxu0 %v497
        %604 = vmatprep.subr.bf16.mxu0 %v494
        %605 = vmatpush1.bf16.msra.mxu0 %v493
        %606 = vmatprep.subr.bf16.mxu0 %v490
        %607 = vmatpush1.bf16.msra.mxu0 %v489
        %608 = vmatprep.subr.bf16.mxu0 %v486
        %609 = vmatpush1.bf16.msra.mxu0 %v485
        %610 = vmatprep.subr.bf16.mxu0 %v482
        %611 = vmatpush1.bf16.msra.mxu0 %v481
        %612 = vmatprep.subr.bf16.mxu0 0
        %613 = vmatpush2.bf16.msra.mxu0 0
        %614 = vmatprep.subr.bf16.mxu0 0
        %615 = vmatpush2.bf16.msra.mxu0 0
        %616 = vmatprep.subr.bf16.mxu0 0
        %617 = vmatpush2.bf16.msra.mxu0 0
        %618 = vmatprep.subr.bf16.mxu0 0
        %619 = vmatpush2.bf16.msra.mxu0 0
        %620 = vmatprep.subr.bf16.mxu0 0
        %621 = vmatpush2.bf16.msra.mxu0 0
        %622 = vmatprep.subr.bf16.mxu0 0
        %623 = vmatpush2.bf16.msra.mxu0 0
        %624 = vmatprep.subr.bf16.mxu0 0
        %625 = vmatpush2.bf16.msra.mxu0 0
        %626 = vmatprep.subr.bf16.mxu0 0
        %627 = vmatpush2.bf16.msra.mxu0 0
        %628 = vmatprep.mubr.bf16.mxu0 0
        %629 = vmatmul.mubr.bf16.gmra.mxu0 %v379
        %v630 = vpop.f32.mrf.mxu0
        %v631 = vadd.f32 %v362, %v630
        %v632 = vpop.f32.mrf.mxu0
        %v633 = vadd.f32 %v366, %v632
        %v634 = vpop.f32.mrf.mxu0
        %v635 = vadd.f32 %v362, %v634
        %v636 = vpop.f32.mrf.mxu0
        %v637 = vadd.f32 %v366, %v636
        %638 = vmatprep.mubr.bf16.mxu0 0
        %639 = vmatmul.mubr.bf16.gmra.mxu0 %v380
        %v640 = vpop.f32.mrf.mxu0
        %v641 = vadd.f32 %v362, %v640
        %v642 = vpop.f32.mrf.mxu0
        %v643 = vadd.f32 %v366, %v642
        %v644 = vpop.f32.mrf.mxu0
        %v645 = vadd.f32 %v362, %v644
        %v646 = vpop.f32.mrf.mxu0
        %v647 = vadd.f32 %v366, %v646
        %648 = vdwg.mxu0
        %649 = vst [vmem:[#allocation4] sm:$0xff] %v578
        %650 = vst [vmem:[#allocation4 + $0x8] sm:$0xff] %v580
        %651 = vst [vmem:[#allocation4 + $0x10] sm:$0xff] %v631
        %652 = vst [vmem:[#allocation4 + $0x18] sm:$0xff] %v633
        %653 = vst [vmem:[#allocation4 + $0x20] sm:$0xff] %v582
        %654 = vst [vmem:[#allocation4 + $0x28] sm:$0xff] %v584
        %655 = vst [vmem:[#allocation4 + $0x30] sm:$0xff] %v635
        %656 = vst [vmem:[#allocation4 + $0x38] sm:$0xff] %v637
        %657 = vst [vmem:[#allocation4 + $0x40] sm:$0xff] %v588
        %658 = vst [vmem:[#allocation4 + $0x48] sm:$0xff] %v590
        %659 = vst [vmem:[#allocation4 + $0x50] sm:$0xff] %v641
        %660 = vst [vmem:[#allocation4 + $0x58] sm:$0xff] %v643
        %661 = vst [vmem:[#allocation4 + $0x60] sm:$0xff] %v592
        %662 = vst [vmem:[#allocation4 + $0x68] sm:$0xff] %v594
        %663 = vst [vmem:[#allocation4 + $0x70] sm:$0xff] %v645
        %664 = vst [vmem:[#allocation4 + $0x78] sm:$0xff] %v647
        %v665 = vld [vmem:[%s296] sm:$0xff]
        %v666 = vld [vmem:[%s296 + $0x8] sm:$0xff]
        %v667 = vld [vmem:[%s296 + $0x10] sm:$0xff]
        %v668 = vld [vmem:[%s296 + $0x18] sm:$0xff]
        %v669 = vld [vmem:[%s296 + $0x20] sm:$0xff]
        %v670 = vld [vmem:[%s296 + $0x28] sm:$0xff]
        %v671 = vld [vmem:[%s296 + $0x30] sm:$0xff]
        %v672 = vld [vmem:[%s296 + $0x38] sm:$0xff]
        %v673 = vld [vmem:[%s296 + $0x40] sm:$0xff]
        %v674 = vld [vmem:[%s296 + $0x48] sm:$0xff]
        %v675 = vld [vmem:[%s296 + $0x50] sm:$0xff]
        %v676 = vld [vmem:[%s296 + $0x58] sm:$0xff]
        %v677 = vld [vmem:[%s296 + $0x60] sm:$0xff]
        %v678 = vld [vmem:[%s296 + $0x68] sm:$0xff]
        %v679 = vld [vmem:[%s296 + $0x70] sm:$0xff]
        %v680 = vld [vmem:[%s296 + $0x78] sm:$0xff]
        %v681 = vld [vmem:[%s296 + $0x80] sm:$0xff]
        %v682 = vld [vmem:[%s296 + $0x88] sm:$0xff]
        %v683 = vld [vmem:[%s296 + $0x90] sm:$0xff]
        %v684 = vld [vmem:[%s296 + $0x98] sm:$0xff]
        %v685 = vld [vmem:[%s296 + $0xa0] sm:$0xff]
        %v686 = vld [vmem:[%s296 + $0xa8] sm:$0xff]
        %v687 = vld [vmem:[%s296 + $0xb0] sm:$0xff]
        %v688 = vld [vmem:[%s296 + $0xb8] sm:$0xff]
        %v689 = vld [vmem:[%s296 + $0xc0] sm:$0xff]
        %v690 = vld [vmem:[%s296 + $0xc8] sm:$0xff]
        %v691 = vld [vmem:[%s296 + $0xd0] sm:$0xff]
        %v692 = vld [vmem:[%s296 + $0xd8] sm:$0xff]
        %v693 = vld [vmem:[%s296 + $0xe0] sm:$0xff]
        %v694 = vld [vmem:[%s296 + $0xe8] sm:$0xff]
        %v695 = vld [vmem:[%s296 + $0xf0] sm:$0xff]
        %v696 = vld [vmem:[%s296 + $0xf8] sm:$0xff]
        %v697 = vld [vmem:[#allocation2] sm:$0xff]
        %v698 = vld [vmem:[#allocation3] sm:$0xff]
        %s699 = smul.u32 %s19, 3
        %s700 = smul.u32 %s699, 4
        %s701 = smul.addr %s700, 8
        %s702 = scalar_lea.vmem [#allocation4], %s701
        %v703 = vld [vmem:[%s702] sm:$0xff]
        %v704 = vld [vmem:[%s702 + $0x8] sm:$0xff]
        %v705 = vld [vmem:[%s702 + $0x10] sm:$0xff]
        %v706 = vld [vmem:[%s702 + $0x18] sm:$0xff]
        %v707 = vpack.c.bf16 %v697, %v697
        %v740 = vunpack.c.l.b16 %v665
        %v741 = vunpack.c.h.b16 %v665
        %v742 = vunpack.c.l.b16 %v666
        %v743 = vunpack.c.h.b16 %v666
        %v744 = vunpack.c.l.b16 %v667
        %v745 = vunpack.c.h.b16 %v667
        %v746 = vunpack.c.l.b16 %v668
        %v747 = vunpack.c.h.b16 %v668
        %v748 = vunpack.c.l.b16 %v669
        %v749 = vunpack.c.h.b16 %v669
        %v750 = vunpack.c.l.b16 %v670
        %v751 = vunpack.c.h.b16 %v670
        %v752 = vunpack.c.l.b16 %v671
        %v753 = vunpack.c.h.b16 %v671
        %v754 = vunpack.c.l.b16 %v672
        %v755 = vunpack.c.h.b16 %v672
        %v756 = vunpack.c.l.b16 %v673
        %v757 = vunpack.c.h.b16 %v673
        %v758 = vunpack.c.l.b16 %v674
        %v759 = vunpack.c.h.b16 %v674
        %v760 = vunpack.c.l.b16 %v675
        %v761 = vunpack.c.h.b16 %v675
        %v762 = vunpack.c.l.b16 %v676
        %v763 = vunpack.c.h.b16 %v676
        %v764 = vunpack.c.l.b16 %v677
        %v765 = vunpack.c.h.b16 %v677
        %v766 = vunpack.c.l.b16 %v678
        %v767 = vunpack.c.h.b16 %v678
        %v768 = vunpack.c.l.b16 %v679
        %v769 = vunpack.c.h.b16 %v679
        %v770 = vunpack.c.l.b16 %v680
        %v771 = vunpack.c.h.b16 %v680
        %v772 = vunpack.c.l.b16 %v681
        %v773 = vunpack.c.h.b16 %v681
        %v774 = vunpack.c.l.b16 %v682
        %v775 = vunpack.c.h.b16 %v682
        %v776 = vunpack.c.l.b16 %v683
        %v777 = vunpack.c.h.b16 %v683
        %v778 = vunpack.c.l.b16 %v684
        %v779 = vunpack.c.h.b16 %v684
        %v780 = vunpack.c.l.b16 %v685
        %v781 = vunpack.c.h.b16 %v685
        %v782 = vunpack.c.l.b16 %v686
        %v783 = vunpack.c.h.b16 %v686
        %v784 = vunpack.c.l.b16 %v687
        %v785 = vunpack.c.h.b16 %v687
        %v786 = vunpack.c.l.b16 %v688
        %v787 = vunpack.c.h.b16 %v688
        %v788 = vunpack.c.l.b16 %v689
        %v789 = vunpack.c.h.b16 %v689
        %v790 = vunpack.c.l.b16 %v690
        %v791 = vunpack.c.h.b16 %v690
        %v792 = vunpack.c.l.b16 %v691
        %v793 = vunpack.c.h.b16 %v691
        %v794 = vunpack.c.l.b16 %v692
        %v795 = vunpack.c.h.b16 %v692
        %v796 = vunpack.c.l.b16 %v693
        %v797 = vunpack.c.h.b16 %v693
        %v798 = vunpack.c.l.b16 %v694
        %v799 = vunpack.c.h.b16 %v694
        %v800 = vunpack.c.l.b16 %v695
        %v801 = vunpack.c.h.b16 %v695
        %v802 = vunpack.c.l.b16 %v696
        %v803 = vunpack.c.h.b16 %v696
        %v804 = vpack.c.b16 %v744, %v740
        %v805 = vpack.c.b16 %v745, %v741
        %v806 = vpack.c.b16 %v746, %v742
        %v807 = vpack.c.b16 %v747, %v743
        %v808 = vpack.c.b16 %v752, %v748
        %v809 = vpack.c.b16 %v753, %v749
        %v810 = vpack.c.b16 %v754, %v750
        %v811 = vpack.c.b16 %v755, %v751
        %v812 = vpack.c.b16 %v760, %v756
        %v813 = vpack.c.b16 %v761, %v757
        %v814 = vpack.c.b16 %v762, %v758
        %v815 = vpack.c.b16 %v763, %v759
        %v816 = vpack.c.b16 %v768, %v764
        %v817 = vpack.c.b16 %v769, %v765
        %v818 = vpack.c.b16 %v770, %v766
        %v819 = vpack.c.b16 %v771, %v767
        %v820 = vpack.c.b16 %v776, %v772
        %v821 = vpack.c.b16 %v777, %v773
        %v822 = vpack.c.b16 %v778, %v774
        %v823 = vpack.c.b16 %v779, %v775
        %v824 = vpack.c.b16 %v784, %v780
        %v825 = vpack.c.b16 %v785, %v781
        %v826 = vpack.c.b16 %v786, %v782
        %v827 = vpack.c.b16 %v787, %v783
        %v828 = vpack.c.b16 %v792, %v788
        %v829 = vpack.c.b16 %v793, %v789
        %v830 = vpack.c.b16 %v794, %v790
        %v831 = vpack.c.b16 %v795, %v791
        %v832 = vpack.c.b16 %v800, %v796
        %v833 = vpack.c.b16 %v801, %v797
        %v834 = vpack.c.b16 %v802, %v798
        %v835 = vpack.c.b16 %v803, %v799
        %868 = vmatprep.subr.bf16.mxu0 %v833
        %869 = vmatpush1.bf16.msra.mxu0 %v832
        %870 = vmatprep.subr.bf16.mxu0 %v829
        %871 = vmatpush1.bf16.msra.mxu0 %v828
        %872 = vmatprep.subr.bf16.mxu0 %v825
        %873 = vmatpush1.bf16.msra.mxu0 %v824
        %874 = vmatprep.subr.bf16.mxu0 %v821
        %875 = vmatpush1.bf16.msra.mxu0 %v820
        %876 = vmatprep.subr.bf16.mxu0 %v817
        %877 = vmatpush1.bf16.msra.mxu0 %v816
        %878 = vmatprep.subr.bf16.mxu0 %v813
        %879 = vmatpush1.bf16.msra.mxu0 %v812
        %880 = vmatprep.subr.bf16.mxu0 %v809
        %881 = vmatpush1.bf16.msra.mxu0 %v808
        %882 = vmatprep.subr.bf16.mxu0 %v805
        %883 = vmatpush1.bf16.msra.mxu0 %v804
        %884 = vmatprep.subr.bf16.mxu0 0
        %885 = vmatpush2.bf16.msra.mxu0 0
        %886 = vmatprep.subr.bf16.mxu0 0
        %887 = vmatpush2.bf16.msra.mxu0 0
        %888 = vmatprep.subr.bf16.mxu0 0
        %889 = vmatpush2.bf16.msra.mxu0 0
        %890 = vmatprep.subr.bf16.mxu0 0
        %891 = vmatpush2.bf16.msra.mxu0 0
        %892 = vmatprep.subr.bf16.mxu0 0
        %893 = vmatpush2.bf16.msra.mxu0 0
        %894 = vmatprep.subr.bf16.mxu0 0
        %895 = vmatpush2.bf16.msra.mxu0 0
        %896 = vmatprep.subr.bf16.mxu0 0
        %897 = vmatpush2.bf16.msra.mxu0 0
        %898 = vmatprep.subr.bf16.mxu0 0
        %899 = vmatpush2.bf16.msra.mxu0 0
        %900 = vmatprep.mubr.bf16.mxu0 0
        %901 = vmatmul.mubr.bf16.gmra.mxu0 %v707
        %v902 = vpop.f32.mrf.mxu0
        %v903 = vadd.f32 0.0, %v902
        %v904 = vpop.f32.mrf.mxu0
        %v905 = vadd.f32 0.0, %v904
        %v906 = vpop.f32.mrf.mxu0
        %v907 = vpop.f32.mrf.mxu0
        %908 = vdwg.mxu0
        %909 = vmatprep.subr.bf16.mxu0 %v835
        %910 = vmatpush1.bf16.msra.mxu0 %v834
        %911 = vmatprep.subr.bf16.mxu0 %v831
        %912 = vmatpush1.bf16.msra.mxu0 %v830
        %913 = vmatprep.subr.bf16.mxu0 %v827
        %914 = vmatpush1.bf16.msra.mxu0 %v826
        %915 = vmatprep.subr.bf16.mxu0 %v823
        %916 = vmatpush1.bf16.msra.mxu0 %v822
        %917 = vmatprep.subr.bf16.mxu0 %v819
        %918 = vmatpush1.bf16.msra.mxu0 %v818
        %919 = vmatprep.subr.bf16.mxu0 %v815
        %920 = vmatpush1.bf16.msra.mxu0 %v814
        %921 = vmatprep.subr.bf16.mxu0 %v811
        %922 = vmatpush1.bf16.msra.mxu0 %v810
        %923 = vmatprep.subr.bf16.mxu0 %v807
        %924 = vmatpush1.bf16.msra.mxu0 %v806
        %925 = vmatprep.subr.bf16.mxu0 0
        %926 = vmatpush2.bf16.msra.mxu0 0
        %927 = vmatprep.subr.bf16.mxu0 0
        %928 = vmatpush2.bf16.msra.mxu0 0
        %929 = vmatprep.subr.bf16.mxu0 0
        %930 = vmatpush2.bf16.msra.mxu0 0
        %931 = vmatprep.subr.bf16.mxu0 0
        %932 = vmatpush2.bf16.msra.mxu0 0
        %933 = vmatprep.subr.bf16.mxu0 0
        %934 = vmatpush2.bf16.msra.mxu0 0
        %935 = vmatprep.subr.bf16.mxu0 0
        %936 = vmatpush2.bf16.msra.mxu0 0
        %937 = vmatprep.subr.bf16.mxu0 0
        %938 = vmatpush2.bf16.msra.mxu0 0
        %939 = vmatprep.subr.bf16.mxu0 0
        %940 = vmatpush2.bf16.msra.mxu0 0
        %941 = vmatprep.mubr.bf16.mxu0 0
        %942 = vmatmul.mubr.bf16.gmra.mxu0 %v707
        %v943 = vpop.f32.mrf.mxu0
        %v944 = vadd.f32 0.0, %v943
        %v945 = vpop.f32.mrf.mxu0
        %v946 = vadd.f32 0.0, %v945
        %v947 = vpop.f32.mrf.mxu0
        %v948 = vpop.f32.mrf.mxu0
        %949 = vdwg.mxu0
        %v950 = vadd.f32 %v703, %v903
        %v951 = vadd.f32 %v704, %v905
        %v952 = vadd.f32 %v705, %v944
        %v953 = vadd.f32 %v706, %v946
        %v954 = vxor.u32 %v950, 2147483648
        %v955 = vmul.f32 %v954, 1.442695
        %v956 = vpow.pop %v955
        %v957 = vadd.f32 %v956, 1.0
        %v958 = vrcp.pop %v957
        %v959 = vmul.f32 1.0, %v958
        %v960 = vxor.u32 %v951, 2147483648
        %v961 = vmul.f32 %v960, 1.442695
        %v962 = vpow.pop %v961
        %v963 = vadd.f32 %v962, 1.0
        %v964 = vrcp.pop %v963
        %v965 = vmul.f32 1.0, %v964
        %v966 = vtanh.pop %v952
        %v967 = vxor.u32 %v953, 2147483648
        %v968 = vmul.f32 %v967, 1.442695
        %v969 = vpow.pop %v968
        %v970 = vadd.f32 %v969, 1.0
        %v971 = vrcp.pop %v970
        %v972 = vmul.f32 1.0, %v971
        %v973 = vmul.f32 %v965, %v698
        %v974 = vmul.f32 %v959, %v966
        %v975 = vadd.f32 %v973, %v974
        %v976 = vtanh.pop %v975
        %v977 = vmul.f32 %v972, %v976
        %v978 = vpack.c.bf16 %v977, %v977
        %s979 = smul.addr %s699, 4
        %s980 = scalar_lea.vmem %s272, %s979 [#allocation5]
        %981 = vst [vmem:[%s980] sm:$0xf] %v978
        %s982 = sadd.s32 %s19, 1
        %s983 = smul.u32 %s982, 4
        %s984 = smul.addr %s983, 8
        %s985 = scalar_lea.vmem [#allocation4], %s984
        %v986 = vld [vmem:[%s985] sm:$0xff]
        %v987 = vld [vmem:[%s985 + $0x8] sm:$0xff]
        %v988 = vld [vmem:[%s985 + $0x10] sm:$0xff]
        %v989 = vld [vmem:[%s985 + $0x18] sm:$0xff]
        %990 = vmatprep.subr.bf16.mxu0 %v833
        %991 = vmatpush1.bf16.msra.mxu0 %v832
        %992 = vmatprep.subr.bf16.mxu0 %v829
        %993 = vmatpush1.bf16.msra.mxu0 %v828
        %994 = vmatprep.subr.bf16.mxu0 %v825
        %995 = vmatpush1.bf16.msra.mxu0 %v824
        %996 = vmatprep.subr.bf16.mxu0 %v821
        %997 = vmatpush1.bf16.msra.mxu0 %v820
        %998 = vmatprep.subr.bf16.mxu0 %v817
        %999 = vmatpush1.bf16.msra.mxu0 %v816
        %1000 = vmatprep.subr.bf16.mxu0 %v813
        %1001 = vmatpush1.bf16.msra.mxu0 %v812
        %1002 = vmatprep.subr.bf16.mxu0 %v809
        %1003 = vmatpush1.bf16.msra.mxu0 %v808
        %1004 = vmatprep.subr.bf16.mxu0 %v805
        %1005 = vmatpush1.bf16.msra.mxu0 %v804
        %1006 = vmatprep.subr.bf16.mxu0 0
        %1007 = vmatpush2.bf16.msra.mxu0 0
        %1008 = vmatprep.subr.bf16.mxu0 0
        %1009 = vmatpush2.bf16.msra.mxu0 0
        %1010 = vmatprep.subr.bf16.mxu0 0
        %1011 = vmatpush2.bf16.msra.mxu0 0
        %1012 = vmatprep.subr.bf16.mxu0 0
        %1013 = vmatpush2.bf16.msra.mxu0 0
        %1014 = vmatprep.subr.bf16.mxu0 0
        %1015 = vmatpush2.bf16.msra.mxu0 0
        %1016 = vmatprep.subr.bf16.mxu0 0
        %1017 = vmatpush2.bf16.msra.mxu0 0
        %1018 = vmatprep.subr.bf16.mxu0 0
        %1019 = vmatpush2.bf16.msra.mxu0 0
        %1020 = vmatprep.subr.bf16.mxu0 0
        %1021 = vmatpush2.bf16.msra.mxu0 0
        %1022 = vmatprep.mubr.bf16.mxu0 0
        %1023 = vmatmul.mubr.bf16.gmra.mxu0 %v978
        %v1024 = vpop.f32.mrf.mxu0
        %v1025 = vadd.f32 0.0, %v1024
        %v1026 = vpop.f32.mrf.mxu0
        %v1027 = vadd.f32 0.0, %v1026
        %v1028 = vpop.f32.mrf.mxu0
        %v1029 = vpop.f32.mrf.mxu0
        %1030 = vdwg.mxu0
        %1031 = vmatprep.subr.bf16.mxu0 %v835
        %1032 = vmatpush1.bf16.msra.mxu0 %v834
        %1033 = vmatprep.subr.bf16.mxu0 %v831
        %1034 = vmatpush1.bf16.msra.mxu0 %v830
        %1035 = vmatprep.subr.bf16.mxu0 %v827
        %1036 = vmatpush1.bf16.msra.mxu0 %v826
        %1037 = vmatprep.subr.bf16.mxu0 %v823
        %1038 = vmatpush1.bf16.msra.mxu0 %v822
        %1039 = vmatprep.subr.bf16.mxu0 %v819
        %1040 = vmatpush1.bf16.msra.mxu0 %v818
        %1041 = vmatprep.subr.bf16.mxu0 %v815
        %1042 = vmatpush1.bf16.msra.mxu0 %v814
        %1043 = vmatprep.subr.bf16.mxu0 %v811
        %1044 = vmatpush1.bf16.msra.mxu0 %v810
        %1045 = vmatprep.subr.bf16.mxu0 %v807
        %1046 = vmatpush1.bf16.msra.mxu0 %v806
        %1047 = vmatprep.subr.bf16.mxu0 0
        %1048 = vmatpush2.bf16.msra.mxu0 0
        %1049 = vmatprep.subr.bf16.mxu0 0
        %1050 = vmatpush2.bf16.msra.mxu0 0
        %1051 = vmatprep.subr.bf16.mxu0 0
        %1052 = vmatpush2.bf16.msra.mxu0 0
        %1053 = vmatprep.subr.bf16.mxu0 0
        %1054 = vmatpush2.bf16.msra.mxu0 0
        %1055 = vmatprep.subr.bf16.mxu0 0
        %1056 = vmatpush2.bf16.msra.mxu0 0
        %1057 = vmatprep.subr.bf16.mxu0 0
        %1058 = vmatpush2.bf16.msra.mxu0 0
        %1059 = vmatprep.subr.bf16.mxu0 0
        %1060 = vmatpush2.bf16.msra.mxu0 0
        %1061 = vmatprep.subr.bf16.mxu0 0
        %1062 = vmatpush2.bf16.msra.mxu0 0
        %1063 = vmatprep.mubr.bf16.mxu0 0
        %1064 = vmatmul.mubr.bf16.gmra.mxu0 %v978
        %v1065 = vpop.f32.mrf.mxu0
        %v1066 = vadd.f32 0.0, %v1065
        %v1067 = vpop.f32.mrf.mxu0
        %v1068 = vadd.f32 0.0, %v1067
        %v1069 = vpop.f32.mrf.mxu0
        %v1070 = vpop.f32.mrf.mxu0
        %1071 = vdwg.mxu0
        %v1072 = vadd.f32 %v986, %v1025
        %v1073 = vadd.f32 %v987, %v1027
        %v1074 = vadd.f32 %v988, %v1066
        %v1075 = vadd.f32 %v989, %v1068
        %v1076 = vxor.u32 %v1072, 2147483648
        %v1077 = vmul.f32 %v1076, 1.442695
        %v1078 = vpow.pop %v1077
        %v1079 = vadd.f32 %v1078, 1.0
        %v1080 = vrcp.pop %v1079
        %v1081 = vmul.f32 1.0, %v1080
        %v1082 = vxor.u32 %v1073, 2147483648
        %v1083 = vmul.f32 %v1082, 1.442695
        %v1084 = vpow.pop %v1083
        %v1085 = vadd.f32 %v1084, 1.0
        %v1086 = vrcp.pop %v1085
        %v1087 = vmul.f32 1.0, %v1086
        %v1088 = vtanh.pop %v1074
        %v1089 = vxor.u32 %v1075, 2147483648
        %v1090 = vmul.f32 %v1089, 1.442695
        %v1091 = vpow.pop %v1090
        %v1092 = vadd.f32 %v1091, 1.0
        %v1093 = vrcp.pop %v1092
        %v1094 = vmul.f32 1.0, %v1093
        %v1095 = vmul.f32 %v1087, %v975
        %v1096 = vmul.f32 %v1081, %v1088
        %v1097 = vadd.f32 %v1095, %v1096
        %v1098 = vtanh.pop %v1097
        %v1099 = vmul.f32 %v1094, %v1098
        %v1100 = vpack.c.bf16 %v1099, %v1099
        %s1101 = smul.addr %s982, 4
        %s1102 = scalar_lea.vmem %s272, %s1101 [#allocation5]
        %1103 = vst [vmem:[%s1102] sm:$0xf] %v1100
        %s1104 = ssub.s32 2, %s19
        %s1105 = smul.u32 %s1104, 4
        %s1106 = smul.addr %s1105, 8
        %s1107 = scalar_lea.vmem [#allocation4], %s1106
        %v1108 = vld [vmem:[%s1107] sm:$0xff]
        %v1109 = vld [vmem:[%s1107 + $0x8] sm:$0xff]
        %v1110 = vld [vmem:[%s1107 + $0x10] sm:$0xff]
        %v1111 = vld [vmem:[%s1107 + $0x18] sm:$0xff]
        %1112 = vmatprep.subr.bf16.mxu0 %v833
        %1113 = vmatpush1.bf16.msra.mxu0 %v832
        %1114 = vmatprep.subr.bf16.mxu0 %v829
        %1115 = vmatpush1.bf16.msra.mxu0 %v828
        %1116 = vmatprep.subr.bf16.mxu0 %v825
        %1117 = vmatpush1.bf16.msra.mxu0 %v824
        %1118 = vmatprep.subr.bf16.mxu0 %v821
        %1119 = vmatpush1.bf16.msra.mxu0 %v820
        %1120 = vmatprep.subr.bf16.mxu0 %v817
        %1121 = vmatpush1.bf16.msra.mxu0 %v816
        %1122 = vmatprep.subr.bf16.mxu0 %v813
        %1123 = vmatpush1.bf16.msra.mxu0 %v812
        %1124 = vmatprep.subr.bf16.mxu0 %v809
        %1125 = vmatpush1.bf16.msra.mxu0 %v808
        %1126 = vmatprep.subr.bf16.mxu0 %v805
        %1127 = vmatpush1.bf16.msra.mxu0 %v804
        %1128 = vmatprep.subr.bf16.mxu0 0
        %1129 = vmatpush2.bf16.msra.mxu0 0
        %1130 = vmatprep.subr.bf16.mxu0 0
        %1131 = vmatpush2.bf16.msra.mxu0 0
        %1132 = vmatprep.subr.bf16.mxu0 0
        %1133 = vmatpush2.bf16.msra.mxu0 0
        %1134 = vmatprep.subr.bf16.mxu0 0
        %1135 = vmatpush2.bf16.msra.mxu0 0
        %1136 = vmatprep.subr.bf16.mxu0 0
        %1137 = vmatpush2.bf16.msra.mxu0 0
        %1138 = vmatprep.subr.bf16.mxu0 0
        %1139 = vmatpush2.bf16.msra.mxu0 0
        %1140 = vmatprep.subr.bf16.mxu0 0
        %1141 = vmatpush2.bf16.msra.mxu0 0
        %1142 = vmatprep.subr.bf16.mxu0 0
        %1143 = vmatpush2.bf16.msra.mxu0 0
        %1144 = vmatprep.mubr.bf16.mxu0 0
        %1145 = vmatmul.mubr.bf16.gmra.mxu0 %v1100
        %v1146 = vpop.f32.mrf.mxu0
        %v1147 = vadd.f32 0.0, %v1146
        %v1148 = vpop.f32.mrf.mxu0
        %v1149 = vadd.f32 0.0, %v1148
        %v1150 = vpop.f32.mrf.mxu0
        %v1151 = vpop.f32.mrf.mxu0
        %1152 = vdwg.mxu0
        %1153 = vmatprep.subr.bf16.mxu0 %v835
        %1154 = vmatpush1.bf16.msra.mxu0 %v834
        %1155 = vmatprep.subr.bf16.mxu0 %v831
        %1156 = vmatpush1.bf16.msra.mxu0 %v830
        %1157 = vmatprep.subr.bf16.mxu0 %v827
        %1158 = vmatpush1.bf16.msra.mxu0 %v826
        %1159 = vmatprep.subr.bf16.mxu0 %v823
        %1160 = vmatpush1.bf16.msra.mxu0 %v822
        %1161 = vmatprep.subr.bf16.mxu0 %v819
        %1162 = vmatpush1.bf16.msra.mxu0 %v818
        %1163 = vmatprep.subr.bf16.mxu0 %v815
        %1164 = vmatpush1.bf16.msra.mxu0 %v814
        %1165 = vmatprep.subr.bf16.mxu0 %v811
        %1166 = vmatpush1.bf16.msra.mxu0 %v810
        %1167 = vmatprep.subr.bf16.mxu0 %v807
        %1168 = vmatpush1.bf16.msra.mxu0 %v806
        %1169 = vmatprep.subr.bf16.mxu0 0
        %1170 = vmatpush2.bf16.msra.mxu0 0
        %1171 = vmatprep.subr.bf16.mxu0 0
        %1172 = vmatpush2.bf16.msra.mxu0 0
        %1173 = vmatprep.subr.bf16.mxu0 0
        %1174 = vmatpush2.bf16.msra.mxu0 0
        %1175 = vmatprep.subr.bf16.mxu0 0
        %1176 = vmatpush2.bf16.msra.mxu0 0
        %1177 = vmatprep.subr.bf16.mxu0 0
        %1178 = vmatpush2.bf16.msra.mxu0 0
        %1179 = vmatprep.subr.bf16.mxu0 0
        %1180 = vmatpush2.bf16.msra.mxu0 0
        %1181 = vmatprep.subr.bf16.mxu0 0
        %1182 = vmatpush2.bf16.msra.mxu0 0
        %1183 = vmatprep.subr.bf16.mxu0 0
        %1184 = vmatpush2.bf16.msra.mxu0 0
        %1185 = vmatprep.mubr.bf16.mxu0 0
        %1186 = vmatmul.mubr.bf16.gmra.mxu0 %v1100
        %v1187 = vpop.f32.mrf.mxu0
        %v1188 = vadd.f32 0.0, %v1187
        %v1189 = vpop.f32.mrf.mxu0
        %v1190 = vadd.f32 0.0, %v1189
        %v1191 = vpop.f32.mrf.mxu0
        %v1192 = vpop.f32.mrf.mxu0
        %1193 = vdwg.mxu0
        %v1194 = vadd.f32 %v1108, %v1147
        %v1195 = vadd.f32 %v1109, %v1149
        %v1196 = vadd.f32 %v1110, %v1188
        %v1197 = vadd.f32 %v1111, %v1190
        %v1198 = vxor.u32 %v1194, 2147483648
        %v1199 = vmul.f32 %v1198, 1.442695
        %v1200 = vpow.pop %v1199
        %v1201 = vadd.f32 %v1200, 1.0
        %v1202 = vrcp.pop %v1201
        %v1203 = vmul.f32 1.0, %v1202
        %v1204 = vxor.u32 %v1195, 2147483648
        %v1205 = vmul.f32 %v1204, 1.442695
        %v1206 = vpow.pop %v1205
        %v1207 = vadd.f32 %v1206, 1.0
        %v1208 = vrcp.pop %v1207
        %v1209 = vmul.f32 1.0, %v1208
        %v1210 = vtanh.pop %v1196
        %v1211 = vxor.u32 %v1197, 2147483648
        %v1212 = vmul.f32 %v1211, 1.442695
        %v1213 = vpow.pop %v1212
        %v1214 = vadd.f32 %v1213, 1.0
        %v1215 = vrcp.pop %v1214
        %v1216 = vmul.f32 1.0, %v1215
        %v1217 = vmul.f32 %v1209, %v1097
        %v1218 = vmul.f32 %v1203, %v1210
        %v1219 = vadd.f32 %v1217, %v1218
        %v1220 = vtanh.pop %v1219
        %v1221 = vmul.f32 %v1216, %v1220
        %v1222 = vpack.c.bf16 %v1221, %v1221
        %s1223 = smul.addr %s1104, 4
        %s1224 = scalar_lea.vmem %s272, %s1223 [#allocation5]
        %1225 = vst [vmem:[%s1224] sm:$0xf] %v1222
        %s1226 = smul.u32 %s19, 4294967293
        %s1227 = sadd.s32 %s1226, 3
        %s1228 = smul.u32 %s1227, 4
        %s1229 = smul.addr %s1228, 8
        %s1230 = scalar_lea.vmem [#allocation4], %s1229
        %v1231 = vld [vmem:[%s1230] sm:$0xff]
        %v1232 = vld [vmem:[%s1230 + $0x8] sm:$0xff]
        %v1233 = vld [vmem:[%s1230 + $0x10] sm:$0xff]
        %v1234 = vld [vmem:[%s1230 + $0x18] sm:$0xff]
        %1235 = vmatprep.subr.bf16.mxu0 %v833
        %1236 = vmatpush1.bf16.msra.mxu0 %v832
        %1237 = vmatprep.subr.bf16.mxu0 %v829
        %1238 = vmatpush1.bf16.msra.mxu0 %v828
        %1239 = vmatprep.subr.bf16.mxu0 %v825
        %1240 = vmatpush1.bf16.msra.mxu0 %v824
        %1241 = vmatprep.subr.bf16.mxu0 %v821
        %1242 = vmatpush1.bf16.msra.mxu0 %v820
        %1243 = vmatprep.subr.bf16.mxu0 %v817
        %1244 = vmatpush1.bf16.msra.mxu0 %v816
        %1245 = vmatprep.subr.bf16.mxu0 %v813
        %1246 = vmatpush1.bf16.msra.mxu0 %v812
        %1247 = vmatprep.subr.bf16.mxu0 %v809
        %1248 = vmatpush1.bf16.msra.mxu0 %v808
        %1249 = vmatprep.subr.bf16.mxu0 %v805
        %1250 = vmatpush1.bf16.msra.mxu0 %v804
        %1251 = vmatprep.subr.bf16.mxu0 0
        %1252 = vmatpush2.bf16.msra.mxu0 0
        %1253 = vmatprep.subr.bf16.mxu0 0
        %1254 = vmatpush2.bf16.msra.mxu0 0
        %1255 = vmatprep.subr.bf16.mxu0 0
        %1256 = vmatpush2.bf16.msra.mxu0 0
        %1257 = vmatprep.subr.bf16.mxu0 0
        %1258 = vmatpush2.bf16.msra.mxu0 0
        %1259 = vmatprep.subr.bf16.mxu0 0
        %1260 = vmatpush2.bf16.msra.mxu0 0
        %1261 = vmatprep.subr.bf16.mxu0 0
        %1262 = vmatpush2.bf16.msra.mxu0 0
        %1263 = vmatprep.subr.bf16.mxu0 0
        %1264 = vmatpush2.bf16.msra.mxu0 0
        %1265 = vmatprep.subr.bf16.mxu0 0
        %1266 = vmatpush2.bf16.msra.mxu0 0
        %1267 = vmatprep.mubr.bf16.mxu0 0
        %1268 = vmatmul.mubr.bf16.gmra.mxu0 %v1222
        %v1269 = vpop.f32.mrf.mxu0
        %v1270 = vadd.f32 0.0, %v1269
        %v1271 = vpop.f32.mrf.mxu0
        %v1272 = vadd.f32 0.0, %v1271
        %v1273 = vpop.f32.mrf.mxu0
        %v1274 = vpop.f32.mrf.mxu0
        %1275 = vdwg.mxu0
        %1276 = vmatprep.subr.bf16.mxu0 %v835
        %1277 = vmatpush1.bf16.msra.mxu0 %v834
        %1278 = vmatprep.subr.bf16.mxu0 %v831
        %1279 = vmatpush1.bf16.msra.mxu0 %v830
        %1280 = vmatprep.subr.bf16.mxu0 %v827
        %1281 = vmatpush1.bf16.msra.mxu0 %v826
        %1282 = vmatprep.subr.bf16.mxu0 %v823
        %1283 = vmatpush1.bf16.msra.mxu0 %v822
        %1284 = vmatprep.subr.bf16.mxu0 %v819
        %1285 = vmatpush1.bf16.msra.mxu0 %v818
        %1286 = vmatprep.subr.bf16.mxu0 %v815
        %1287 = vmatpush1.bf16.msra.mxu0 %v814
        %1288 = vmatprep.subr.bf16.mxu0 %v811
        %1289 = vmatpush1.bf16.msra.mxu0 %v810
        %1290 = vmatprep.subr.bf16.mxu0 %v807
        %1291 = vmatpush1.bf16.msra.mxu0 %v806
        %1292 = vmatprep.subr.bf16.mxu0 0
        %1293 = vmatpush2.bf16.msra.mxu0 0
        %1294 = vmatprep.subr.bf16.mxu0 0
        %1295 = vmatpush2.bf16.msra.mxu0 0
        %1296 = vmatprep.subr.bf16.mxu0 0
        %1297 = vmatpush2.bf16.msra.mxu0 0
        %1298 = vmatprep.subr.bf16.mxu0 0
        %1299 = vmatpush2.bf16.msra.mxu0 0
        %1300 = vmatprep.subr.bf16.mxu0 0
        %1301 = vmatpush2.bf16.msra.mxu0 0
        %1302 = vmatprep.subr.bf16.mxu0 0
        %1303 = vmatpush2.bf16.msra.mxu0 0
        %1304 = vmatprep.subr.bf16.mxu0 0
        %1305 = vmatpush2.bf16.msra.mxu0 0
        %1306 = vmatprep.subr.bf16.mxu0 0
        %1307 = vmatpush2.bf16.msra.mxu0 0
        %1308 = vmatprep.mubr.bf16.mxu0 0
        %1309 = vmatmul.mubr.bf16.gmra.mxu0 %v1222
        %v1310 = vpop.f32.mrf.mxu0
        %v1311 = vadd.f32 0.0, %v1310
        %v1312 = vpop.f32.mrf.mxu0
        %v1313 = vadd.f32 0.0, %v1312
        %v1314 = vpop.f32.mrf.mxu0
        %v1315 = vpop.f32.mrf.mxu0
        %1316 = vdwg.mxu0
        %v1317 = vadd.f32 %v1231, %v1270
        %v1318 = vadd.f32 %v1232, %v1272
        %v1319 = vadd.f32 %v1233, %v1311
        %v1320 = vadd.f32 %v1234, %v1313
        %v1321 = vxor.u32 %v1317, 2147483648
        %v1322 = vmul.f32 %v1321, 1.442695
        %v1323 = vpow.pop %v1322
        %v1324 = vadd.f32 %v1323, 1.0
        %v1325 = vrcp.pop %v1324
        %v1326 = vmul.f32 1.0, %v1325
        %v1327 = vxor.u32 %v1318, 2147483648
        %v1328 = vmul.f32 %v1327, 1.442695
        %v1329 = vpow.pop %v1328
        %v1330 = vadd.f32 %v1329, 1.0
        %v1331 = vrcp.pop %v1330
        %v1332 = vmul.f32 1.0, %v1331
        %v1333 = vtanh.pop %v1319
        %v1334 = vxor.u32 %v1320, 2147483648
        %v1335 = vmul.f32 %v1334, 1.442695
        %v1336 = vpow.pop %v1335
        %v1337 = vadd.f32 %v1336, 1.0
        %v1338 = vrcp.pop %v1337
        %v1339 = vmul.f32 1.0, %v1338
        %v1340 = vmul.f32 %v1332, %v1219
        %v1341 = vmul.f32 %v1326, %v1333
        %v1342 = vadd.f32 %v1340, %v1341
        %v1343 = vtanh.pop %v1342
        %v1344 = vmul.f32 %v1339, %v1343
        %v1345 = vpack.c.bf16 %v1344, %v1344
        %s1346 = smul.addr %s1227, 4
        %s1347 = scalar_lea.vmem %s272, %s1346 [#allocation5]
        %1348 = vst [vmem:[%s1347] sm:$0xf] %v1345
        %1349 = vst [vmem:[#allocation2] sm:$0xff] %v1344
        %1350 = vst [vmem:[#allocation3] sm:$0xff] %v1342
        %s1351 = sand.u32 %s157, 1
        %s1352 = sand.u32 %s157, 1
        %s1353 = smul.addr %s1352, 16
        %s1354 = scalar_lea.vmem [#allocation5], %s1353
        // Predicated region
        $region41: #{bilstm_cnn_forward.2} parent=35 // pred_check
          %p1355 = pneg %p167
        $region42: #{bilstm_cnn_forward.2} parent=35 // pred_check_branch
          %1357 = sbr.rel (%p1355) target = $region44
        $region43: #{bilstm_cnn_forward.2} parent=35 // pred_region
          %s1358 = smul.u32 %s20, 2
          %s1359 = ssub.s32 1, %s1358
          %s1360 = smul.u32 %s19, %s1359
          %s1361 = sadd.s32 %s20, %s1360
          %s1362 = smul.u32 4, %s1361
          %s1363 = smul.addr %s1362, 2
          %s1364 = sadd.s32 %s19, %s1363
          %s1365 = smul.addr %s1364, 4
          %s1366 = scalar_lea.vmem %s4, %s1365
          // Predicated region
          $region45: #{bilstm_cnn_forward.2} parent=43 // pred_check
            _
          $region46: #{bilstm_cnn_forward.2} parent=43 // pred_check_branch
            %1368 = sbr.rel (0) target = $region48
          $region47: #{bilstm_cnn_forward.2} parent=43 // pred_region
            // Predicated region
            $region49: #{bilstm_cnn_forward.2} parent=47 // pred_check
              _
            $region50: #{bilstm_cnn_forward.2} parent=47 // pred_check_branch
              %1370 = sbr.rel target = $region52
            $region51: #{bilstm_cnn_forward.2} parent=47 // pred_region
              // Predicated region
              $region64: #{bilstm_cnn_forward.2} parent=51 // pred_check
                _
              $region65: #{bilstm_cnn_forward.2} parent=51 // pred_check_branch
                %1392 = sbr.rel (0) target = $region67
              $region66: #{bilstm_cnn_forward.2} parent=51 // pred_region
                loop: start=0, step=1, limit=1
                $region68: #{bilstm_cnn_forward.2} parent=66 // loop_pre_header
                  _
                $region69: #{bilstm_cnn_forward.2} parent=66 // loop_header
                  %s1394 = sphi 0, %s1398
                  %p1395 = scmp.ge.s32.totalorder %s1394, 1
                  %s1399 = sphi %s1354, %s1354
                  %s1400 = sphi %s1366, %s1366
                $region70: #{bilstm_cnn_forward.2} parent=66 // loop_header_branch
                  %1397 = sbr.rel (%p1395) target = $region74
                $region71: #{bilstm_cnn_forward.2} parent=66 // loop_body
                  _
                $region72: #{bilstm_cnn_forward.2} parent=66 // loop_footer
                  %s1398 = sadd.s32 1, %s1394
                $region73: #{bilstm_cnn_forward.2} parent=66 // loop_footer_branch
                  %1393 = sbr.rel target = $region69
                $region74: #{bilstm_cnn_forward.2} parent=66 // loop_exit
                  _
                %s1402 = ssub.s32 16, 1
                loop: start=0, step=1, limit=1
                $region75: #{bilstm_cnn_forward.2} parent=66 // loop_pre_header
                  _
                $region76: #{bilstm_cnn_forward.2} parent=66 // loop_header
                  %s1404 = sphi 0, %s1408
                  %p1405 = scmp.ge.s32.totalorder %s1404, 1
                  %s1409 = sphi %s1354, %s1354
                  %s1410 = sphi %s1366, %s1366
                $region77: #{bilstm_cnn_forward.2} parent=66 // loop_header_branch
                  %1407 = sbr.rel (%p1405) target = $region81
                $region78: #{bilstm_cnn_forward.2} parent=66 // loop_body
                  %v1411 = vld [vmem:[%s1409] sm:%s1402]
                  %1412 = vst [vmem:[%s1410] sm:%s1402] %v1411
                  %v1413 = vld [vmem:[%s1409 + $0x4] sm:%s1402]
                  %1414 = vst [vmem:[%s1410 + $0x8] sm:%s1402] %v1413
                  %v1415 = vld [vmem:[%s1409 + $0x8] sm:%s1402]
                  %1416 = vst [vmem:[%s1410 + $0x10] sm:%s1402] %v1415
                  %v1417 = vld [vmem:[%s1409 + $0xc] sm:%s1402]
                  %1418 = vst [vmem:[%s1410 + $0x18] sm:%s1402] %v1417
                $region79: #{bilstm_cnn_forward.2} parent=66 // loop_footer
                  %s1408 = sadd.s32 1, %s1404
                $region80: #{bilstm_cnn_forward.2} parent=66 // loop_footer_branch
                  %1403 = sbr.rel target = $region76
                $region81: #{bilstm_cnn_forward.2} parent=66 // loop_exit
                  _
              $region67: #{bilstm_cnn_forward.2} parent=51 // pred_fallthru
                _
            $region52: #{bilstm_cnn_forward.2} parent=47 // pred_fallthru
              _
            // Predicated region
            $region53: #{bilstm_cnn_forward.2} parent=47 // pred_check
              _
            $region54: #{bilstm_cnn_forward.2} parent=47 // pred_check_branch
              %1372 = sbr.rel (0) target = $region56
            $region55: #{bilstm_cnn_forward.2} parent=47 // pred_region
              %s1374 = ssub.s32 16, 1
              loop: start=0, step=1, limit=1
              $region57: #{bilstm_cnn_forward.2} parent=55 // loop_pre_header
                _
              $region58: #{bilstm_cnn_forward.2} parent=55 // loop_header
                %s1376 = sphi 0, %s1380
                %p1377 = scmp.ge.s32.totalorder %s1376, 1
                %s1381 = sphi %s1354, %s1354
                %s1382 = sphi %s1366, %s1366
              $region59: #{bilstm_cnn_forward.2} parent=55 // loop_header_branch
                %1379 = sbr.rel (%p1377) target = $region63
              $region60: #{bilstm_cnn_forward.2} parent=55 // loop_body
                %v1383 = vld [vmem:[%s1381] sm:%s1374]
                %1384 = vst [vmem:[%s1382] sm:%s1374] %v1383
                %v1385 = vld [vmem:[%s1381 + $0x4] sm:%s1374]
                %1386 = vst [vmem:[%s1382 + $0x8] sm:%s1374] %v1385
                %v1387 = vld [vmem:[%s1381 + $0x8] sm:%s1374]
                %1388 = vst [vmem:[%s1382 + $0x10] sm:%s1374] %v1387
                %v1389 = vld [vmem:[%s1381 + $0xc] sm:%s1374]
                %1390 = vst [vmem:[%s1382 + $0x18] sm:%s1374] %v1389
              $region61: #{bilstm_cnn_forward.2} parent=55 // loop_footer
                %s1380 = sadd.s32 1, %s1376
              $region62: #{bilstm_cnn_forward.2} parent=55 // loop_footer_branch
                %1375 = sbr.rel target = $region58
              $region63: #{bilstm_cnn_forward.2} parent=55 // loop_exit
                _
            $region56: #{bilstm_cnn_forward.2} parent=47 // pred_fallthru
              _
          $region48: #{bilstm_cnn_forward.2} parent=43 // pred_fallthru
            _
          %1419 = vnop
        $region44: #{bilstm_cnn_forward.2} parent=35 // pred_fallthru
          _
      $region36: #{bilstm_cnn_forward.2} parent=5 // pred_fallthru
        _
      %p1420 = scmp.le.s32.totalorder 2, %s10
      // Predicated region
      $region82: #{bilstm_cnn_forward.2} parent=5 // pred_check
        %p1421 = pneg %p1420
      $region83: #{bilstm_cnn_forward.2} parent=5 // pred_check_branch
        %1423 = sbr.rel (%p1421) target = $region85
      $region84: #{bilstm_cnn_forward.2} parent=5 // pred_region
        %s1424 = ssub.s32 %s10, 2
        // Predicated region
        $region86: #{bilstm_cnn_forward.2} parent=84 // pred_check
          %p1425 = pneg %p173
        $region87: #{bilstm_cnn_forward.2} parent=84 // pred_check_branch
          %1427 = sbr.rel (%p1425) target = $region89
        $region88: #{bilstm_cnn_forward.2} parent=84 // pred_region
          %s1428 = sand.u32 %s158, 1
          %s1429 = sand.u32 %s158, 1
          %s1430 = smul.addr %s1429, 16
          %s1431 = scalar_lea.vmem [#allocation5], %s1430
        $region89: #{bilstm_cnn_forward.2} parent=84 // pred_fallthru
          _
      $region85: #{bilstm_cnn_forward.2} parent=5 // pred_fallthru
        _
    $region6: #{bilstm_cnn_forward.2} parent=1 // loop_footer
      %s14 = sadd.s32 1, %s10
    $region7: #{bilstm_cnn_forward.2} parent=1 // loop_footer_branch
      %9 = sbr.rel target = $region3
    $region8: #{bilstm_cnn_forward.2} parent=1 // loop_exit
      _

// kernel: bilstm_cnn_forward.3
$region0: #{bilstm_cnn_forward.3}
  #allocation0 [shape = 'u32[]', space=smem, size = 0x4, offset = 0x4, fixed_abs, tag = 'smem constant byte address 0x4 - core index']
  #allocation1 [shape = 'u32[144,128]{1,0:T(1,128)}', space=vmem, size = 0x12000, scoped, tag = 'internal scratch']
  %s0 = inlined_call_operand.vmem [shape: bf16[8,8,256], index: 0, kind: input, shape index: {}, may-alias: {0,1,2}]
  %s1 = inlined_call_operand.vmem [shape: bf16[8,8,256], index: 1, kind: input, shape index: {}, may-alias: {0,1,2}]
  %s2 = inlined_call_operand.vmem [shape: bf16[8,8,256], index: 2, kind: input, shape index: {}, may-alias: {0,1,2}]
  %s3 = inlined_call_operand.vmem [shape: bf16[768,256], index: 3, kind: input, shape index: {}]
  %s4 = inlined_call_operand.vmem [shape: f32[1,256], index: 4, kind: input, shape index: {}]
  %s5 = inlined_call_operand.vmem [shape: bf16[256,128], index: 5, kind: input, shape index: {}]
  %s6 = inlined_call_operand.vmem [shape: f32[1,128], index: 6, kind: input, shape index: {}]
  %s7 = inlined_call_operand.vmem [shape: f32[8,8,128], index: 7, kind: output, shape index: {}]
  %s8 = sld [smem:[#allocation0]]
  $region61: #{bilstm_cnn_forward.3} parent=0
    _
  %s10 = ssub.s32 1, %s8
  %s11 = scalar_select 0, %s10, %s8
  loop: start=0, step=1, limit=4
  $region2: #{bilstm_cnn_forward.3} parent=0 // loop_pre_header
    _
  $region3: #{bilstm_cnn_forward.3} parent=0 // loop_header
    %s13 = sphi 0, %s17
    %p14 = scmp.ge.s32.totalorder %s13, 4
    %s29 = sphi 0, %s31
    %s32 = sphi 0, %s29
    %s33 = sphi 0, %s32
    %s49 = sphi 0, %s33
    %s55 = sphi 0, %s57
    %s58 = sphi 0, %s55
    %s59 = sphi 0, %s58
    %s75 = sphi 0, %s59
    %s87 = sphi 0, %s89
    %s90 = sphi 0, %s87
    %s91 = sphi 0, %s90
    %s107 = sphi 0, %s91
    %s111 = sphi 0, %s111
    %s113 = sphi 0, %s111
    %s114 = sphi 0, %s113
    %s128 = sphi 0, %s114
    %s132 = sphi 0, %s132
    %s134 = sphi 0, %s132
    %s135 = sphi 0, %s134
    %s149 = sphi 0, %s135
    %s153 = sphi 0, %s153
    %s155 = sphi 0, %s153
    %s156 = sphi 0, %s155
    %s170 = sphi 0, %s156
    %s174 = sphi 0, %s174
    %s176 = sphi 0, %s174
    %s177 = sphi 0, %s176
    %s191 = sphi 0, %s177
    %s197 = sphi 0, %s199
    %s200 = sphi 0, %s197
    %s201 = sphi 0, %s200
    %s217 = sphi 0, %s201
  $region4: #{bilstm_cnn_forward.3} parent=0 // loop_header_branch
    %16 = sbr.rel (%p14) target = $region8
  $region5: #{bilstm_cnn_forward.3} parent=0 // loop_body
    %s18 = ssub.s32 %s13, 1
    %s19 = ssub.s32 %s13, 2
    %s20 = sadd.s32 %s13, 1
    %s21 = ssub.s32 %s13, 1
    %p22 = scmp.gt.s32.totalorder %s21, 0
    %s23 = scalar_select %p22, %s21, 0
    %s24 = ssub.s32 %s20, 1
    %p25 = scmp.gt.s32.totalorder %s24, 0
    %s26 = scalar_select %p25, %s24, 0
    %s27 = ssub.s32 %s23, %s26
    %p28 = scmp.eq.s32.totalorder %s27, 0
    %s30 = sadd.s32 %s29, 1
    %s31 = scalar_select %p28, %s29, %s30
    %p34 = pneg %p28
    %p35 = scmp.eq.s32.totalorder %s13, 1
    %p36 = por %p34, %p35
    %p37 = scmp.ne.s32.totalorder %s29, %s32
    %p38 = scmp.eq.s32.totalorder %s13, 0
    %p39 = por %p37, %p38
    %p40 = scmp.ne.s32.totalorder %s29, %s32
    %p41 = scmp.eq.s32.totalorder %s18, 1
    %p42 = por %p40, %p41
    %p43 = scmp.ne.s32.totalorder %s32, %s33
    %p44 = scmp.eq.s32.totalorder %s18, 0
    %p45 = por %p43, %p44
    %p46 = scmp.ne.s32.totalorder %s32, %s33
    %p47 = scmp.eq.s32.totalorder %s19, 1
    %p48 = por %p46, %p47
    %p50 = scmp.ne.s32.totalorder %s33, %s49
    %p51 = scmp.eq.s32.totalorder %s19, 0
    %p52 = por %p50, %p51
    %s53 = ssub.s32 %s13, %s20
    %p54 = scmp.eq.s32.totalorder %s53, 0
    %s56 = sadd.s32 %s55, 1
    %s57 = scalar_select %p54, %s55, %s56
    %p60 = pneg %p54
    %p61 = scmp.eq.s32.totalorder %s13, 1
    %p62 = por %p60, %p61
    %p63 = scmp.ne.s32.totalorder %s55, %s58
    %p64 = scmp.eq.s32.totalorder %s13, 0
    %p65 = por %p63, %p64
    %p66 = scmp.ne.s32.totalorder %s55, %s58
    %p67 = scmp.eq.s32.totalorder %s18, 1
    %p68 = por %p66, %p67
    %p69 = scmp.ne.s32.totalorder %s58, %s59
    %p70 = scmp.eq.s32.totalorder %s18, 0
    %p71 = por %p69, %p70
    %p72 = scmp.ne.s32.totalorder %s58, %s59
    %p73 = scmp.eq.s32.totalorder %s19, 1
    %p74 = por %p72, %p73
    %p76 = scmp.ne.s32.totalorder %s59, %s75
    %p77 = scmp.eq.s32.totalorder %s19, 0
    %p78 = por %p76, %p77
    %s79 = sadd.s32 %s13, 1
    %p80 = scmp.lt.s32.totalorder %s79, 1
    %s81 = scalar_select %p80, %s79, 1
    %s82 = sadd.s32 %s20, 1
    %p83 = scmp.lt.s32.totalorder %s82, 1
    %s84 = scalar_select %p83, %s82, 1
    %s85 = ssub.s32 %s81, %s84
    %p86 = scmp.eq.s32.totalorder %s85, 0
    %s88 = sadd.s32 %s87, 1
    %s89 = scalar_select %p86, %s87, %s88
    %p92 = pneg %p86
    %p93 = scmp.eq.s32.totalorder %s13, 1
    %p94 = por %p92, %p93
    %p95 = scmp.ne.s32.totalorder %s87, %s90
    %p96 = scmp.eq.s32.totalorder %s13, 0
    %p97 = por %p95, %p96
    %p98 = scmp.ne.s32.totalorder %s87, %s90
    %p99 = scmp.eq.s32.totalorder %s18, 1
    %p100 = por %p98, %p99
    %p101 = scmp.ne.s32.totalorder %s90, %s91
    %p102 = scmp.eq.s32.totalorder %s18, 0
    %p103 = por %p101, %p102
    %p104 = scmp.ne.s32.totalorder %s90, %s91
    %p105 = scmp.eq.s32.totalorder %s19, 1
    %p106 = por %p104, %p105
    %p108 = scmp.ne.s32.totalorder %s91, %s107
    %p109 = scmp.eq.s32.totalorder %s19, 0
    %p110 = por %p108, %p109
    %s112 = sadd.s32 %s111, 1
    %p115 = scmp.eq.s32.totalorder %s13, 1
    %p116 = scmp.ne.s32.totalorder %s111, %s113
    %p117 = scmp.eq.s32.totalorder %s13, 0
    %p118 = por %p116, %p117
    %p119 = scmp.ne.s32.totalorder %s111, %s113
    %p120 = scmp.eq.s32.totalorder %s18, 1
    %p121 = por %p119, %p120
    %p122 = scmp.ne.s32.totalorder %s113, %s114
    %p123 = scmp.eq.s32.totalorder %s18, 0
    %p124 = por %p122, %p123
    %p125 = scmp.ne.s32.totalorder %s113, %s114
    %p126 = scmp.eq.s32.totalorder %s19, 1
    %p127 = por %p125, %p126
    %p129 = scmp.ne.s32.totalorder %s114, %s128
    %p130 = scmp.eq.s32.totalorder %s19, 0
    %p131 = por %p129, %p130
    %s133 = sadd.s32 %s132, 1
    %p136 = scmp.eq.s32.totalorder %s13, 1
    %p137 = scmp.ne.s32.totalorder %s132, %s134
    %p138 = scmp.eq.s32.totalorder %s13, 0
    %p139 = por %p137, %p138
    %p140 = scmp.ne.s32.totalorder %s132, %s134
    %p141 = scmp.eq.s32.totalorder %s18, 1
    %p142 = por %p140, %p141
    %p143 = scmp.ne.s32.totalorder %s134, %s135
    %p144 = scmp.eq.s32.totalorder %s18, 0
    %p145 = por %p143, %p144
    %p146 = scmp.ne.s32.totalorder %s134, %s135
    %p147 = scmp.eq.s32.totalorder %s19, 1
    %p148 = por %p146, %p147
    %p150 = scmp.ne.s32.totalorder %s135, %s149
    %p151 = scmp.eq.s32.totalorder %s19, 0
    %p152 = por %p150, %p151
    %s154 = sadd.s32 %s153, 1
    %p157 = scmp.eq.s32.totalorder %s13, 1
    %p158 = scmp.ne.s32.totalorder %s153, %s155
    %p159 = scmp.eq.s32.totalorder %s13, 0
    %p160 = por %p158, %p159
    %p161 = scmp.ne.s32.totalorder %s153, %s155
    %p162 = scmp.eq.s32.totalorder %s18, 1
    %p163 = por %p161, %p162
    %p164 = scmp.ne.s32.totalorder %s155, %s156
    %p165 = scmp.eq.s32.totalorder %s18, 0
    %p166 = por %p164, %p165
    %p167 = scmp.ne.s32.totalorder %s155, %s156
    %p168 = scmp.eq.s32.totalorder %s19, 1
    %p169 = por %p167, %p168
    %p171 = scmp.ne.s32.totalorder %s156, %s170
    %p172 = scmp.eq.s32.totalorder %s19, 0
    %p173 = por %p171, %p172
    %s175 = sadd.s32 %s174, 1
    %p178 = scmp.eq.s32.totalorder %s13, 1
    %p179 = scmp.ne.s32.totalorder %s174, %s176
    %p180 = scmp.eq.s32.totalorder %s13, 0
    %p181 = por %p179, %p180
    %p182 = scmp.ne.s32.totalorder %s174, %s176
    %p183 = scmp.eq.s32.totalorder %s18, 1
    %p184 = por %p182, %p183
    %p185 = scmp.ne.s32.totalorder %s176, %s177
    %p186 = scmp.eq.s32.totalorder %s18, 0
    %p187 = por %p185, %p186
    %p188 = scmp.ne.s32.totalorder %s176, %s177
    %p189 = scmp.eq.s32.totalorder %s19, 1
    %p190 = por %p188, %p189
    %p192 = scmp.ne.s32.totalorder %s177, %s191
    %p193 = scmp.eq.s32.totalorder %s19, 0
    %p194 = por %p192, %p193
    %s195 = ssub.s32 %s13, %s20
    %p196 = scmp.eq.s32.totalorder %s195, 0
    %s198 = sadd.s32 %s197, 1
    %s199 = scalar_select %p196, %s197, %s198
    %p202 = pneg %p196
    %p203 = scmp.eq.s32.totalorder %s13, 1
    %p204 = por %p202, %p203
    %p205 = scmp.ne.s32.totalorder %s197, %s200
    %p206 = scmp.eq.s32.totalorder %s13, 0
    %p207 = por %p205, %p206
    %p208 = scmp.ne.s32.totalorder %s197, %s200
    %p209 = scmp.eq.s32.totalorder %s18, 1
    %p210 = por %p208, %p209
    %p211 = scmp.ne.s32.totalorder %s200, %s201
    %p212 = scmp.eq.s32.totalorder %s18, 0
    %p213 = por %p211, %p212
    %p214 = scmp.ne.s32.totalorder %s200, %s201
    %p215 = scmp.eq.s32.totalorder %s19, 1
    %p216 = por %p214, %p215
    %p218 = scmp.ne.s32.totalorder %s201, %s217
    %p219 = scmp.eq.s32.totalorder %s19, 0
    %p220 = por %p218, %p219
    %p221 = scmp.le.s32.totalorder 1, %s13
    %p222 = scmp.lt.s32.totalorder %s13, 3
    %p223 = pnand %p221, %p222
    %p224 = pneg %p223
    // Predicated region
    $region9: #{bilstm_cnn_forward.3} parent=5 // pred_check
      _
    $region10: #{bilstm_cnn_forward.3} parent=5 // pred_check_branch
      %226 = sbr.rel (%p223) target = $region12
    $region11: #{bilstm_cnn_forward.3} parent=5 // pred_region
      %s227 = ssub.s32 %s13, 1
      // Predicated region
      $region13: #{bilstm_cnn_forward.3} parent=11 // pred_check
        %p228 = pneg %p124
      $region14: #{bilstm_cnn_forward.3} parent=11 // pred_check_branch
        %230 = sbr.rel (%p228) target = $region16
      $region15: #{bilstm_cnn_forward.3} parent=11 // pred_region
        _
      $region16: #{bilstm_cnn_forward.3} parent=11 // pred_fallthru
        _
      // Predicated region
      $region17: #{bilstm_cnn_forward.3} parent=11 // pred_check
        %p231 = pneg %p145
      $region18: #{bilstm_cnn_forward.3} parent=11 // pred_check_branch
        %233 = sbr.rel (%p231) target = $region20
      $region19: #{bilstm_cnn_forward.3} parent=11 // pred_region
        _
      $region20: #{bilstm_cnn_forward.3} parent=11 // pred_fallthru
        _
      // Predicated region
      $region21: #{bilstm_cnn_forward.3} parent=11 // pred_check
        %p234 = pneg %p166
      $region22: #{bilstm_cnn_forward.3} parent=11 // pred_check_branch
        %236 = sbr.rel (%p234) target = $region24
      $region23: #{bilstm_cnn_forward.3} parent=11 // pred_region
        _
      $region24: #{bilstm_cnn_forward.3} parent=11 // pred_fallthru
        _
      // Predicated region
      $region25: #{bilstm_cnn_forward.3} parent=11 // pred_check
        %p237 = pneg %p187
      $region26: #{bilstm_cnn_forward.3} parent=11 // pred_check_branch
        %239 = sbr.rel (%p237) target = $region28
      $region27: #{bilstm_cnn_forward.3} parent=11 // pred_region
        _
      $region28: #{bilstm_cnn_forward.3} parent=11 // pred_fallthru
        _
    $region12: #{bilstm_cnn_forward.3} parent=5 // pred_fallthru
      _
    %p240 = scmp.lt.s32.totalorder %s13, 2
    // Predicated region
    $region29: #{bilstm_cnn_forward.3} parent=5 // pred_check
      %p241 = pneg %p240
    $region30: #{bilstm_cnn_forward.3} parent=5 // pred_check_branch
      %243 = sbr.rel (%p241) target = $region32
    $region31: #{bilstm_cnn_forward.3} parent=5 // pred_region
      // Predicated region
      $region33: #{bilstm_cnn_forward.3} parent=31 // pred_check
        %p244 = pneg %p39
      $region34: #{bilstm_cnn_forward.3} parent=31 // pred_check_branch
        %246 = sbr.rel (%p244) target = $region36
      $region35: #{bilstm_cnn_forward.3} parent=31 // pred_region
        %s247 = ssub.s32 %s13, 1
        %p248 = scmp.gt.s32.totalorder %s247, 0
        %s249 = scalar_select %p248, %s247, 0
        %s250 = smul.u32 4, %s249
        %p251 = scmp.lt.s32.totalorder %s250, 7
        %s252 = scalar_select %p251, %s250, 7
        %s253 = smul.addr %s252, 2
        %s254 = smul.addr %s253, 4
        %s255 = scalar_lea.vmem %s0, %s254
        %s256 = ssub.s32 %s13, 1
        %p257 = scmp.gt.s32.totalorder %s256, 0
        %s258 = scalar_select %p257, %s256, 0
        %s259 = smul.u32 4, %s258
      $region36: #{bilstm_cnn_forward.3} parent=31 // pred_fallthru
        _
      // Predicated region
      $region37: #{bilstm_cnn_forward.3} parent=31 // pred_check
        %p260 = pneg %p65
      $region38: #{bilstm_cnn_forward.3} parent=31 // pred_check_branch
        %262 = sbr.rel (%p260) target = $region40
      $region39: #{bilstm_cnn_forward.3} parent=31 // pred_region
        %s263 = smul.u32 4, %s13
        %p264 = scmp.lt.s32.totalorder %s263, 7
        %s265 = scalar_select %p264, %s263, 7
        %s266 = smul.addr %s265, 2
        %s267 = smul.addr %s266, 4
        %s268 = scalar_lea.vmem %s1, %s267
        %s269 = smul.u32 4, %s13
      $region40: #{bilstm_cnn_forward.3} parent=31 // pred_fallthru
        _
      // Predicated region
      $region41: #{bilstm_cnn_forward.3} parent=31 // pred_check
        %p270 = pneg %p97
      $region42: #{bilstm_cnn_forward.3} parent=31 // pred_check_branch
        %272 = sbr.rel (%p270) target = $region44
      $region43: #{bilstm_cnn_forward.3} parent=31 // pred_region
        %s273 = sadd.s32 %s13, 1
        %p274 = scmp.lt.s32.totalorder %s273, 1
        %s275 = scalar_select %p274, %s273, 1
        %s276 = smul.u32 4, %s275
        %p277 = scmp.lt.s32.totalorder %s276, 7
        %s278 = scalar_select %p277, %s276, 7
        %s279 = smul.addr %s278, 2
        %s280 = smul.addr %s279, 4
        %s281 = scalar_lea.vmem %s2, %s280
        %s282 = sadd.s32 %s13, 1
        %p283 = scmp.lt.s32.totalorder %s282, 1
        %s284 = scalar_select %p283, %s282, 1
        %s285 = smul.u32 4, %s284
      $region44: #{bilstm_cnn_forward.3} parent=31 // pred_fallthru
        _
    $region32: #{bilstm_cnn_forward.3} parent=5 // pred_fallthru
      _
    %p286 = scmp.le.s32.totalorder 1, %s13
    %p287 = scmp.lt.s32.totalorder %s13, 3
    %p288 = pnand %p286, %p287
    %p289 = pneg %p288
    // Predicated region
    $region45: #{bilstm_cnn_forward.3} parent=5 // pred_check
      _
    $region46: #{bilstm_cnn_forward.3} parent=5 // pred_check_branch
      %291 = sbr.rel (%p288) target = $region48
    $region47: #{bilstm_cnn_forward.3} parent=5 // pred_region
      %s292 = ssub.s32 %s13, 1
      %s293 = ssub.s32 %s18, 1
      %p294 = scmp.gt.s32.totalorder %s293, 0
      %s295 = scalar_select %p294, %s293, 0
      %s296 = smul.u32 4, %s295
      %p297 = scmp.lt.s32.totalorder %s296, 7
      %s298 = scalar_select %p297, %s296, 7
      %s299 = smul.addr %s298, 2
      %s300 = smul.addr %s299, 4
      %s301 = scalar_lea.vmem %s0, %s300
      %p302 = pneg %p45
      %p303 = pneg %p42
      %s304 = smul.u32 4, %s18
      %p305 = scmp.lt.s32.totalorder %s304, 7
      %s306 = scalar_select %p305, %s304, 7
      %s307 = smul.addr %s306, 2
      %s308 = smul.addr %s307, 4
      %s309 = scalar_lea.vmem %s1, %s308
      %p310 = pneg %p71
      %p311 = pneg %p68
      %s312 = sadd.s32 %s18, 1
      %p313 = scmp.lt.s32.totalorder %s312, 1
      %s314 = scalar_select %p313, %s312, 1
      %s315 = smul.u32 4, %s314
      %p316 = scmp.lt.s32.totalorder %s315, 7
      %s317 = scalar_select %p316, %s315, 7
      %s318 = smul.addr %s317, 2
      %s319 = smul.addr %s318, 4
      %s320 = scalar_lea.vmem %s2, %s319
      %p321 = pneg %p103
      %p322 = pneg %p100
      %p323 = pneg %p124
      %p324 = pneg %p121
      %p325 = pneg %p145
      %p326 = pneg %p142
      %p327 = pneg %p166
      %p328 = pneg %p163
      %p329 = pneg %p187
      %p330 = pneg %p184
      %p331 = pneg %p213
      %p332 = pneg %p210
      %s333 = smul.u32 4, %s18
      %p334 = scmp.lt.s32.totalorder %s333, 7
      %s335 = scalar_select %p334, %s333, 7
      %s336 = smul.addr %s335, 8
      %s337 = scalar_lea.vmem %s7, %s336
      %s338 = ssub.s32 %s18, 1
      %p339 = scmp.gt.s32.totalorder %s338, 0
      %s340 = scalar_select %p339, %s338, 0
      %s341 = smul.u32 4, %s340
      %p342 = scmp.lt.s32.totalorder %s341, 7
      %s343 = scalar_select %p342, %s341, 7
      %s344 = smul.addr %s343, 2
      %s345 = smul.addr %s344, 4
      %s346 = scalar_lea.vmem %s0, %s345
      %s347 = ssub.s32 %s18, 1
      %p348 = scmp.gt.s32.totalorder %s347, 0
      %s349 = scalar_select %p348, %s347, 0
      %s350 = smul.u32 4, %s349
      %s351 = smul.u32 4, %s18
      %p352 = scmp.lt.s32.totalorder %s351, 7
      %s353 = scalar_select %p352, %s351, 7
      %s354 = smul.addr %s353, 2
      %s355 = smul.addr %s354, 4
      %s356 = scalar_lea.vmem %s1, %s355
      %s357 = smul.u32 4, %s18
      %s358 = sadd.s32 %s18, 1
      %p359 = scmp.lt.s32.totalorder %s358, 1
      %s360 = scalar_select %p359, %s358, 1
      %s361 = smul.u32 4, %s360
      %p362 = scmp.lt.s32.totalorder %s361, 7
      %s363 = scalar_select %p362, %s361, 7
      %s364 = smul.addr %s363, 2
      %s365 = smul.addr %s364, 4
      %s366 = scalar_lea.vmem %s2, %s365
      %s367 = sadd.s32 %s18, 1
      %p368 = scmp.lt.s32.totalorder %s367, 1
      %s369 = scalar_select %p368, %s367, 1
      %s370 = smul.u32 4, %s369
      %s371 = smul.u32 4, %s18
      %p372 = scmp.lt.s32.totalorder %s371, 7
      %s373 = scalar_select %p372, %s371, 7
      %s374 = smul.addr %s373, 8
      %s375 = scalar_lea.vmem %s7, %s374
      %s376 = smul.u32 4, %s18
      %v378 = vld [vmem:[%s356] sm:$0xff]
      %v379 = vld [vmem:[%s356 + $0x8] sm:$0xff]
      %v380 = vld [vmem:[%s356 + $0x10] sm:$0xff]
      %v381 = vld [vmem:[%s356 + $0x18] sm:$0xff]
      %s382 = scalar_lea.vmem %s346, 24
      %v383 = vld [vmem:[%s382] sm:$0xff]
      %p384 = scmp.gt.s32.totalorder %s18, 0
      %s385 = scalar_select %p384, 1, 0
      %s386 = scvt.s32.f32 %s385
      %p388 = scmp.ne.f32.partialorder %s386, %s386
      %s389 = sshrl.u32 %s386, 16
      %s390 = sand.u32 %s389, 1
      %s391 = sadd.s32 32767, %s390
      %s392 = sadd.s32 %s386, %s391
      %s393 = sand.u32 %s392, 4294901760
      %s394 = scalar_select %p388, 2143289344, %s393
      %s396 = sshrl.u32 %s394, 16
      %s397 = sshll.u32 %s396, 16
      %s398 = sor.u32 %s396, %s397
      %v399 = vstv %s398
      %v401 = vmul.bf16 %v383, %v399
      %v402 = vld [vmem:[%s366] sm:$0xff]
      %p403 = scmp.lt.s32.totalorder %s18, 1
      %s404 = scalar_select %p403, 1, 0
      %s405 = scvt.s32.f32 %s404
      %p407 = scmp.ne.f32.partialorder %s405, %s405
      %s408 = sshrl.u32 %s405, 16
      %s409 = sand.u32 %s408, 1
      %s410 = sadd.s32 32767, %s409
      %s411 = sadd.s32 %s405, %s410
      %s412 = sand.u32 %s411, 4294901760
      %s413 = scalar_select %p407, 2143289344, %s412
      %s415 = sshrl.u32 %s413, 16
      %s416 = sshll.u32 %s415, 16
      %s417 = sor.u32 %s415, %s416
      %v418 = vstv %s417
      %v420 = vmul.bf16 %v402, %v418
      %v425 = vunpack.c.l.b16 %v401
      %v426 = vunpack.c.h.b16 %v401
      %v427 = vunpack.c.l.b16 %v378
      %v428 = vunpack.c.h.b16 %v378
      %v429 = vunpack.c.l.b16 %v379
      %v430 = vunpack.c.h.b16 %v379
      %v431 = vunpack.c.l.b16 %v380
      %v432 = vunpack.c.h.b16 %v380
      %v434 = vunpack.c.l.b16 %v381
      %v435 = vunpack.c.h.b16 %v381
      %v437 = vunpack.c.l.b16 %v420
      %v438 = vunpack.c.h.b16 %v420
      %v439 = vld [vmem:[%s3] sm:$0xff]
      %v440 = vld [vmem:[%s3 + $0x8] sm:$0xff]
      %v441 = vld [vmem:[%s3 + $0x10] sm:$0xff]
      %v442 = vld [vmem:[%s3 + $0x18] sm:$0xff]
      %v443 = vld [vmem:[%s3 + $0x20] sm:$0xff]
      %v444 = vld [vmem:[%s3 + $0x28] sm:$0xff]
      %v445 = vld [vmem:[%s3 + $0x30] sm:$0xff]
      %v446 = vld [vmem:[%s3 + $0x38] sm:$0xff]
      %v447 = vld [vmem:[%s3 + $0x40] sm:$0xff]
      %v448 = vld [vmem:[%s3 + $0x48] sm:$0xff]
      %v449 = vld [vmem:[%s3 + $0x50] sm:$0xff]
      %v450 = vld [vmem:[%s3 + $0x58] sm:$0xff]
      %v451 = vld [vmem:[%s3 + $0x60] sm:$0xff]
      %v452 = vld [vmem:[%s3 + $0x68] sm:$0xff]
      %v453 = vld [vmem:[%s3 + $0x70] sm:$0xff]
      %v454 = vld [vmem:[%s3 + $0x78] sm:$0xff]
      %v455 = vld [vmem:[%s3 + $0x80] sm:$0xff]
      %v456 = vld [vmem:[%s3 + $0x88] sm:$0xff]
      %v457 = vld [vmem:[%s3 + $0x90] sm:$0xff]
      %v458 = vld [vmem:[%s3 + $0x98] sm:$0xff]
      %v459 = vld [vmem:[%s3 + $0xa0] sm:$0xff]
      %v460 = vld [vmem:[%s3 + $0xa8] sm:$0xff]
      %v461 = vld [vmem:[%s3 + $0xb0] sm:$0xff]
      %v462 = vld [vmem:[%s3 + $0xb8] sm:$0xff]
      %v463 = vld [vmem:[%s3 + $0xc0] sm:$0xff]
      %v464 = vld [vmem:[%s3 + $0xc8] sm:$0xff]
      %v465 = vld [vmem:[%s3 + $0xd0] sm:$0xff]
      %v466 = vld [vmem:[%s3 + $0xd8] sm:$0xff]
      %v467 = vld [vmem:[%s3 + $0xe0] sm:$0xff]
      %v468 = vld [vmem:[%s3 + $0xe8] sm:$0xff]
      %v469 = vld [vmem:[%s3 + $0xf0] sm:$0xff]
      %v470 = vld [vmem:[%s3 + $0xf8] sm:$0xff]
      %v471 = vld [vmem:[%s3 + $0x100] sm:$0xff]
      %v472 = vld [vmem:[%s3 + $0x108] sm:$0xff]
      %v473 = vld [vmem:[%s3 + $0x110] sm:$0xff]
      %v474 = vld [vmem:[%s3 + $0x118] sm:$0xff]
      %v475 = vld [vmem:[%s3 + $0x120] sm:$0xff]
      %v476 = vld [vmem:[%s3 + $0x128] sm:$0xff]
      %v477 = vld [vmem:[%s3 + $0x130] sm:$0xff]
      %v478 = vld [vmem:[%s3 + $0x138] sm:$0xff]
      %v479 = vld [vmem:[%s3 + $0x140] sm:$0xff]
      %v480 = vld [vmem:[%s3 + $0x148] sm:$0xff]
      %v481 = vld [vmem:[%s3 + $0x150] sm:$0xff]
      %v482 = vld [vmem:[%s3 + $0x158] sm:$0xff]
      %v483 = vld [vmem:[%s3 + $0x160] sm:$0xff]
      %v484 = vld [vmem:[%s3 + $0x168] sm:$0xff]
      %v485 = vld [vmem:[%s3 + $0x170] sm:$0xff]
      %v486 = vld [vmem:[%s3 + $0x178] sm:$0xff]
      %v487 = vld [vmem:[%s3 + $0x180] sm:$0xff]
      %v488 = vld [vmem:[%s3 + $0x188] sm:$0xff]
      %v489 = vld [vmem:[%s3 + $0x190] sm:$0xff]
      %v490 = vld [vmem:[%s3 + $0x198] sm:$0xff]
      %v491 = vld [vmem:[%s3 + $0x1a0] sm:$0xff]
      %v492 = vld [vmem:[%s3 + $0x1a8] sm:$0xff]
      %v493 = vld [vmem:[%s3 + $0x1b0] sm:$0xff]
      %v494 = vld [vmem:[%s3 + $0x1b8] sm:$0xff]
      %v495 = vld [vmem:[%s3 + $0x1c0] sm:$0xff]
      %v496 = vld [vmem:[%s3 + $0x1c8] sm:$0xff]
      %v497 = vld [vmem:[%s3 + $0x1d0] sm:$0xff]
      %v498 = vld [vmem:[%s3 + $0x1d8] sm:$0xff]
      %v499 = vld [vmem:[%s3 + $0x1e0] sm:$0xff]
      %v500 = vld [vmem:[%s3 + $0x1e8] sm:$0xff]
      %v501 = vld [vmem:[%s3 + $0x1f0] sm:$0xff]
      %v502 = vld [vmem:[%s3 + $0x1f8] sm:$0xff]
      %v503 = vld [vmem:[%s3 + $0x200] sm:$0xff]
      %v504 = vld [vmem:[%s3 + $0x208] sm:$0xff]
      %v505 = vld [vmem:[%s3 + $0x210] sm:$0xff]
      %v506 = vld [vmem:[%s3 + $0x218] sm:$0xff]
      %v507 = vld [vmem:[%s3 + $0x220] sm:$0xff]
      %v508 = vld [vmem:[%s3 + $0x228] sm:$0xff]
      %v509 = vld [vmem:[%s3 + $0x230] sm:$0xff]
      %v510 = vld [vmem:[%s3 + $0x238] sm:$0xff]
      %v511 = vld [vmem:[%s3 + $0x240] sm:$0xff]
      %v512 = vld [vmem:[%s3 + $0x248] sm:$0xff]
      %v513 = vld [vmem:[%s3 + $0x250] sm:$0xff]
      %v514 = vld [vmem:[%s3 + $0x258] sm:$0xff]
      %v515 = vld [vmem:[%s3 + $0x260] sm:$0xff]
      %v516 = vld [vmem:[%s3 + $0x268] sm:$0xff]
      %v517 = vld [vmem:[%s3 + $0x270] sm:$0xff]
      %v518 = vld [vmem:[%s3 + $0x278] sm:$0xff]
      %v519 = vld [vmem:[%s3 + $0x280] sm:$0xff]
      %v520 = vld [vmem:[%s3 + $0x288] sm:$0xff]
      %v521 = vld [vmem:[%s3 + $0x290] sm:$0xff]
      %v522 = vld [vmem:[%s3 + $0x298] sm:$0xff]
      %v523 = vld [vmem:[%s3 + $0x2a0] sm:$0xff]
      %v524 = vld [vmem:[%s3 + $0x2a8] sm:$0xff]
      %v525 = vld [vmem:[%s3 + $0x2b0] sm:$0xff]
      %v526 = vld [vmem:[%s3 + $0x2b8] sm:$0xff]
      %v527 = vld [vmem:[%s3 + $0x2c0] sm:$0xff]
      %v528 = vld [vmem:[%s3 + $0x2c8] sm:$0xff]
      %v529 = vld [vmem:[%s3 + $0x2d0] sm:$0xff]
      %v530 = vld [vmem:[%s3 + $0x2d8] sm:$0xff]
      %v531 = vld [vmem:[%s3 + $0x2e0] sm:$0xff]
      %v532 = vld [vmem:[%s3 + $0x2e8] sm:$0xff]
      %v533 = vld [vmem:[%s3 + $0x2f0] sm:$0xff]
      %v534 = vld [vmem:[%s3 + $0x2f8] sm:$0xff]
      %v535 = vld [vmem:[%s4] sm:$0x3]
      %v537 = vlaneseq
      %v538 = vshrl.u32 %v537, 7
      %v539 = vsub.s32 0, %v538
      %v540 = vrot.slane %v535, %v539
      %v541 = vlaneseq
      %v542 = vshrl.u32 %v541, 7
      %v543 = vsub.s32 1, %v542
      %v544 = vrot.slane %v535, %v543
      %v547 = vpack.c.b16 %v427, %v425
      %v548 = vpack.c.b16 %v428, %v426
      %v549 = vpack.c.b16 %v429, %v427
      %v550 = vpack.c.b16 %v430, %v428
      %v551 = vpack.c.b16 %v431, %v429
      %v552 = vpack.c.b16 %v432, %v430
      %v553 = vpack.c.b16 %v434, %v431
      %v554 = vpack.c.b16 %v435, %v432
      %v555 = vpack.c.b16 %v437, %v434
      %v556 = vpack.c.b16 %v438, %v435
      %v663 = vunpack.c.l.b16 %v439
      %v664 = vunpack.c.h.b16 %v439
      %v665 = vunpack.c.l.b16 %v440
      %v666 = vunpack.c.h.b16 %v440
      %v667 = vunpack.c.l.b16 %v441
      %v668 = vunpack.c.h.b16 %v441
      %v669 = vunpack.c.l.b16 %v442
      %v670 = vunpack.c.h.b16 %v442
      %v671 = vunpack.c.l.b16 %v443
      %v672 = vunpack.c.h.b16 %v443
      %v673 = vunpack.c.l.b16 %v444
      %v674 = vunpack.c.h.b16 %v444
      %v675 = vunpack.c.l.b16 %v445
      %v676 = vunpack.c.h.b16 %v445
      %v677 = vunpack.c.l.b16 %v446
      %v678 = vunpack.c.h.b16 %v446
      %v679 = vunpack.c.l.b16 %v447
      %v680 = vunpack.c.h.b16 %v447
      %v681 = vunpack.c.l.b16 %v448
      %v682 = vunpack.c.h.b16 %v448
      %v683 = vunpack.c.l.b16 %v449
      %v684 = vunpack.c.h.b16 %v449
      %v685 = vunpack.c.l.b16 %v450
      %v686 = vunpack.c.h.b16 %v450
      %v687 = vunpack.c.l.b16 %v451
      %v688 = vunpack.c.h.b16 %v451
      %v689 = vunpack.c.l.b16 %v452
      %v690 = vunpack.c.h.b16 %v452
      %v691 = vunpack.c.l.b16 %v453
      %v692 = vunpack.c.h.b16 %v453
      %v693 = vunpack.c.l.b16 %v454
      %v694 = vunpack.c.h.b16 %v454
      %v695 = vunpack.c.l.b16 %v455
      %v696 = vunpack.c.h.b16 %v455
      %v697 = vunpack.c.l.b16 %v456
      %v698 = vunpack.c.h.b16 %v456
      %v699 = vunpack.c.l.b16 %v457
      %v700 = vunpack.c.h.b16 %v457
      %v701 = vunpack.c.l.b16 %v458
      %v702 = vunpack.c.h.b16 %v458
      %v703 = vunpack.c.l.b16 %v459
      %v704 = vunpack.c.h.b16 %v459
      %v705 = vunpack.c.l.b16 %v460
      %v706 = vunpack.c.h.b16 %v460
      %v707 = vunpack.c.l.b16 %v461
      %v708 = vunpack.c.h.b16 %v461
      %v709 = vunpack.c.l.b16 %v462
      %v710 = vunpack.c.h.b16 %v462
      %v711 = vunpack.c.l.b16 %v463
      %v712 = vunpack.c.h.b16 %v463
      %v713 = vunpack.c.l.b16 %v464
      %v714 = vunpack.c.h.b16 %v464
      %v715 = vunpack.c.l.b16 %v465
      %v716 = vunpack.c.h.b16 %v465
      %v717 = vunpack.c.l.b16 %v466
      %v718 = vunpack.c.h.b16 %v466
      %v719 = vunpack.c.l.b16 %v467
      %v720 = vunpack.c.h.b16 %v467
      %v721 = vunpack.c.l.b16 %v468
      %v722 = vunpack.c.h.b16 %v468
      %v723 = vunpack.c.l.b16 %v469
      %v724 = vunpack.c.h.b16 %v469
      %v725 = vunpack.c.l.b16 %v470
      %v726 = vunpack.c.h.b16 %v470
      %v727 = vunpack.c.l.b16 %v471
      %v728 = vunpack.c.h.b16 %v471
      %v729 = vunpack.c.l.b16 %v472
      %v730 = vunpack.c.h.b16 %v472
      %v731 = vunpack.c.l.b16 %v473
      %v732 = vunpack.c.h.b16 %v473
      %v733 = vunpack.c.l.b16 %v474
      %v734 = vunpack.c.h.b16 %v474
      %v735 = vunpack.c.l.b16 %v475
      %v736 = vunpack.c.h.b16 %v475
      %v737 = vunpack.c.l.b16 %v476
      %v738 = vunpack.c.h.b16 %v476
      %v739 = vunpack.c.l.b16 %v477
      %v740 = vunpack.c.h.b16 %v477
      %v741 = vunpack.c.l.b16 %v478
      %v742 = vunpack.c.h.b16 %v478
      %v743 = vunpack.c.l.b16 %v479
      %v744 = vunpack.c.h.b16 %v479
      %v745 = vunpack.c.l.b16 %v480
      %v746 = vunpack.c.h.b16 %v480
      %v747 = vunpack.c.l.b16 %v481
      %v748 = vunpack.c.h.b16 %v481
      %v749 = vunpack.c.l.b16 %v482
      %v750 = vunpack.c.h.b16 %v482
      %v751 = vunpack.c.l.b16 %v483
      %v752 = vunpack.c.h.b16 %v483
      %v753 = vunpack.c.l.b16 %v484
      %v754 = vunpack.c.h.b16 %v484
      %v755 = vunpack.c.l.b16 %v485
      %v756 = vunpack.c.h.b16 %v485
      %v757 = vunpack.c.l.b16 %v486
      %v758 = vunpack.c.h.b16 %v486
      %v759 = vunpack.c.l.b16 %v487
      %v760 = vunpack.c.h.b16 %v487
      %v761 = vunpack.c.l.b16 %v488
      %v762 = vunpack.c.h.b16 %v488
      %v763 = vunpack.c.l.b16 %v489
      %v764 = vunpack.c.h.b16 %v489
      %v765 = vunpack.c.l.b16 %v490
      %v766 = vunpack.c.h.b16 %v490
      %v767 = vunpack.c.l.b16 %v491
      %v768 = vunpack.c.h.b16 %v491
      %v769 = vunpack.c.l.b16 %v492
      %v770 = vunpack.c.h.b16 %v492
      %v771 = vunpack.c.l.b16 %v493
      %v772 = vunpack.c.h.b16 %v493
      %v773 = vunpack.c.l.b16 %v494
      %v774 = vunpack.c.h.b16 %v494
      %v775 = vunpack.c.l.b16 %v495
      %v776 = vunpack.c.h.b16 %v495
      %v777 = vunpack.c.l.b16 %v496
      %v778 = vunpack.c.h.b16 %v496
      %v779 = vunpack.c.l.b16 %v497
      %v780 = vunpack.c.h.b16 %v497
      %v781 = vunpack.c.l.b16 %v498
      %v782 = vunpack.c.h.b16 %v498
      %v783 = vunpack.c.l.b16 %v499
      %v784 = vunpack.c.h.b16 %v499
      %v785 = vunpack.c.l.b16 %v500
      %v786 = vunpack.c.h.b16 %v500
      %v787 = vunpack.c.l.b16 %v501
      %v788 = vunpack.c.h.b16 %v501
      %v789 = vunpack.c.l.b16 %v502
      %v790 = vunpack.c.h.b16 %v502
      %v791 = vunpack.c.l.b16 %v503
      %v792 = vunpack.c.h.b16 %v503
      %v793 = vunpack.c.l.b16 %v504
      %v794 = vunpack.c.h.b16 %v504
      %v795 = vunpack.c.l.b16 %v505
      %v796 = vunpack.c.h.b16 %v505
      %v797 = vunpack.c.l.b16 %v506
      %v798 = vunpack.c.h.b16 %v506
      %v799 = vunpack.c.l.b16 %v507
      %v800 = vunpack.c.h.b16 %v507
      %v801 = vunpack.c.l.b16 %v508
      %v802 = vunpack.c.h.b16 %v508
      %v803 = vunpack.c.l.b16 %v509
      %v804 = vunpack.c.h.b16 %v509
      %v805 = vunpack.c.l.b16 %v510
      %v806 = vunpack.c.h.b16 %v510
      %v807 = vunpack.c.l.b16 %v511
      %v808 = vunpack.c.h.b16 %v511
      %v809 = vunpack.c.l.b16 %v512
      %v810 = vunpack.c.h.b16 %v512
      %v811 = vunpack.c.l.b16 %v513
      %v812 = vunpack.c.h.b16 %v513
      %v813 = vunpack.c.l.b16 %v514
      %v814 = vunpack.c.h.b16 %v514
      %v815 = vunpack.c.l.b16 %v515
      %v816 = vunpack.c.h.b16 %v515
      %v817 = vunpack.c.l.b16 %v516
      %v818 = vunpack.c.h.b16 %v516
      %v819 = vunpack.c.l.b16 %v517
      %v820 = vunpack.c.h.b16 %v517
      %v821 = vunpack.c.l.b16 %v518
      %v822 = vunpack.c.h.b16 %v518
      %v823 = vunpack.c.l.b16 %v519
      %v824 = vunpack.c.h.b16 %v519
      %v825 = vunpack.c.l.b16 %v520
      %v826 = vunpack.c.h.b16 %v520
      %v827 = vunpack.c.l.b16 %v521
      %v828 = vunpack.c.h.b16 %v521
      %v829 = vunpack.c.l.b16 %v522
      %v830 = vunpack.c.h.b16 %v522
      %v831 = vunpack.c.l.b16 %v523
      %v832 = vunpack.c.h.b16 %v523
      %v833 = vunpack.c.l.b16 %v524
      %v834 = vunpack.c.h.b16 %v524
      %v835 = vunpack.c.l.b16 %v525
      %v836 = vunpack.c.h.b16 %v525
      %v837 = vunpack.c.l.b16 %v526
      %v838 = vunpack.c.h.b16 %v526
      %v839 = vunpack.c.l.b16 %v527
      %v840 = vunpack.c.h.b16 %v527
      %v841 = vunpack.c.l.b16 %v528
      %v842 = vunpack.c.h.b16 %v528
      %v843 = vunpack.c.l.b16 %v529
      %v844 = vunpack.c.h.b16 %v529
      %v845 = vunpack.c.l.b16 %v530
      %v846 = vunpack.c.h.b16 %v530
      %v847 = vunpack.c.l.b16 %v531
      %v848 = vunpack.c.h.b16 %v531
      %v849 = vunpack.c.l.b16 %v532
      %v850 = vunpack.c.h.b16 %v532
      %v851 = vunpack.c.l.b16 %v533
      %v852 = vunpack.c.h.b16 %v533
      %v853 = vunpack.c.l.b16 %v534
      %v854 = vunpack.c.h.b16 %v534
      %v855 = vpack.c.b16 %v665, %v663
      %v856 = vpack.c.b16 %v666, %v664
      %v857 = vpack.c.b16 %v669, %v667
      %v858 = vpack.c.b16 %v670, %v668
      %v859 = vpack.c.b16 %v673, %v671
      %v860 = vpack.c.b16 %v674, %v672
      %v861 = vpack.c.b16 %v677, %v675
      %v862 = vpack.c.b16 %v678, %v676
      %v863 = vpack.c.b16 %v681, %v679
      %v864 = vpack.c.b16 %v682, %v680
      %v865 = vpack.c.b16 %v685, %v683
      %v866 = vpack.c.b16 %v686, %v684
      %v867 = vpack.c.b16 %v689, %v687
      %v868 = vpack.c.b16 %v690, %v688
      %v869 = vpack.c.b16 %v693, %v691
      %v870 = vpack.c.b16 %v694, %v692
      %v871 = vpack.c.b16 %v697, %v695
      %v872 = vpack.c.b16 %v698, %v696
      %v873 = vpack.c.b16 %v701, %v699
      %v874 = vpack.c.b16 %v702, %v700
      %v875 = vpack.c.b16 %v705, %v703
      %v876 = vpack.c.b16 %v706, %v704
      %v877 = vpack.c.b16 %v709, %v707
      %v878 = vpack.c.b16 %v710, %v708
      %v879 = vpack.c.b16 %v713, %v711
      %v880 = vpack.c.b16 %v714, %v712
      %v881 = vpack.c.b16 %v717, %v715
      %v882 = vpack.c.b16 %v718, %v716
      %v883 = vpack.c.b16 %v721, %v719
      %v884 = vpack.c.b16 %v722, %v720
      %v885 = vpack.c.b16 %v725, %v723
      %v886 = vpack.c.b16 %v726, %v724
      %v887 = vpack.c.b16 %v729, %v727
      %v888 = vpack.c.b16 %v730, %v728
      %v889 = vpack.c.b16 %v733, %v731
      %v890 = vpack.c.b16 %v734, %v732
      %v891 = vpack.c.b16 %v737, %v735
      %v892 = vpack.c.b16 %v738, %v736
      %v893 = vpack.c.b16 %v741, %v739
      %v894 = vpack.c.b16 %v742, %v740
      %v895 = vpack.c.b16 %v745, %v743
      %v896 = vpack.c.b16 %v746, %v744
      %v897 = vpack.c.b16 %v749, %v747
      %v898 = vpack.c.b16 %v750, %v748
      %v899 = vpack.c.b16 %v753, %v751
      %v900 = vpack.c.b16 %v754, %v752
      %v901 = vpack.c.b16 %v757, %v755
      %v902 = vpack.c.b16 %v758, %v756
      %v903 = vpack.c.b16 %v761, %v759
      %v904 = vpack.c.b16 %v762, %v760
      %v905 = vpack.c.b16 %v765, %v763
      %v906 = vpack.c.b16 %v766, %v764
      %v907 = vpack.c.b16 %v769, %v767
      %v908 = vpack.c.b16 %v770, %v768
      %v909 = vpack.c.b16 %v773, %v771
      %v910 = vpack.c.b16 %v774, %v772
      %v911 = vpack.c.b16 %v777, %v775
      %v912 = vpack.c.b16 %v778, %v776
      %v913 = vpack.c.b16 %v781, %v779
      %v914 = vpack.c.b16 %v782, %v780
      %v915 = vpack.c.b16 %v785, %v783
      %v916 = vpack.c.b16 %v786, %v784
      %v917 = vpack.c.b16 %v789, %v787
      %v918 = vpack.c.b16 %v790, %v788
      %v919 = vpack.c.b16 %v793, %v791
      %v920 = vpack.c.b16 %v794, %v792
      %v921 = vpack.c.b16 %v797, %v795
      %v922 = vpack.c.b16 %v798, %v796
      %v923 = vpack.c.b16 %v801, %v799
      %v924 = vpack.c.b16 %v802, %v800
      %v925 = vpack.c.b16 %v805, %v803
      %v926 = vpack.c.b16 %v806, %v804
      %v927 = vpack.c.b16 %v809, %v807
      %v928 = vpack.c.b16 %v810, %v808
      %v929 = vpack.c.b16 %v813, %v811
      %v930 = vpack.c.b16 %v814, %v812
      %v931 = vpack.c.b16 %v817, %v815
      %v932 = vpack.c.b16 %v818, %v816
      %v933 = vpack.c.b16 %v821, %v819
      %v934 = vpack.c.b16 %v822, %v820
      %v935 = vpack.c.b16 %v825, %v823
      %v936 = vpack.c.b16 %v826, %v824
      %v937 = vpack.c.b16 %v829, %v827
      %v938 = vpack.c.b16 %v830, %v828
      %v939 = vpack.c.b16 %v833, %v831
      %v940 = vpack.c.b16 %v834, %v832
      %v941 = vpack.c.b16 %v837, %v835
      %v942 = vpack.c.b16 %v838, %v836
      %v943 = vpack.c.b16 %v841, %v839
      %v944 = vpack.c.b16 %v842, %v840
      %v945 = vpack.c.b16 %v845, %v843
      %v946 = vpack.c.b16 %v846, %v844
      %v947 = vpack.c.b16 %v849, %v847
      %v948 = vpack.c.b16 %v850, %v848
      %v949 = vpack.c.b16 %v853, %v851
      %v950 = vpack.c.b16 %v854, %v852
      %1047 = vmatprep.subr.bf16.mxu0 %v870
      %1048 = vmatpush1.bf16.msra.mxu0 %v869
      %1049 = vmatprep.subr.bf16.mxu0 %v868
      %1050 = vmatpush1.bf16.msra.mxu0 %v867
      %1051 = vmatprep.subr.bf16.mxu0 %v866
      %1052 = vmatpush1.bf16.msra.mxu0 %v865
      %1053 = vmatprep.subr.bf16.mxu0 %v864
      %1054 = vmatpush1.bf16.msra.mxu0 %v863
      %1055 = vmatprep.subr.bf16.mxu0 %v862
      %1056 = vmatpush1.bf16.msra.mxu0 %v861
      %1057 = vmatprep.subr.bf16.mxu0 %v860
      %1058 = vmatpush1.bf16.msra.mxu0 %v859
      %1059 = vmatprep.subr.bf16.mxu0 %v858
      %1060 = vmatpush1.bf16.msra.mxu0 %v857
      %1061 = vmatprep.subr.bf16.mxu0 %v856
      %1062 = vmatpush1.bf16.msra.mxu0 %v855
      %1063 = vmatprep.subr.bf16.mxu0 %v886
      %1064 = vmatpush2.bf16.msra.mxu0 %v885
      %1065 = vmatprep.subr.bf16.mxu0 %v884
      %1066 = vmatpush2.bf16.msra.mxu0 %v883
      %1067 = vmatprep.subr.bf16.mxu0 %v882
      %1068 = vmatpush2.bf16.msra.mxu0 %v881
      %1069 = vmatprep.subr.bf16.mxu0 %v880
      %1070 = vmatpush2.bf16.msra.mxu0 %v879
      %1071 = vmatprep.subr.bf16.mxu0 %v878
      %1072 = vmatpush2.bf16.msra.mxu0 %v877
      %1073 = vmatprep.subr.bf16.mxu0 %v876
      %1074 = vmatpush2.bf16.msra.mxu0 %v875
      %1075 = vmatprep.subr.bf16.mxu0 %v874
      %1076 = vmatpush2.bf16.msra.mxu0 %v873
      %1077 = vmatprep.subr.bf16.mxu0 %v872
      %1078 = vmatpush2.bf16.msra.mxu0 %v871
      %1079 = vmatprep.mubr.bf16.mxu0 %v548
      %1080 = vmatmul.mubr.bf16.gmra.mxu0 %v547
      %v1081 = vpop.f32.mrf.mxu0
      %v1082 = vadd.f32 %v540, %v1081
      %v1083 = vpop.f32.mrf.mxu0
      %v1084 = vadd.f32 %v544, %v1083
      %v1085 = vpop.f32.mrf.mxu0
      %v1086 = vadd.f32 %v540, %v1085
      %v1087 = vpop.f32.mrf.mxu0
      %v1088 = vadd.f32 %v544, %v1087
      %1089 = vmatprep.mubr.bf16.mxu0 %v552
      %1090 = vmatmul.mubr.bf16.gmra.mxu0 %v551
      %v1091 = vpop.f32.mrf.mxu0
      %v1092 = vadd.f32 %v540, %v1091
      %v1093 = vpop.f32.mrf.mxu0
      %v1094 = vadd.f32 %v544, %v1093
      %v1095 = vpop.f32.mrf.mxu0
      %v1096 = vadd.f32 %v540, %v1095
      %v1097 = vpop.f32.mrf.mxu0
      %v1098 = vadd.f32 %v544, %v1097
      %1099 = vdwg.mxu0
      %1100 = vmatprep.subr.bf16.mxu0 %v902
      %1101 = vmatpush1.bf16.msra.mxu0 %v901
      %1102 = vmatprep.subr.bf16.mxu0 %v900
      %1103 = vmatpush1.bf16.msra.mxu0 %v899
      %1104 = vmatprep.subr.bf16.mxu0 %v898
      %1105 = vmatpush1.bf16.msra.mxu0 %v897
      %1106 = vmatprep.subr.bf16.mxu0 %v896
      %1107 = vmatpush1.bf16.msra.mxu0 %v895
      %1108 = vmatprep.subr.bf16.mxu0 %v894
      %1109 = vmatpush1.bf16.msra.mxu0 %v893
      %1110 = vmatprep.subr.bf16.mxu0 %v892
      %1111 = vmatpush1.bf16.msra.mxu0 %v891
      %1112 = vmatprep.subr.bf16.mxu0 %v890
      %1113 = vmatpush1.bf16.msra.mxu0 %v889
      %1114 = vmatprep.subr.bf16.mxu0 %v888
      %1115 = vmatpush1.bf16.msra.mxu0 %v887
      %1116 = vmatprep.subr.bf16.mxu0 %v918
      %1117 = vmatpush2.bf16.msra.mxu0 %v917
      %1118 = vmatprep.subr.bf16.mxu0 %v916
      %1119 = vmatpush2.bf16.msra.mxu0 %v915
      %1120 = vmatprep.subr.bf16.mxu0 %v914
      %1121 = vmatpush2.bf16.msra.mxu0 %v913
      %1122 = vmatprep.subr.bf16.mxu0 %v912
      %1123 = vmatpush2.bf16.msra.mxu0 %v911
      %1124 = vmatprep.subr.bf16.mxu0 %v910
      %1125 = vmatpush2.bf16.msra.mxu0 %v909
      %1126 = vmatprep.subr.bf16.mxu0 %v908
      %1127 = vmatpush2.bf16.msra.mxu0 %v907
      %1128 = vmatprep.subr.bf16.mxu0 %v906
      %1129 = vmatpush2.bf16.msra.mxu0 %v905
      %1130 = vmatprep.subr.bf16.mxu0 %v904
      %1131 = vmatpush2.bf16.msra.mxu0 %v903
      %1132 = vmatprep.mubr.bf16.mxu0 %v550
      %1133 = vmatmul.mubr.bf16.gmra.mxu0 %v549
      %v1134 = vpop.f32.mrf.mxu0
      %v1135 = vadd.f32 %v1082, %v1134
      %v1136 = vpop.f32.mrf.mxu0
      %v1137 = vadd.f32 %v1084, %v1136
      %v1138 = vpop.f32.mrf.mxu0
      %v1139 = vadd.f32 %v1086, %v1138
      %v1140 = vpop.f32.mrf.mxu0
      %v1141 = vadd.f32 %v1088, %v1140
      %1142 = vmatprep.mubr.bf16.mxu0 %v554
      %1143 = vmatmul.mubr.bf16.gmra.mxu0 %v553
      %v1144 = vpop.f32.mrf.mxu0
      %v1145 = vadd.f32 %v1092, %v1144
      %v1146 = vpop.f32.mrf.mxu0
      %v1147 = vadd.f32 %v1094, %v1146
      %v1148 = vpop.f32.mrf.mxu0
      %v1149 = vadd.f32 %v1096, %v1148
      %v1150 = vpop.f32.mrf.mxu0
      %v1151 = vadd.f32 %v1098, %v1150
      %1152 = vdwg.mxu0
      %1153 = vmatprep.subr.bf16.mxu0 %v934
      %1154 = vmatpush1.bf16.msra.mxu0 %v933
      %1155 = vmatprep.subr.bf16.mxu0 %v932
      %1156 = vmatpush1.bf16.msra.mxu0 %v931
      %1157 = vmatprep.subr.bf16.mxu0 %v930
      %1158 = vmatpush1.bf16.msra.mxu0 %v929
      %1159 = vmatprep.subr.bf16.mxu0 %v928
      %1160 = vmatpush1.bf16.msra.mxu0 %v927
      %1161 = vmatprep.subr.bf16.mxu0 %v926
      %1162 = vmatpush1.bf16.msra.mxu0 %v925
      %1163 = vmatprep.subr.bf16.mxu0 %v924
      %1164 = vmatpush1.bf16.msra.mxu0 %v923
      %1165 = vmatprep.subr.bf16.mxu0 %v922
      %1166 = vmatpush1.bf16.msra.mxu0 %v921
      %1167 = vmatprep.subr.bf16.mxu0 %v920
      %1168 = vmatpush1.bf16.msra.mxu0 %v919
      %1169 = vmatprep.subr.bf16.mxu0 %v950
      %1170 = vmatpush2.bf16.msra.mxu0 %v949
      %1171 = vmatprep.subr.bf16.mxu0 %v948
      %1172 = vmatpush2.bf16.msra.mxu0 %v947
      %1173 = vmatprep.subr.bf16.mxu0 %v946
      %1174 = vmatpush2.bf16.msra.mxu0 %v945
      %1175 = vmatprep.subr.bf16.mxu0 %v944
      %1176 = vmatpush2.bf16.msra.mxu0 %v943
      %1177 = vmatprep.subr.bf16.mxu0 %v942
      %1178 = vmatpush2.bf16.msra.mxu0 %v941
      %1179 = vmatprep.subr.bf16.mxu0 %v940
      %1180 = vmatpush2.bf16.msra.mxu0 %v939
      %1181 = vmatprep.subr.bf16.mxu0 %v938
      %1182 = vmatpush2.bf16.msra.mxu0 %v937
      %1183 = vmatprep.subr.bf16.mxu0 %v936
      %1184 = vmatpush2.bf16.msra.mxu0 %v935
      %1185 = vmatprep.mubr.bf16.mxu0 %v552
      %1186 = vmatmul.mubr.bf16.gmra.mxu0 %v551
      %v1187 = vpop.f32.mrf.mxu0
      %v1188 = vadd.f32 %v1135, %v1187
      %v1189 = vpop.f32.mrf.mxu0
      %v1190 = vadd.f32 %v1137, %v1189
      %v1191 = vpop.f32.mrf.mxu0
      %v1192 = vadd.f32 %v1139, %v1191
      %v1193 = vpop.f32.mrf.mxu0
      %v1194 = vadd.f32 %v1141, %v1193
      %1195 = vmatprep.mubr.bf16.mxu0 %v556
      %1196 = vmatmul.mubr.bf16.gmra.mxu0 %v555
      %v1197 = vpop.f32.mrf.mxu0
      %v1198 = vadd.f32 %v1145, %v1197
      %v1199 = vpop.f32.mrf.mxu0
      %v1200 = vadd.f32 %v1147, %v1199
      %v1201 = vpop.f32.mrf.mxu0
      %v1202 = vadd.f32 %v1149, %v1201
      %v1203 = vpop.f32.mrf.mxu0
      %v1204 = vadd.f32 %v1151, %v1203
      %1205 = vdwg.mxu0
      %v1206 = vmax.f32 %v1188, 0.0
      %v1207 = vmax.f32 %v1190, 0.0
      %v1208 = vmax.f32 %v1192, 0.0
      %v1209 = vmax.f32 %v1194, 0.0
      %v1210 = vmax.f32 %v1198, 0.0
      %v1211 = vmax.f32 %v1200, 0.0
      %v1212 = vmax.f32 %v1202, 0.0
      %v1213 = vmax.f32 %v1204, 0.0
      %v1214 = vpack.c.bf16 %v1208, %v1206
      %v1215 = vpack.c.bf16 %v1209, %v1207
      %v1216 = vpack.c.bf16 %v1212, %v1210
      %v1217 = vpack.c.bf16 %v1213, %v1211
      %v1218 = vld [vmem:[%s5] sm:$0xf]
      %v1219 = vld [vmem:[%s5 + $0x4] sm:$0xf]
      %v1220 = vld [vmem:[%s5 + $0x8] sm:$0xf]
      %v1221 = vld [vmem:[%s5 + $0xc] sm:$0xf]
      %v1222 = vld [vmem:[%s5 + $0x10] sm:$0xf]
      %v1223 = vld [vmem:[%s5 + $0x14] sm:$0xf]
      %v1224 = vld [vmem:[%s5 + $0x18] sm:$0xf]
      %v1225 = vld [vmem:[%s5 + $0x1c] sm:$0xf]
      %v1226 = vld [vmem:[%s5 + $0x20] sm:$0xf]
      %v1227 = vld [vmem:[%s5 + $0x24] sm:$0xf]
      %v1228 = vld [vmem:[%s5 + $0x28] sm:$0xf]
      %v1229 = vld [vmem:[%s5 + $0x2c] sm:$0xf]
      %v1230 = vld [vmem:[%s5 + $0x30] sm:$0xf]
      %v1231 = vld [vmem:[%s5 + $0x34] sm:$0xf]
      %v1232 = vld [vmem:[%s5 + $0x38] sm:$0xf]
      %v1233 = vld [vmem:[%s5 + $0x3c] sm:$0xf]
      %v1234 = vld [vmem:[%s5 + $0x40] sm:$0xf]
      %v1235 = vld [vmem:[%s5 + $0x44] sm:$0xf]
      %v1236 = vld [vmem:[%s5 + $0x48] sm:$0xf]
      %v1237 = vld [vmem:[%s5 + $0x4c] sm:$0xf]
      %v1238 = vld [vmem:[%s5 + $0x50] sm:$0xf]
      %v1239 = vld [vmem:[%s5 + $0x54] sm:$0xf]
      %v1240 = vld [vmem:[%s5 + $0x58] sm:$0xf]
      %v1241 = vld [vmem:[%s5 + $0x5c] sm:$0xf]
      %v1242 = vld [vmem:[%s5 + $0x60] sm:$0xf]
      %v1243 = vld [vmem:[%s5 + $0x64] sm:$0xf]
      %v1244 = vld [vmem:[%s5 + $0x68] sm:$0xf]
      %v1245 = vld [vmem:[%s5 + $0x6c] sm:$0xf]
      %v1246 = vld [vmem:[%s5 + $0x70] sm:$0xf]
      %v1247 = vld [vmem:[%s5 + $0x74] sm:$0xf]
      %v1248 = vld [vmem:[%s5 + $0x78] sm:$0xf]
      %v1249 = vld [vmem:[%s5 + $0x7c] sm:$0xf]
      %v1250 = vld [vmem:[%s6] sm:$0x1]
      %v1252 = vlaneseq
      %v1253 = vshrl.u32 %v1252, 7
      %v1254 = vsub.s32 0, %v1253
      %v1255 = vrot.slane %v1250, %v1254
      %v1289 = vunpack.c.l.b16 %v1218
      %v1290 = vunpack.c.l.b16 %v1219
      %v1291 = vunpack.c.l.b16 %v1220
      %v1292 = vunpack.c.l.b16 %v1221
      %v1293 = vunpack.c.l.b16 %v1222
      %v1294 = vunpack.c.l.b16 %v1223
      %v1295 = vunpack.c.l.b16 %v1224
      %v1296 = vunpack.c.l.b16 %v1225
      %v1297 = vunpack.c.l.b16 %v1226
      %v1298 = vunpack.c.l.b16 %v1227
      %v1299 = vunpack.c.l.b16 %v1228
      %v1300 = vunpack.c.l.b16 %v1229
      %v1301 = vunpack.c.l.b16 %v1230
      %v1302 = vunpack.c.l.b16 %v1231
      %v1303 = vunpack.c.l.b16 %v1232
      %v1304 = vunpack.c.l.b16 %v1233
      %v1305 = vunpack.c.l.b16 %v1234
      %v1306 = vunpack.c.l.b16 %v1235
      %v1307 = vunpack.c.l.b16 %v1236
      %v1308 = vunpack.c.l.b16 %v1237
      %v1309 = vunpack.c.l.b16 %v1238
      %v1310 = vunpack.c.l.b16 %v1239
      %v1311 = vunpack.c.l.b16 %v1240
      %v1312 = vunpack.c.l.b16 %v1241
      %v1313 = vunpack.c.l.b16 %v1242
      %v1314 = vunpack.c.l.b16 %v1243
      %v1315 = vunpack.c.l.b16 %v1244
      %v1316 = vunpack.c.l.b16 %v1245
      %v1317 = vunpack.c.l.b16 %v1246
      %v1318 = vunpack.c.l.b16 %v1247
      %v1319 = vunpack.c.l.b16 %v1248
      %v1320 = vunpack.c.l.b16 %v1249
      %v1321 = vpack.c.b16 %v1290, %v1289
      %v1322 = vpack.c.b16 %v1292, %v1291
      %v1323 = vpack.c.b16 %v1294, %v1293
      %v1324 = vpack.c.b16 %v1296, %v1295
      %v1325 = vpack.c.b16 %v1298, %v1297
      %v1326 = vpack.c.b16 %v1300, %v1299
      %v1327 = vpack.c.b16 %v1302, %v1301
      %v1328 = vpack.c.b16 %v1304, %v1303
      %v1329 = vpack.c.b16 %v1306, %v1305
      %v1330 = vpack.c.b16 %v1308, %v1307
      %v1331 = vpack.c.b16 %v1310, %v1309
      %v1332 = vpack.c.b16 %v1312, %v1311
      %v1333 = vpack.c.b16 %v1314, %v1313
      %v1334 = vpack.c.b16 %v1316, %v1315
      %v1335 = vpack.c.b16 %v1318, %v1317
      %v1336 = vpack.c.b16 %v1320, %v1319
      %1353 = vmatprep.subr.bf16.mxu0 0
      %1354 = vmatpush1.bf16.msra.mxu0 %v1328
      %1355 = vmatprep.subr.bf16.mxu0 0
      %1356 = vmatpush1.bf16.msra.mxu0 %v1327
      %1357 = vmatprep.subr.bf16.mxu0 0
      %1358 = vmatpush1.bf16.msra.mxu0 %v1326
      %1359 = vmatprep.subr.bf16.mxu0 0
      %1360 = vmatpush1.bf16.msra.mxu0 %v1325
      %1361 = vmatprep.subr.bf16.mxu0 0
      %1362 = vmatpush1.bf16.msra.mxu0 %v1324
      %1363 = vmatprep.subr.bf16.mxu0 0
      %1364 = vmatpush1.bf16.msra.mxu0 %v1323
      %1365 = vmatprep.subr.bf16.mxu0 0
      %1366 = vmatpush1.bf16.msra.mxu0 %v1322
      %1367 = vmatprep.subr.bf16.mxu0 0
      %1368 = vmatpush1.bf16.msra.mxu0 %v1321
      %1369 = vmatprep.subr.bf16.mxu0 0
      %1370 = vmatpush2.bf16.msra.mxu0 %v1336
      %1371 = vmatprep.subr.bf16.mxu0 0
      %1372 = vmatpush2.bf16.msra.mxu0 %v1335
      %1373 = vmatprep.subr.bf16.mxu0 0
      %1374 = vmatpush2.bf16.msra.mxu0 %v1334
      %1375 = vmatprep.subr.bf16.mxu0 0
      %1376 = vmatpush2.bf16.msra.mxu0 %v1333
      %1377 = vmatprep.subr.bf16.mxu0 0
      %1378 = vmatpush2.bf16.msra.mxu0 %v1332
      %1379 = vmatprep.subr.bf16.mxu0 0
      %1380 = vmatpush2.bf16.msra.mxu0 %v1331
      %1381 = vmatprep.subr.bf16.mxu0 0
      %1382 = vmatpush2.bf16.msra.mxu0 %v1330
      %1383 = vmatprep.subr.bf16.mxu0 0
      %1384 = vmatpush2.bf16.msra.mxu0 %v1329
      %1385 = vmatprep.mubr.bf16.mxu0 %v1215
      %1386 = vmatmul.mubr.bf16.gmra.mxu0 %v1214
      %v1387 = vpop.f32.mrf.mxu0
      %v1388 = vadd.f32 %v1255, %v1387
      %v1389 = vpop.f32.mrf.mxu0
      %v1390 = vpop.f32.mrf.mxu0
      %v1391 = vadd.f32 %v1255, %v1390
      %v1392 = vpop.f32.mrf.mxu0
      %1393 = vmatprep.mubr.bf16.mxu0 %v1217
      %1394 = vmatmul.mubr.bf16.gmra.mxu0 %v1216
      %v1395 = vpop.f32.mrf.mxu0
      %v1396 = vadd.f32 %v1255, %v1395
      %v1397 = vpop.f32.mrf.mxu0
      %v1398 = vpop.f32.mrf.mxu0
      %v1399 = vadd.f32 %v1255, %v1398
      %v1400 = vpop.f32.mrf.mxu0
      %1401 = vdwg.mxu0
      %1402 = vst [vmem:[%s375] sm:$0xff] %v1388
      %1403 = vst [vmem:[%s375 + $0x8] sm:$0xff] %v1391
      %1404 = vst [vmem:[%s375 + $0x10] sm:$0xff] %v1396
      %1405 = vst [vmem:[%s375 + $0x18] sm:$0xff] %v1399
      %s1406 = smul.u32 4, %s18
      %p1407 = scmp.lt.s32.totalorder %s1406, 7
      %s1408 = scalar_select %p1407, %s1406, 7
      %s1409 = smul.addr %s1408, 8
      %s1410 = scalar_lea.vmem %s7, %s1409
      // Predicated region
      $region49: #{bilstm_cnn_forward.3} parent=47 // pred_check
        %p1411 = pneg %p210
      $region50: #{bilstm_cnn_forward.3} parent=47 // pred_check_branch
        %1413 = sbr.rel (%p1411) target = $region52
      $region51: #{bilstm_cnn_forward.3} parent=47 // pred_region
        %s1414 = smul.u32 4, %s18
      $region52: #{bilstm_cnn_forward.3} parent=47 // pred_fallthru
        _
    $region48: #{bilstm_cnn_forward.3} parent=5 // pred_fallthru
      _
    %p1415 = scmp.le.s32.totalorder 2, %s13
    // Predicated region
    $region53: #{bilstm_cnn_forward.3} parent=5 // pred_check
      %p1416 = pneg %p1415
    $region54: #{bilstm_cnn_forward.3} parent=5 // pred_check_branch
      %1418 = sbr.rel (%p1416) target = $region56
    $region55: #{bilstm_cnn_forward.3} parent=5 // pred_region
      %s1419 = ssub.s32 %s13, 2
      // Predicated region
      $region57: #{bilstm_cnn_forward.3} parent=55 // pred_check
        %p1420 = pneg %p216
      $region58: #{bilstm_cnn_forward.3} parent=55 // pred_check_branch
        %1422 = sbr.rel (%p1420) target = $region60
      $region59: #{bilstm_cnn_forward.3} parent=55 // pred_region
        %s1423 = smul.u32 4, %s19
        %p1424 = scmp.lt.s32.totalorder %s1423, 7
        %s1425 = scalar_select %p1424, %s1423, 7
        %s1426 = smul.addr %s1425, 8
        %s1427 = scalar_lea.vmem %s7, %s1426
      $region60: #{bilstm_cnn_forward.3} parent=55 // pred_fallthru
        _
    $region56: #{bilstm_cnn_forward.3} parent=5 // pred_fallthru
      _
  $region6: #{bilstm_cnn_forward.3} parent=0 // loop_footer
    %s17 = sadd.s32 1, %s13
  $region7: #{bilstm_cnn_forward.3} parent=0 // loop_footer_branch
    %12 = sbr.rel target = $region3
  $region8: #{bilstm_cnn_forward.3} parent=0 // loop_exit
    _

</llo_original>
